<compile_context>
chip_gen: v7x
topology: tpu7x:2x2x1
jax: 0.10.0
libtpu: 0.0.40
codegen_flags: <defaults>
</compile_context>

<pallas_src>
import jax
import jax.numpy as jnp
from jax import lax
import jax.scipy.linalg as jsl
from jax.experimental import pallas as pl
from jax.experimental.pallas import tpu as pltpu

JITTER = 1e-4      # gpytorch variational_cholesky_jitter default for float32
CHOL_EPS = 1e-12   # pivot clamp (gpytorch escalates jitter via psd_safe_cholesky instead)


def _vmem():
    return pl.BlockSpec(memory_space=pltpu.MemorySpace.VMEM)


def _smem():
    return pl.BlockSpec(memory_space=pltpu.MemorySpace.SMEM)


def _slab_rows(m):
    # rows: [0:m]=zs|z_sq, [m:2m+1]=QM, [2m+1]=inv_ls, [2m+2]=eps, [2m+3]=w, [2m+4]=b
    return ((2 * m + 5 + 7) // 8) * 8


# ---------------------------------------------------------------------------
# In-kernel helpers (traced inside the single fused kernel body)
# ---------------------------------------------------------------------------
def _predictive(cur, slab_ref, osc, d_in, m, eye_nn, jitter_eye):
    """Whitened-variational predictive for one GP layer -> (mean_row (1,N), cov (N,N))."""
    zblk = slab_ref[0:m, 0:d_in + 1]                 # one load: [z/ls | z_sq]
    zs = zblk[:, 0:d_in]                             # (M, D) inducing pre-scaled by 1/ls
    z_sq_col = zblk[:, d_in:d_in + 1]                # (M, 1) precomputed |z/ls|^2
    qm = slab_ref[m:2 * m + 1, 0:m]                  # (M+1, M) = [Q ; m^T Lzz^{-1}]
    inv_ls = slab_ref[2 * m + 1:2 * m + 2, 0:d_in]   # (1, D)

    xs = cur * inv_ls                                          # (N, D)
    x_sq_col = jnp.sum(xs * xs, axis=-1, keepdims=True)        # (N, 1)

    # MXU work via dot_general contraction dims (no materialized transposes).
    cross_zx = lax.dot_general(zs, xs, (((1,), (1,)), ((), ())),
                               preferred_element_type=jnp.float32)        # (M, N)
    cross_xx = lax.dot_general(xs, xs, (((1,), (1,)), ((), ())),
                               preferred_element_type=jnp.float32)        # (N, N)
    # Row-oriented |x|^2 from diag(cross_xx): avoids a (N,1)->(1,N) transpose.
    x_sq_row = jnp.sum(jnp.where(eye_nn, cross_xx, 0.0), axis=0, keepdims=True)

    kzx = osc * jnp.exp(-0.5 * jnp.maximum(z_sq_col + x_sq_row - 2.0 * cross_zx, 0.0))
    kxx = osc * jnp.exp(-0.5 * jnp.maximum(x_sq_col + x_sq_row - 2.0 * cross_xx, 0.0))

    # One MXU pass for [Q ; mrow] @ Kzx, split with a static row slice.
    qmk = lax.dot_general(qm, kzx, (((1,), (0,)), ((), ())),
                          preferred_element_type=jnp.float32)             # (M+1, N)
    qk = qmk[0:m, :]                                                      # Q @ Kzx
    mean_row = qmk[m:m + 1, :]                                            # (1, N)

    # cov = Kxx + Kzx^T (Q Kzx) + jitter*I   (contraction over M, no transpose)
    covq = lax.dot_general(kzx, qk, (((0,), (0,)), ((), ())),
                           preferred_element_type=jnp.float32)            # (N, N)
    return mean_row, kxx + covq + jitter_eye


def _sample_and_project(mean_row, cov, slab_ref, m, n, h, eye_nn, row_col, col_row):
    """rsample (unrolled in-kernel Cholesky, accumulating L@eps directly) + Linear(1, H)."""
    base = 2 * m + 2
    eps_row = slab_ref[base:base + 1, 0:n]           # (1, N)
    w_row = slab_ref[base + 1:base + 2, 0:h]         # (1, H)  Linear weight (row form)
    b_row = slab_ref[base + 2:base + 3, 0:h]         # (1, H)  Linear bias

    # Fully unrolled right-looking Cholesky with static indices; L never materialized,
    # delta = L @ eps is accumulated column by column.
    # TODO(synk): pivot clamp replaces gpytorch psd_safe_cholesky jitter escalation.
    a = cov
    delta = jnp.zeros((n, 1), jnp.float32)
    for k in range(n):
        pivot = a[k:k + 1, k:k + 1]                                   # (1,1) static slice
        inv = lax.rsqrt(jnp.maximum(pivot, jnp.float32(CHOL_EPS)))    # EUP
        col = jnp.where(row_col >= k, a[:, k:k + 1] * inv, 0.0)       # L[:, k]  (N,1)
        delta = delta + col * eps_row[:, k:k + 1]                     # += eps[k] * L[:,k]
        row = jnp.where(col_row > k, a[k:k + 1, :] * inv, 0.0)        # (1,N) strictly right
        a = a - col * row                                             # rank-1 trailing update

    # (1,N) -> (N,1) without a transpose: masked lane reduce against the identity mask.
    mean_col = jnp.sum(jnp.where(eye_nn, mean_row, 0.0), axis=1, keepdims=True)
    sample_col = mean_col + delta                                     # rsample, (N,1)
    # lazily-created torch.nn.Linear(1, hidden_dim): outer product + bias.
    return sample_col * w_row + b_row                                 # (N, H)


# ---------------------------------------------------------------------------
# Fused kernel builder (one pallas_call for the whole DGP forward)
# ---------------------------------------------------------------------------
def build_dgp_forward(layer_cfg, *, n_points, num_inducing, proj_dim):
    m = num_inducing
    n = n_points
    h = proj_dim
    n_lay = len(layer_cfg)

    def body(*refs):
        x_ref = refs[0]
        slab_refs = refs[1:1 + n_lay]
        osc_ref = refs[1 + n_lay]          # SMEM (n_lay,) f32 outputscales
        mean_ref = refs[2 + n_lay]
        cov_ref = refs[3 + n_lay]

        # Hoisted constants (reused by every layer / Cholesky step).
        rows_nn = lax.broadcasted_iota(jnp.int32, (n, n), 0)
        cols_nn = lax.broadcasted_iota(jnp.int32, (n, n), 1)
        eye_nn = rows_nn == cols_nn
        jitter_eye = jnp.where(eye_nn, jnp.float32(JITTER), jnp.float32(0.0))
        row_col = lax.broadcasted_iota(jnp.int32, (n, 1), 0)
        col_row = lax.broadcasted_iota(jnp.int32, (1, n), 1)

        cur = x_ref[...].astype(jnp.float32)                            # (N, D0)
        for li, (d_in, is_hidden) in enumerate(layer_cfg):
            osc = osc_ref[li]                                           # SMEM scalar
            mean_row, cov = _predictive(cur, slab_refs[li], osc, d_in, m,
                                        eye_nn, jitter_eye)
            if is_hidden:
                cur = _sample_and_project(mean_row, cov, slab_refs[li], m, n, h,
                                          eye_nn, row_col, col_row)
            else:
                mean_ref[...] = mean_row
                cov_ref[...] = cov

    return pl.pallas_call(
        body,
        out_shape=(jax.ShapeDtypeStruct((1, n), jnp.float32),
                   jax.ShapeDtypeStruct((n, n), jnp.float32)),
        in_specs=[_vmem()] * (1 + n_lay) + [_smem()],
        out_specs=(_vmem(), _vmem()),
    )


# ---------------------------------------------------------------------------
# Parameter preparation (param-only work hoisted out of the forward pass)
# ---------------------------------------------------------------------------
def _prep_gp_layer(layer, *, n_points, eps=None, w_row=None, b_row=None):
    z = layer["inducing"].astype(jnp.float32)                 # (M, D)
    ls = layer["lengthscale"].astype(jnp.float32)             # (D,)
    osc = jnp.asarray(layer["outputscale"], jnp.float32)
    m, d = z.shape
    inv_ls = 1.0 / ls
    zs = z * inv_ls[None, :]
    z_sq = jnp.sum(zs * zs, axis=-1)                          # (M,)
    d2 = jnp.maximum(z_sq[:, None] + z_sq[None, :] - 2.0 * (zs @ zs.T), 0.0)
    kzz = osc * jnp.exp(-0.5 * d2) + JITTER * jnp.eye(m, dtype=jnp.float32)

    # Param-only sequential linear algebra (chol + triangular inverse), hoisted here.
    lzz = jnp.linalg.cholesky(kzz)
    lzz_inv = jsl.solve_triangular(lzz, jnp.eye(m, dtype=jnp.float32), lower=True)
    s_mat = layer["var_chol"] @ layer["var_chol"].T
    q = lzz_inv.T @ (s_mat - jnp.eye(m, dtype=jnp.float32)) @ lzz_inv     # (M, M)
    mrow = layer["var_mean"].reshape(1, m) @ lzz_inv                      # (1, M)
    qm = jnp.concatenate([q, mrow], axis=0)                               # (M+1, M)

    # Packed lane-dense slab: one contiguous DMA per layer.
    slab = jnp.zeros((_slab_rows(m), 128), jnp.float32)
    slab = slab.at[0:m, 0:d].set(zs)
    slab = slab.at[0:m, d].set(z_sq)
    slab = slab.at[m:2 * m + 1, 0:m].set(qm)
    slab = slab.at[2 * m + 1, 0:d].set(inv_ls)
    if eps is not None:
        slab = slab.at[2 * m + 2, 0:n_points].set(eps.astype(jnp.float32))
        slab = slab.at[2 * m + 3, 0:w_row.size].set(w_row.reshape(-1))
        slab = slab.at[2 * m + 4, 0:b_row.size].set(b_row.reshape(-1))
    return slab, osc, d


def prepare_params(params, *, n_points):
    hidden = params["hidden_layers"]
    if len(hidden) > 1:   # mirrors: shape[-1] != hidden_dim and len(hidden_layers) > 1
        w, b = params["projection"]                           # (H, 1), (H,)
        w_row = jnp.asarray(w, jnp.float32).reshape(1, -1)
        b_row = jnp.asarray(b, jnp.float32).reshape(1, -1)
    else:
        # TODO(synk): single-hidden-layer path keeps the raw (N,1) sample (no projection),
        # matching the module's conditional (output layer dims must then be 1).
        w_row = jnp.ones((1, 1), jnp.float32)
        b_row = jnp.zeros((1, 1), jnp.float32)
    proj_dim = w_row.shape[1]

    slabs, oscs, cfg = [], [], []
    for lp in hidden:
        slab, osc, d = _prep_gp_layer(lp, n_points=n_points, eps=lp["eps"],
                                      w_row=w_row, b_row=b_row)
        slabs.append(slab); oscs.append(osc); cfg.append((d, True))
    slab, osc, d = _prep_gp_layer(params["output_layer"], n_points=n_points)
    slabs.append(slab); oscs.append(osc); cfg.append((d, False))
    return tuple(slabs), jnp.stack(oscs).astype(jnp.float32), tuple(cfg), proj_dim


# ---------------------------------------------------------------------------
# Deterministic parameter init (synthetic, mirrors module shapes)
# ---------------------------------------------------------------------------
def make_gp_layer_params(key, input_dims, num_inducing, n_points, with_eps):
    k1, k2, k3, k4 = jax.random.split(key, 4)
    ls_default = jnp.log(2.0)  # softplus(0): gpytorch raw-param default
    params = {
        "inducing": jax.random.normal(k1, (num_inducing, input_dims), jnp.float32),
        "var_mean": 1e-1 * jax.random.normal(k2, (num_inducing,), jnp.float32),
        "var_chol": jnp.eye(num_inducing, dtype=jnp.float32)
        + 0.01 * jnp.tril(jax.random.normal(k3, (num_inducing, num_inducing), jnp.float32)),
        "lengthscale": jnp.full((input_dims,), ls_default, jnp.float32),
        "outputscale": jnp.asarray(ls_default, jnp.float32),
    }
    if with_eps:
        params["eps"] = jax.random.normal(k4, (n_points,), jnp.float32)
    return params


def init_params(key, input_dim, hidden_dim, n_layers, num_inducing, n_points):
    keys = jax.random.split(key, n_layers + 1)
    hidden = []
    if n_layers > 1:
        hidden.append(make_gp_layer_params(keys[0], input_dim, num_inducing, n_points, True))
        for i in range(n_layers - 2):
            hidden.append(
                make_gp_layer_params(keys[i + 1], hidden_dim, num_inducing, n_points, True))
    final_input_dim = hidden_dim if n_layers > 1 else input_dim
    out_layer = make_gp_layer_params(keys[n_layers - 1], final_input_dim, num_inducing,
                                     n_points, False)
    # lazily-created torch.nn.Linear(1, hidden_dim): weight (hidden,1), bias (hidden,)
    kw, kb = jax.random.split(keys[n_layers])
    w = jax.random.uniform(kw, (hidden_dim, 1), jnp.float32, -1.0, 1.0)  # bound = 1/sqrt(1)
    b = jax.random.uniform(kb, (hidden_dim,), jnp.float32, -1.0, 1.0)
    return {"hidden_layers": hidden, "output_layer": out_layer,
            "projection": (w, b), "hidden_dim": hidden_dim}


if __name__ == "__main__":
    key = jax.random.PRNGKey(0)
    k_x, k_p = jax.random.split(key)

    n_points = 16        # number of input points (batch of the GP)
    input_dim = 8
    n_layers = 3         # 2 hidden GP layers + output GP layer (projection path active)
    hidden_dim = max(4, input_dim // 2)
    num_inducing = 32

    x = jax.random.normal(k_x, (n_points, input_dim), jnp.float32)
    raw_params = init_params(k_p, input_dim, hidden_dim, n_layers, num_inducing, n_points)
    slabs, osc_all, layer_cfg, proj_dim = prepare_params(raw_params, n_points=n_points)

    fused = build_dgp_forward(layer_cfg, n_points=n_points,
                              num_inducing=num_inducing, proj_dim=proj_dim)

    @jax.jit
    def forward(x, slabs, osc_all):
        mean_row, covar = fused(x, *slabs, osc_all)
        return mean_row.T, covar            # transpose only at the model boundary

    mean, covar = forward(x, slabs, osc_all)
    jax.block_until_ready((mean, covar))

    assert mean.shape == (n_points, 1)
    assert covar.shape == (n_points, n_points)
    assert bool(jnp.all(jnp.isfinite(mean))) and bool(jnp.all(jnp.isfinite(covar)))
    print("KERNEL_OK")
</pallas_src>

<mosaic_0001>
module attributes {stable_mosaic.version = 11 : i64} {
  func.func @body(%arg0: memref<16x8xf32, #tpu.memory_space<vmem>>, %arg1: memref<72x128xf32, #tpu.memory_space<vmem>>, %arg2: memref<72x128xf32, #tpu.memory_space<vmem>>, %arg3: memref<72x128xf32, #tpu.memory_space<vmem>>, %arg4: memref<3xf32, #tpu.memory_space<smem>>, %arg5: memref<1x16xf32, #tpu.memory_space<vmem>>, %arg6: memref<16x16xf32, #tpu.memory_space<vmem>>) attributes {dimension_semantics = [], scalar_prefetch = 0 : i64, scratch_operands = 0 : i64, tpu.core_type = #tpu.core_type<tc>} {
    %0 = tpu.iota {dimensions = array<i32: 0>} : vector<16x16xi32>
    %1 = tpu.iota {dimensions = array<i32: 1>} : vector<16x16xi32>
    %2 = arith.cmpi eq, %0, %1 : vector<16x16xi32>
    %cst = arith.constant 9.99999974E-5 : f32
    %cst_0 = arith.constant 0.000000e+00 : f32
    %3 = vector.broadcast %cst : f32 to vector<16x16xf32>
    %4 = vector.broadcast %cst_0 : f32 to vector<16x16xf32>
    %5 = arith.select %2, %3, %4 : vector<16x16xi1>, vector<16x16xf32>
    %6 = tpu.iota {dimensions = array<i32: 0>} : vector<16x1xi32>
    %7 = tpu.iota {dimensions = array<i32: 1>} : vector<1x16xi32>
    %c0 = arith.constant 0 : index
    %c0_1 = arith.constant 0 : index
    %8 = vector.load %arg0[%c0, %c0_1] : memref<16x8xf32, #tpu.memory_space<vmem>>, vector<16x8xf32>
    %c0_2 = arith.constant 0 : index
    %9 = memref.load %arg4[%c0_2] : memref<3xf32, #tpu.memory_space<smem>>
    %c0_3 = arith.constant 0 : index
    %c0_4 = arith.constant 0 : index
    %10 = vector.load %arg1[%c0_3, %c0_4] : memref<72x128xf32, #tpu.memory_space<vmem>>, vector<32x9xf32>
    %11 = vector.extract_strided_slice %10 {offsets = [0, 0], sizes = [32, 8], strides = [1, 1]} : vector<32x9xf32> to vector<32x8xf32>
    %12 = vector.extract_strided_slice %10 {offsets = [0, 8], sizes = [32, 1], strides = [1, 1]} : vector<32x9xf32> to vector<32x1xf32>
    %c32 = arith.constant 32 : index
    %c0_5 = arith.constant 0 : index
    %13 = vector.load %arg1[%c32, %c0_5] : memref<72x128xf32, #tpu.memory_space<vmem>>, vector<33x32xf32>
    %c65 = arith.constant 65 : index
    %c0_6 = arith.constant 0 : index
    %14 = vector.load %arg1[%c65, %c0_6] : memref<72x128xf32, #tpu.memory_space<vmem>>, vector<1x8xf32>
    %15 = vector.broadcast %14 : vector<1x8xf32> to vector<16x8xf32>
    %16 = arith.mulf %8, %15 : vector<16x8xf32>
    %17 = arith.mulf %16, %16 : vector<16x8xf32>
    %cst_7 = arith.constant dense<0.000000e+00> : vector<16xf32>
    %18 = vector.multi_reduction <add>, %17, %cst_7 [1] : vector<16x8xf32> to vector<16xf32>
    %19 = vector.shape_cast %18 : vector<16xf32> to vector<16x1xf32>
    %cst_8 = arith.constant dense<0.000000e+00> : vector<32x16xf32>
    %20 = tpu.matmul %11, %16, %cst_8 {dimension_numbers = #tpu.dot_dimension_numbers<[1], [1], [0], [0], [0, 0, 1, 0], [], []>} : vector<32x8xf32>, vector<16x8xf32>, vector<32x16xf32> -> vector<32x16xf32>
    %cst_9 = arith.constant dense<0.000000e+00> : vector<16x16xf32>
    %21 = tpu.matmul %16, %16, %cst_9 {dimension_numbers = #tpu.dot_dimension_numbers<[1], [1], [0], [0], [0, 0, 1, 0], [], []>} : vector<16x8xf32>, vector<16x8xf32>, vector<16x16xf32> -> vector<16x16xf32>
    %cst_10 = arith.constant 0.000000e+00 : f32
    %22 = vector.broadcast %cst_10 : f32 to vector<16x16xf32>
    %23 = arith.select %2, %21, %22 : vector<16x16xi1>, vector<16x16xf32>
    %cst_11 = arith.constant dense<0.000000e+00> : vector<16xf32>
    %24 = vector.multi_reduction <add>, %23, %cst_11 [0] : vector<16x16xf32> to vector<16xf32>
    %25 = vector.shape_cast %24 : vector<16xf32> to vector<1x16xf32>
    %26 = vector.broadcast %12 : vector<32x1xf32> to vector<32x16xf32>
    %27 = vector.broadcast %25 : vector<1x16xf32> to vector<32x16xf32>
    %28 = arith.addf %26, %27 : vector<32x16xf32>
    %cst_12 = arith.constant 2.000000e+00 : f32
    %29 = vector.broadcast %cst_12 : f32 to vector<32x16xf32>
    %30 = arith.mulf %29, %20 : vector<32x16xf32>
    %31 = arith.subf %28, %30 : vector<32x16xf32>
    %cst_13 = arith.constant 0.000000e+00 : f32
    %32 = vector.broadcast %cst_13 : f32 to vector<32x16xf32>
    %33 = arith.maximumf %31, %32 : vector<32x16xf32>
    %cst_14 = arith.constant -5.000000e-01 : f32
    %34 = vector.broadcast %cst_14 : f32 to vector<32x16xf32>
    %35 = arith.mulf %34, %33 : vector<32x16xf32>
    %36 = math.exp %35 : vector<32x16xf32>
    %37 = vector.broadcast %9 : f32 to vector<32x16xf32>
    %38 = arith.mulf %37, %36 : vector<32x16xf32>
    %39 = vector.broadcast %19 : vector<16x1xf32> to vector<16x16xf32>
    %40 = vector.broadcast %25 : vector<1x16xf32> to vector<16x16xf32>
    %41 = arith.addf %39, %40 : vector<16x16xf32>
    %cst_15 = arith.constant 2.000000e+00 : f32
    %42 = vector.broadcast %cst_15 : f32 to vector<16x16xf32>
    %43 = arith.mulf %42, %21 : vector<16x16xf32>
    %44 = arith.subf %41, %43 : vector<16x16xf32>
    %cst_16 = arith.constant 0.000000e+00 : f32
    %45 = vector.broadcast %cst_16 : f32 to vector<16x16xf32>
    %46 = arith.maximumf %44, %45 : vector<16x16xf32>
    %cst_17 = arith.constant -5.000000e-01 : f32
    %47 = vector.broadcast %cst_17 : f32 to vector<16x16xf32>
    %48 = arith.mulf %47, %46 : vector<16x16xf32>
    %49 = math.exp %48 : vector<16x16xf32>
    %50 = vector.broadcast %9 : f32 to vector<16x16xf32>
    %51 = arith.mulf %50, %49 : vector<16x16xf32>
    %cst_18 = arith.constant dense<0.000000e+00> : vector<33x16xf32>
    %52 = tpu.matmul %13, %38, %cst_18 {dimension_numbers = #tpu.dot_dimension_numbers<[1], [0], [0], [1], [0, 0, 1, 1], [], []>} : vector<33x32xf32>, vector<32x16xf32>, vector<33x16xf32> -> vector<33x16xf32>
    %53 = vector.extract_strided_slice %52 {offsets = [0, 0], sizes = [32, 16], strides = [1, 1]} : vector<33x16xf32> to vector<32x16xf32>
    %54 = vector.extract_strided_slice %52 {offsets = [32, 0], sizes = [1, 16], strides = [1, 1]} : vector<33x16xf32> to vector<1x16xf32>
    %cst_19 = arith.constant dense<0.000000e+00> : vector<16x16xf32>
    %55 = tpu.matmul %38, %53, %cst_19 {dimension_numbers = #tpu.dot_dimension_numbers<[0], [0], [1], [1], [0, 1, 1, 1], [], []>} : vector<32x16xf32>, vector<32x16xf32>, vector<16x16xf32> -> vector<16x16xf32>
    %56 = arith.addf %51, %55 : vector<16x16xf32>
    %57 = arith.addf %56, %5 : vector<16x16xf32>
    %c66 = arith.constant 66 : index
    %c0_20 = arith.constant 0 : index
    %58 = vector.load %arg1[%c66, %c0_20] : memref<72x128xf32, #tpu.memory_space<vmem>>, vector<1x16xf32>
    %c67 = arith.constant 67 : index
    %c0_21 = arith.constant 0 : index
    %59 = vector.load %arg1[%c67, %c0_21] : memref<72x128xf32, #tpu.memory_space<vmem>>, vector<1x4xf32>
    %c68 = arith.constant 68 : index
    %c0_22 = arith.constant 0 : index
    %60 = vector.load %arg1[%c68, %c0_22] : memref<72x128xf32, #tpu.memory_space<vmem>>, vector<1x4xf32>
    %cst_23 = arith.constant 0.000000e+00 : f32
    %61 = vector.broadcast %cst_23 : f32 to vector<16x1xf32>
    %62 = vector.extract_strided_slice %57 {offsets = [0, 0], sizes = [1, 1], strides = [1, 1]} : vector<16x16xf32> to vector<1x1xf32>
    %cst_24 = arith.constant 9.99999996E-13 : f32
    %63 = vector.broadcast %cst_24 : f32 to vector<1x1xf32>
    %64 = arith.maximumf %62, %63 : vector<1x1xf32>
    %65 = math.rsqrt %64 : vector<1x1xf32>
    %c0_i32 = arith.constant 0 : i32
    %66 = vector.broadcast %c0_i32 : i32 to vector<16x1xi32>
    %67 = arith.cmpi sge, %6, %66 : vector<16x1xi32>
    %68 = vector.extract_strided_slice %57 {offsets = [0, 0], sizes = [16, 1], strides = [1, 1]} : vector<16x16xf32> to vector<16x1xf32>
    %69 = vector.broadcast %65 : vector<1x1xf32> to vector<16x1xf32>
    %70 = arith.mulf %68, %69 : vector<16x1xf32>
    %cst_25 = arith.constant 0.000000e+00 : f32
    %71 = vector.broadcast %cst_25 : f32 to vector<16x1xf32>
    %72 = arith.select %67, %70, %71 : vector<16x1xi1>, vector<16x1xf32>
    %73 = vector.extract_strided_slice %58 {offsets = [0, 0], sizes = [1, 1], strides = [1, 1]} : vector<1x16xf32> to vector<1x1xf32>
    %74 = vector.broadcast %73 : vector<1x1xf32> to vector<16x1xf32>
    %75 = arith.mulf %72, %74 : vector<16x1xf32>
    %76 = arith.addf %61, %75 : vector<16x1xf32>
    %c0_i32_26 = arith.constant 0 : i32
    %77 = vector.broadcast %c0_i32_26 : i32 to vector<1x16xi32>
    %78 = arith.cmpi sgt, %7, %77 : vector<1x16xi32>
    %79 = vector.extract_strided_slice %57 {offsets = [0, 0], sizes = [1, 16], strides = [1, 1]} : vector<16x16xf32> to vector<1x16xf32>
    %80 = vector.broadcast %65 : vector<1x1xf32> to vector<1x16xf32>
    %81 = arith.mulf %79, %80 : vector<1x16xf32>
    %cst_27 = arith.constant 0.000000e+00 : f32
    %82 = vector.broadcast %cst_27 : f32 to vector<1x16xf32>
    %83 = arith.select %78, %81, %82 : vector<1x16xi1>, vector<1x16xf32>
    %84 = vector.broadcast %72 : vector<16x1xf32> to vector<16x16xf32>
    %85 = vector.broadcast %83 : vector<1x16xf32> to vector<16x16xf32>
    %86 = arith.mulf %84, %85 : vector<16x16xf32>
    %87 = arith.subf %57, %86 : vector<16x16xf32>
    %88 = vector.extract_strided_slice %87 {offsets = [1, 1], sizes = [1, 1], strides = [1, 1]} : vector<16x16xf32> to vector<1x1xf32>
    %cst_28 = arith.constant 9.99999996E-13 : f32
    %89 = vector.broadcast %cst_28 : f32 to vector<1x1xf32>
    %90 = arith.maximumf %88, %89 : vector<1x1xf32>
    %91 = math.rsqrt %90 : vector<1x1xf32>
    %c1_i32 = arith.constant 1 : i32
    %92 = vector.broadcast %c1_i32 : i32 to vector<16x1xi32>
    %93 = arith.cmpi sge, %6, %92 : vector<16x1xi32>
    %94 = vector.extract_strided_slice %87 {offsets = [0, 1], sizes = [16, 1], strides = [1, 1]} : vector<16x16xf32> to vector<16x1xf32>
    %95 = vector.broadcast %91 : vector<1x1xf32> to vector<16x1xf32>
    %96 = arith.mulf %94, %95 : vector<16x1xf32>
    %cst_29 = arith.constant 0.000000e+00 : f32
    %97 = vector.broadcast %cst_29 : f32 to vector<16x1xf32>
    %98 = arith.select %93, %96, %97 : vector<16x1xi1>, vector<16x1xf32>
    %99 = vector.extract_strided_slice %58 {offsets = [0, 1], sizes = [1, 1], strides = [1, 1]} : vector<1x16xf32> to vector<1x1xf32>
    %100 = vector.broadcast %99 : vector<1x1xf32> to vector<16x1xf32>
    %101 = arith.mulf %98, %100 : vector<16x1xf32>
    %102 = arith.addf %76, %101 : vector<16x1xf32>
    %c1_i32_30 = arith.constant 1 : i32
    %103 = vector.broadcast %c1_i32_30 : i32 to vector<1x16xi32>
    %104 = arith.cmpi sgt, %7, %103 : vector<1x16xi32>
    %105 = vector.extract_strided_slice %87 {offsets = [1, 0], sizes = [1, 16], strides = [1, 1]} : vector<16x16xf32> to vector<1x16xf32>
    %106 = vector.broadcast %91 : vector<1x1xf32> to vector<1x16xf32>
    %107 = arith.mulf %105, %106 : vector<1x16xf32>
    %cst_31 = arith.constant 0.000000e+00 : f32
    %108 = vector.broadcast %cst_31 : f32 to vector<1x16xf32>
    %109 = arith.select %104, %107, %108 : vector<1x16xi1>, vector<1x16xf32>
    %110 = vector.broadcast %98 : vector<16x1xf32> to vector<16x16xf32>
    %111 = vector.broadcast %109 : vector<1x16xf32> to vector<16x16xf32>
    %112 = arith.mulf %110, %111 : vector<16x16xf32>
    %113 = arith.subf %87, %112 : vector<16x16xf32>
    %114 = vector.extract_strided_slice %113 {offsets = [2, 2], sizes = [1, 1], strides = [1, 1]} : vector<16x16xf32> to vector<1x1xf32>
    %cst_32 = arith.constant 9.99999996E-13 : f32
    %115 = vector.broadcast %cst_32 : f32 to vector<1x1xf32>
    %116 = arith.maximumf %114, %115 : vector<1x1xf32>
    %117 = math.rsqrt %116 : vector<1x1xf32>
    %c2_i32 = arith.constant 2 : i32
    %118 = vector.broadcast %c2_i32 : i32 to vector<16x1xi32>
    %119 = arith.cmpi sge, %6, %118 : vector<16x1xi32>
    %120 = vector.extract_strided_slice %113 {offsets = [0, 2], sizes = [16, 1], strides = [1, 1]} : vector<16x16xf32> to vector<16x1xf32>
    %121 = vector.broadcast %117 : vector<1x1xf32> to vector<16x1xf32>
    %122 = arith.mulf %120, %121 : vector<16x1xf32>
    %cst_33 = arith.constant 0.000000e+00 : f32
    %123 = vector.broadcast %cst_33 : f32 to vector<16x1xf32>
    %124 = arith.select %119, %122, %123 : vector<16x1xi1>, vector<16x1xf32>
    %125 = vector.extract_strided_slice %58 {offsets = [0, 2], sizes = [1, 1], strides = [1, 1]} : vector<1x16xf32> to vector<1x1xf32>
    %126 = vector.broadcast %125 : vector<1x1xf32> to vector<16x1xf32>
    %127 = arith.mulf %124, %126 : vector<16x1xf32>
    %128 = arith.addf %102, %127 : vector<16x1xf32>
    %c2_i32_34 = arith.constant 2 : i32
    %129 = vector.broadcast %c2_i32_34 : i32 to vector<1x16xi32>
    %130 = arith.cmpi sgt, %7, %129 : vector<1x16xi32>
    %131 = vector.extract_strided_slice %113 {offsets = [2, 0], sizes = [1, 16], strides = [1, 1]} : vector<16x16xf32> to vector<1x16xf32>
    %132 = vector.broadcast %117 : vector<1x1xf32> to vector<1x16xf32>
    %133 = arith.mulf %131, %132 : vector<1x16xf32>
    %cst_35 = arith.constant 0.000000e+00 : f32
    %134 = vector.broadcast %cst_35 : f32 to vector<1x16xf32>
    %135 = arith.select %130, %133, %134 : vector<1x16xi1>, vector<1x16xf32>
    %136 = vector.broadcast %124 : vector<16x1xf32> to vector<16x16xf32>
    %137 = vector.broadcast %135 : vector<1x16xf32> to vector<16x16xf32>
    %138 = arith.mulf %136, %137 : vector<16x16xf32>
    %139 = arith.subf %113, %138 : vector<16x16xf32>
    %140 = vector.extract_strided_slice %139 {offsets = [3, 3], sizes = [1, 1], strides = [1, 1]} : vector<16x16xf32> to vector<1x1xf32>
    %cst_36 = arith.constant 9.99999996E-13 : f32
    %141 = vector.broadcast %cst_36 : f32 to vector<1x1xf32>
    %142 = arith.maximumf %140, %141 : vector<1x1xf32>
    %143 = math.rsqrt %142 : vector<1x1xf32>
    %c3_i32 = arith.constant 3 : i32
    %144 = vector.broadcast %c3_i32 : i32 to vector<16x1xi32>
    %145 = arith.cmpi sge, %6, %144 : vector<16x1xi32>
    %146 = vector.extract_strided_slice %139 {offsets = [0, 3], sizes = [16, 1], strides = [1, 1]} : vector<16x16xf32> to vector<16x1xf32>
    %147 = vector.broadcast %143 : vector<1x1xf32> to vector<16x1xf32>
    %148 = arith.mulf %146, %147 : vector<16x1xf32>
    %cst_37 = arith.constant 0.000000e+00 : f32
    %149 = vector.broadcast %cst_37 : f32 to vector<16x1xf32>
    %150 = arith.select %145, %148, %149 : vector<16x1xi1>, vector<16x1xf32>
    %151 = vector.extract_strided_slice %58 {offsets = [0, 3], sizes = [1, 1], strides = [1, 1]} : vector<1x16xf32> to vector<1x1xf32>
    %152 = vector.broadcast %151 : vector<1x1xf32> to vector<16x1xf32>
    %153 = arith.mulf %150, %152 : vector<16x1xf32>
    %154 = arith.addf %128, %153 : vector<16x1xf32>
    %c3_i32_38 = arith.constant 3 : i32
    %155 = vector.broadcast %c3_i32_38 : i32 to vector<1x16xi32>
    %156 = arith.cmpi sgt, %7, %155 : vector<1x16xi32>
    %157 = vector.extract_strided_slice %139 {offsets = [3, 0], sizes = [1, 16], strides = [1, 1]} : vector<16x16xf32> to vector<1x16xf32>
    %158 = vector.broadcast %143 : vector<1x1xf32> to vector<1x16xf32>
    %159 = arith.mulf %157, %158 : vector<1x16xf32>
    %cst_39 = arith.constant 0.000000e+00 : f32
    %160 = vector.broadcast %cst_39 : f32 to vector<1x16xf32>
    %161 = arith.select %156, %159, %160 : vector<1x16xi1>, vector<1x16xf32>
    %162 = vector.broadcast %150 : vector<16x1xf32> to vector<16x16xf32>
    %163 = vector.broadcast %161 : vector<1x16xf32> to vector<16x16xf32>
    %164 = arith.mulf %162, %163 : vector<16x16xf32>
    %165 = arith.subf %139, %164 : vector<16x16xf32>
    %166 = vector.extract_strided_slice %165 {offsets = [4, 4], sizes = [1, 1], strides = [1, 1]} : vector<16x16xf32> to vector<1x1xf32>
    %cst_40 = arith.constant 9.99999996E-13 : f32
    %167 = vector.broadcast %cst_40 : f32 to vector<1x1xf32>
    %168 = arith.maximumf %166, %167 : vector<1x1xf32>
    %169 = math.rsqrt %168 : vector<1x1xf32>
    %c4_i32 = arith.constant 4 : i32
    %170 = vector.broadcast %c4_i32 : i32 to vector<16x1xi32>
    %171 = arith.cmpi sge, %6, %170 : vector<16x1xi32>
    %172 = vector.extract_strided_slice %165 {offsets = [0, 4], sizes = [16, 1], strides = [1, 1]} : vector<16x16xf32> to vector<16x1xf32>
    %173 = vector.broadcast %169 : vector<1x1xf32> to vector<16x1xf32>
    %174 = arith.mulf %172, %173 : vector<16x1xf32>
    %cst_41 = arith.constant 0.000000e+00 : f32
    %175 = vector.broadcast %cst_41 : f32 to vector<16x1xf32>
    %176 = arith.select %171, %174, %175 : vector<16x1xi1>, vector<16x1xf32>
    %177 = vector.extract_strided_slice %58 {offsets = [0, 4], sizes = [1, 1], strides = [1, 1]} : vector<1x16xf32> to vector<1x1xf32>
    %178 = vector.broadcast %177 : vector<1x1xf32> to vector<16x1xf32>
    %179 = arith.mulf %176, %178 : vector<16x1xf32>
    %180 = arith.addf %154, %179 : vector<16x1xf32>
    %c4_i32_42 = arith.constant 4 : i32
    %181 = vector.broadcast %c4_i32_42 : i32 to vector<1x16xi32>
    %182 = arith.cmpi sgt, %7, %181 : vector<1x16xi32>
    %183 = vector.extract_strided_slice %165 {offsets = [4, 0], sizes = [1, 16], strides = [1, 1]} : vector<16x16xf32> to vector<1x16xf32>
    %184 = vector.broadcast %169 : vector<1x1xf32> to vector<1x16xf32>
    %185 = arith.mulf %183, %184 : vector<1x16xf32>
    %cst_43 = arith.constant 0.000000e+00 : f32
    %186 = vector.broadcast %cst_43 : f32 to vector<1x16xf32>
    %187 = arith.select %182, %185, %186 : vector<1x16xi1>, vector<1x16xf32>
    %188 = vector.broadcast %176 : vector<16x1xf32> to vector<16x16xf32>
    %189 = vector.broadcast %187 : vector<1x16xf32> to vector<16x16xf32>
    %190 = arith.mulf %188, %189 : vector<16x16xf32>
    %191 = arith.subf %165, %190 : vector<16x16xf32>
    %192 = vector.extract_strided_slice %191 {offsets = [5, 5], sizes = [1, 1], strides = [1, 1]} : vector<16x16xf32> to vector<1x1xf32>
    %cst_44 = arith.constant 9.99999996E-13 : f32
    %193 = vector.broadcast %cst_44 : f32 to vector<1x1xf32>
    %194 = arith.maximumf %192, %193 : vector<1x1xf32>
    %195 = math.rsqrt %194 : vector<1x1xf32>
    %c5_i32 = arith.constant 5 : i32
    %196 = vector.broadcast %c5_i32 : i32 to vector<16x1xi32>
    %197 = arith.cmpi sge, %6, %196 : vector<16x1xi32>
    %198 = vector.extract_strided_slice %191 {offsets = [0, 5], sizes = [16, 1], strides = [1, 1]} : vector<16x16xf32> to vector<16x1xf32>
    %199 = vector.broadcast %195 : vector<1x1xf32> to vector<16x1xf32>
    %200 = arith.mulf %198, %199 : vector<16x1xf32>
    %cst_45 = arith.constant 0.000000e+00 : f32
    %201 = vector.broadcast %cst_45 : f32 to vector<16x1xf32>
    %202 = arith.select %197, %200, %201 : vector<16x1xi1>, vector<16x1xf32>
    %203 = vector.extract_strided_slice %58 {offsets = [0, 5], sizes = [1, 1], strides = [1, 1]} : vector<1x16xf32> to vector<1x1xf32>
    %204 = vector.broadcast %203 : vector<1x1xf32> to vector<16x1xf32>
    %205 = arith.mulf %202, %204 : vector<16x1xf32>
    %206 = arith.addf %180, %205 : vector<16x1xf32>
    %c5_i32_46 = arith.constant 5 : i32
    %207 = vector.broadcast %c5_i32_46 : i32 to vector<1x16xi32>
    %208 = arith.cmpi sgt, %7, %207 : vector<1x16xi32>
    %209 = vector.extract_strided_slice %191 {offsets = [5, 0], sizes = [1, 16], strides = [1, 1]} : vector<16x16xf32> to vector<1x16xf32>
    %210 = vector.broadcast %195 : vector<1x1xf32> to vector<1x16xf32>
    %211 = arith.mulf %209, %210 : vector<1x16xf32>
    %cst_47 = arith.constant 0.000000e+00 : f32
    %212 = vector.broadcast %cst_47 : f32 to vector<1x16xf32>
    %213 = arith.select %208, %211, %212 : vector<1x16xi1>, vector<1x16xf32>
    %214 = vector.broadcast %202 : vector<16x1xf32> to vector<16x16xf32>
    %215 = vector.broadcast %213 : vector<1x16xf32> to vector<16x16xf32>
    %216 = arith.mulf %214, %215 : vector<16x16xf32>
    %217 = arith.subf %191, %216 : vector<16x16xf32>
    %218 = vector.extract_strided_slice %217 {offsets = [6, 6], sizes = [1, 1], strides = [1, 1]} : vector<16x16xf32> to vector<1x1xf32>
    %cst_48 = arith.constant 9.99999996E-13 : f32
    %219 = vector.broadcast %cst_48 : f32 to vector<1x1xf32>
    %220 = arith.maximumf %218, %219 : vector<1x1xf32>
    %221 = math.rsqrt %220 : vector<1x1xf32>
    %c6_i32 = arith.constant 6 : i32
    %222 = vector.broadcast %c6_i32 : i32 to vector<16x1xi32>
    %223 = arith.cmpi sge, %6, %222 : vector<16x1xi32>
    %224 = vector.extract_strided_slice %217 {offsets = [0, 6], sizes = [16, 1], strides = [1, 1]} : vector<16x16xf32> to vector<16x1xf32>
    %225 = vector.broadcast %221 : vector<1x1xf32> to vector<16x1xf32>
    %226 = arith.mulf %224, %225 : vector<16x1xf32>
    %cst_49 = arith.constant 0.000000e+00 : f32
    %227 = vector.broadcast %cst_49 : f32 to vector<16x1xf32>
    %228 = arith.select %223, %226, %227 : vector<16x1xi1>, vector<16x1xf32>
    %229 = vector.extract_strided_slice %58 {offsets = [0, 6], sizes = [1, 1], strides = [1, 1]} : vector<1x16xf32> to vector<1x1xf32>
    %230 = vector.broadcast %229 : vector<1x1xf32> to vector<16x1xf32>
    %231 = arith.mulf %228, %230 : vector<16x1xf32>
    %232 = arith.addf %206, %231 : vector<16x1xf32>
    %c6_i32_50 = arith.constant 6 : i32
    %233 = vector.broadcast %c6_i32_50 : i32 to vector<1x16xi32>
    %234 = arith.cmpi sgt, %7, %233 : vector<1x16xi32>
    %235 = vector.extract_strided_slice %217 {offsets = [6, 0], sizes = [1, 16], strides = [1, 1]} : vector<16x16xf32> to vector<1x16xf32>
    %236 = vector.broadcast %221 : vector<1x1xf32> to vector<1x16xf32>
    %237 = arith.mulf %235, %236 : vector<1x16xf32>
    %cst_51 = arith.constant 0.000000e+00 : f32
    %238 = vector.broadcast %cst_51 : f32 to vector<1x16xf32>
    %239 = arith.select %234, %237, %238 : vector<1x16xi1>, vector<1x16xf32>
    %240 = vector.broadcast %228 : vector<16x1xf32> to vector<16x16xf32>
    %241 = vector.broadcast %239 : vector<1x16xf32> to vector<16x16xf32>
    %242 = arith.mulf %240, %241 : vector<16x16xf32>
    %243 = arith.subf %217, %242 : vector<16x16xf32>
    %244 = vector.extract_strided_slice %243 {offsets = [7, 7], sizes = [1, 1], strides = [1, 1]} : vector<16x16xf32> to vector<1x1xf32>
    %cst_52 = arith.constant 9.99999996E-13 : f32
    %245 = vector.broadcast %cst_52 : f32 to vector<1x1xf32>
    %246 = arith.maximumf %244, %245 : vector<1x1xf32>
    %247 = math.rsqrt %246 : vector<1x1xf32>
    %c7_i32 = arith.constant 7 : i32
    %248 = vector.broadcast %c7_i32 : i32 to vector<16x1xi32>
    %249 = arith.cmpi sge, %6, %248 : vector<16x1xi32>
    %250 = vector.extract_strided_slice %243 {offsets = [0, 7], sizes = [16, 1], strides = [1, 1]} : vector<16x16xf32> to vector<16x1xf32>
    %251 = vector.broadcast %247 : vector<1x1xf32> to vector<16x1xf32>
    %252 = arith.mulf %250, %251 : vector<16x1xf32>
    %cst_53 = arith.constant 0.000000e+00 : f32
    %253 = vector.broadcast %cst_53 : f32 to vector<16x1xf32>
    %254 = arith.select %249, %252, %253 : vector<16x1xi1>, vector<16x1xf32>
    %255 = vector.extract_strided_slice %58 {offsets = [0, 7], sizes = [1, 1], strides = [1, 1]} : vector<1x16xf32> to vector<1x1xf32>
    %256 = vector.broadcast %255 : vector<1x1xf32> to vector<16x1xf32>
    %257 = arith.mulf %254, %256 : vector<16x1xf32>
    %258 = arith.addf %232, %257 : vector<16x1xf32>
    %c7_i32_54 = arith.constant 7 : i32
    %259 = vector.broadcast %c7_i32_54 : i32 to vector<1x16xi32>
    %260 = arith.cmpi sgt, %7, %259 : vector<1x16xi32>
    %261 = vector.extract_strided_slice %243 {offsets = [7, 0], sizes = [1, 16], strides = [1, 1]} : vector<16x16xf32> to vector<1x16xf32>
    %262 = vector.broadcast %247 : vector<1x1xf32> to vector<1x16xf32>
    %263 = arith.mulf %261, %262 : vector<1x16xf32>
    %cst_55 = arith.constant 0.000000e+00 : f32
    %264 = vector.broadcast %cst_55 : f32 to vector<1x16xf32>
    %265 = arith.select %260, %263, %264 : vector<1x16xi1>, vector<1x16xf32>
    %266 = vector.broadcast %254 : vector<16x1xf32> to vector<16x16xf32>
    %267 = vector.broadcast %265 : vector<1x16xf32> to vector<16x16xf32>
    %268 = arith.mulf %266, %267 : vector<16x16xf32>
    %269 = arith.subf %243, %268 : vector<16x16xf32>
    %270 = vector.extract_strided_slice %269 {offsets = [8, 8], sizes = [1, 1], strides = [1, 1]} : vector<16x16xf32> to vector<1x1xf32>
    %cst_56 = arith.constant 9.99999996E-13 : f32
    %271 = vector.broadcast %cst_56 : f32 to vector<1x1xf32>
    %272 = arith.maximumf %270, %271 : vector<1x1xf32>
    %273 = math.rsqrt %272 : vector<1x1xf32>
    %c8_i32 = arith.constant 8 : i32
    %274 = vector.broadcast %c8_i32 : i32 to vector<16x1xi32>
    %275 = arith.cmpi sge, %6, %274 : vector<16x1xi32>
    %276 = vector.extract_strided_slice %269 {offsets = [0, 8], sizes = [16, 1], strides = [1, 1]} : vector<16x16xf32> to vector<16x1xf32>
    %277 = vector.broadcast %273 : vector<1x1xf32> to vector<16x1xf32>
    %278 = arith.mulf %276, %277 : vector<16x1xf32>
    %cst_57 = arith.constant 0.000000e+00 : f32
    %279 = vector.broadcast %cst_57 : f32 to vector<16x1xf32>
    %280 = arith.select %275, %278, %279 : vector<16x1xi1>, vector<16x1xf32>
    %281 = vector.extract_strided_slice %58 {offsets = [0, 8], sizes = [1, 1], strides = [1, 1]} : vector<1x16xf32> to vector<1x1xf32>
    %282 = vector.broadcast %281 : vector<1x1xf32> to vector<16x1xf32>
    %283 = arith.mulf %280, %282 : vector<16x1xf32>
    %284 = arith.addf %258, %283 : vector<16x1xf32>
    %c8_i32_58 = arith.constant 8 : i32
    %285 = vector.broadcast %c8_i32_58 : i32 to vector<1x16xi32>
    %286 = arith.cmpi sgt, %7, %285 : vector<1x16xi32>
    %287 = vector.extract_strided_slice %269 {offsets = [8, 0], sizes = [1, 16], strides = [1, 1]} : vector<16x16xf32> to vector<1x16xf32>
    %288 = vector.broadcast %273 : vector<1x1xf32> to vector<1x16xf32>
    %289 = arith.mulf %287, %288 : vector<1x16xf32>
    %cst_59 = arith.constant 0.000000e+00 : f32
    %290 = vector.broadcast %cst_59 : f32 to vector<1x16xf32>
    %291 = arith.select %286, %289, %290 : vector<1x16xi1>, vector<1x16xf32>
    %292 = vector.broadcast %280 : vector<16x1xf32> to vector<16x16xf32>
    %293 = vector.broadcast %291 : vector<1x16xf32> to vector<16x16xf32>
    %294 = arith.mulf %292, %293 : vector<16x16xf32>
    %295 = arith.subf %269, %294 : vector<16x16xf32>
    %296 = vector.extract_strided_slice %295 {offsets = [9, 9], sizes = [1, 1], strides = [1, 1]} : vector<16x16xf32> to vector<1x1xf32>
    %cst_60 = arith.constant 9.99999996E-13 : f32
    %297 = vector.broadcast %cst_60 : f32 to vector<1x1xf32>
    %298 = arith.maximumf %296, %297 : vector<1x1xf32>
    %299 = math.rsqrt %298 : vector<1x1xf32>
    %c9_i32 = arith.constant 9 : i32
    %300 = vector.broadcast %c9_i32 : i32 to vector<16x1xi32>
    %301 = arith.cmpi sge, %6, %300 : vector<16x1xi32>
    %302 = vector.extract_strided_slice %295 {offsets = [0, 9], sizes = [16, 1], strides = [1, 1]} : vector<16x16xf32> to vector<16x1xf32>
    %303 = vector.broadcast %299 : vector<1x1xf32> to vector<16x1xf32>
    %304 = arith.mulf %302, %303 : vector<16x1xf32>
    %cst_61 = arith.constant 0.000000e+00 : f32
    %305 = vector.broadcast %cst_61 : f32 to vector<16x1xf32>
    %306 = arith.select %301, %304, %305 : vector<16x1xi1>, vector<16x1xf32>
    %307 = vector.extract_strided_slice %58 {offsets = [0, 9], sizes = [1, 1], strides = [1, 1]} : vector<1x16xf32> to vector<1x1xf32>
    %308 = vector.broadcast %307 : vector<1x1xf32> to vector<16x1xf32>
    %309 = arith.mulf %306, %308 : vector<16x1xf32>
    %310 = arith.addf %284, %309 : vector<16x1xf32>
    %c9_i32_62 = arith.constant 9 : i32
    %311 = vector.broadcast %c9_i32_62 : i32 to vector<1x16xi32>
    %312 = arith.cmpi sgt, %7, %311 : vector<1x16xi32>
    %313 = vector.extract_strided_slice %295 {offsets = [9, 0], sizes = [1, 16], strides = [1, 1]} : vector<16x16xf32> to vector<1x16xf32>
    %314 = vector.broadcast %299 : vector<1x1xf32> to vector<1x16xf32>
    %315 = arith.mulf %313, %314 : vector<1x16xf32>
    %cst_63 = arith.constant 0.000000e+00 : f32
    %316 = vector.broadcast %cst_63 : f32 to vector<1x16xf32>
    %317 = arith.select %312, %315, %316 : vector<1x16xi1>, vector<1x16xf32>
    %318 = vector.broadcast %306 : vector<16x1xf32> to vector<16x16xf32>
    %319 = vector.broadcast %317 : vector<1x16xf32> to vector<16x16xf32>
    %320 = arith.mulf %318, %319 : vector<16x16xf32>
    %321 = arith.subf %295, %320 : vector<16x16xf32>
    %322 = vector.extract_strided_slice %321 {offsets = [10, 10], sizes = [1, 1], strides = [1, 1]} : vector<16x16xf32> to vector<1x1xf32>
    %cst_64 = arith.constant 9.99999996E-13 : f32
    %323 = vector.broadcast %cst_64 : f32 to vector<1x1xf32>
    %324 = arith.maximumf %322, %323 : vector<1x1xf32>
    %325 = math.rsqrt %324 : vector<1x1xf32>
    %c10_i32 = arith.constant 10 : i32
    %326 = vector.broadcast %c10_i32 : i32 to vector<16x1xi32>
    %327 = arith.cmpi sge, %6, %326 : vector<16x1xi32>
    %328 = vector.extract_strided_slice %321 {offsets = [0, 10], sizes = [16, 1], strides = [1, 1]} : vector<16x16xf32> to vector<16x1xf32>
    %329 = vector.broadcast %325 : vector<1x1xf32> to vector<16x1xf32>
    %330 = arith.mulf %328, %329 : vector<16x1xf32>
    %cst_65 = arith.constant 0.000000e+00 : f32
    %331 = vector.broadcast %cst_65 : f32 to vector<16x1xf32>
    %332 = arith.select %327, %330, %331 : vector<16x1xi1>, vector<16x1xf32>
    %333 = vector.extract_strided_slice %58 {offsets = [0, 10], sizes = [1, 1], strides = [1, 1]} : vector<1x16xf32> to vector<1x1xf32>
    %334 = vector.broadcast %333 : vector<1x1xf32> to vector<16x1xf32>
    %335 = arith.mulf %332, %334 : vector<16x1xf32>
    %336 = arith.addf %310, %335 : vector<16x1xf32>
    %c10_i32_66 = arith.constant 10 : i32
    %337 = vector.broadcast %c10_i32_66 : i32 to vector<1x16xi32>
    %338 = arith.cmpi sgt, %7, %337 : vector<1x16xi32>
    %339 = vector.extract_strided_slice %321 {offsets = [10, 0], sizes = [1, 16], strides = [1, 1]} : vector<16x16xf32> to vector<1x16xf32>
    %340 = vector.broadcast %325 : vector<1x1xf32> to vector<1x16xf32>
    %341 = arith.mulf %339, %340 : vector<1x16xf32>
    %cst_67 = arith.constant 0.000000e+00 : f32
    %342 = vector.broadcast %cst_67 : f32 to vector<1x16xf32>
    %343 = arith.select %338, %341, %342 : vector<1x16xi1>, vector<1x16xf32>
    %344 = vector.broadcast %332 : vector<16x1xf32> to vector<16x16xf32>
    %345 = vector.broadcast %343 : vector<1x16xf32> to vector<16x16xf32>
    %346 = arith.mulf %344, %345 : vector<16x16xf32>
    %347 = arith.subf %321, %346 : vector<16x16xf32>
    %348 = vector.extract_strided_slice %347 {offsets = [11, 11], sizes = [1, 1], strides = [1, 1]} : vector<16x16xf32> to vector<1x1xf32>
    %cst_68 = arith.constant 9.99999996E-13 : f32
    %349 = vector.broadcast %cst_68 : f32 to vector<1x1xf32>
    %350 = arith.maximumf %348, %349 : vector<1x1xf32>
    %351 = math.rsqrt %350 : vector<1x1xf32>
    %c11_i32 = arith.constant 11 : i32
    %352 = vector.broadcast %c11_i32 : i32 to vector<16x1xi32>
    %353 = arith.cmpi sge, %6, %352 : vector<16x1xi32>
    %354 = vector.extract_strided_slice %347 {offsets = [0, 11], sizes = [16, 1], strides = [1, 1]} : vector<16x16xf32> to vector<16x1xf32>
    %355 = vector.broadcast %351 : vector<1x1xf32> to vector<16x1xf32>
    %356 = arith.mulf %354, %355 : vector<16x1xf32>
    %cst_69 = arith.constant 0.000000e+00 : f32
    %357 = vector.broadcast %cst_69 : f32 to vector<16x1xf32>
    %358 = arith.select %353, %356, %357 : vector<16x1xi1>, vector<16x1xf32>
    %359 = vector.extract_strided_slice %58 {offsets = [0, 11], sizes = [1, 1], strides = [1, 1]} : vector<1x16xf32> to vector<1x1xf32>
    %360 = vector.broadcast %359 : vector<1x1xf32> to vector<16x1xf32>
    %361 = arith.mulf %358, %360 : vector<16x1xf32>
    %362 = arith.addf %336, %361 : vector<16x1xf32>
    %c11_i32_70 = arith.constant 11 : i32
    %363 = vector.broadcast %c11_i32_70 : i32 to vector<1x16xi32>
    %364 = arith.cmpi sgt, %7, %363 : vector<1x16xi32>
    %365 = vector.extract_strided_slice %347 {offsets = [11, 0], sizes = [1, 16], strides = [1, 1]} : vector<16x16xf32> to vector<1x16xf32>
    %366 = vector.broadcast %351 : vector<1x1xf32> to vector<1x16xf32>
    %367 = arith.mulf %365, %366 : vector<1x16xf32>
    %cst_71 = arith.constant 0.000000e+00 : f32
    %368 = vector.broadcast %cst_71 : f32 to vector<1x16xf32>
    %369 = arith.select %364, %367, %368 : vector<1x16xi1>, vector<1x16xf32>
    %370 = vector.broadcast %358 : vector<16x1xf32> to vector<16x16xf32>
    %371 = vector.broadcast %369 : vector<1x16xf32> to vector<16x16xf32>
    %372 = arith.mulf %370, %371 : vector<16x16xf32>
    %373 = arith.subf %347, %372 : vector<16x16xf32>
    %374 = vector.extract_strided_slice %373 {offsets = [12, 12], sizes = [1, 1], strides = [1, 1]} : vector<16x16xf32> to vector<1x1xf32>
    %cst_72 = arith.constant 9.99999996E-13 : f32
    %375 = vector.broadcast %cst_72 : f32 to vector<1x1xf32>
    %376 = arith.maximumf %374, %375 : vector<1x1xf32>
    %377 = math.rsqrt %376 : vector<1x1xf32>
    %c12_i32 = arith.constant 12 : i32
    %378 = vector.broadcast %c12_i32 : i32 to vector<16x1xi32>
    %379 = arith.cmpi sge, %6, %378 : vector<16x1xi32>
    %380 = vector.extract_strided_slice %373 {offsets = [0, 12], sizes = [16, 1], strides = [1, 1]} : vector<16x16xf32> to vector<16x1xf32>
    %381 = vector.broadcast %377 : vector<1x1xf32> to vector<16x1xf32>
    %382 = arith.mulf %380, %381 : vector<16x1xf32>
    %cst_73 = arith.constant 0.000000e+00 : f32
    %383 = vector.broadcast %cst_73 : f32 to vector<16x1xf32>
    %384 = arith.select %379, %382, %383 : vector<16x1xi1>, vector<16x1xf32>
    %385 = vector.extract_strided_slice %58 {offsets = [0, 12], sizes = [1, 1], strides = [1, 1]} : vector<1x16xf32> to vector<1x1xf32>
    %386 = vector.broadcast %385 : vector<1x1xf32> to vector<16x1xf32>
    %387 = arith.mulf %384, %386 : vector<16x1xf32>
    %388 = arith.addf %362, %387 : vector<16x1xf32>
    %c12_i32_74 = arith.constant 12 : i32
    %389 = vector.broadcast %c12_i32_74 : i32 to vector<1x16xi32>
    %390 = arith.cmpi sgt, %7, %389 : vector<1x16xi32>
    %391 = vector.extract_strided_slice %373 {offsets = [12, 0], sizes = [1, 16], strides = [1, 1]} : vector<16x16xf32> to vector<1x16xf32>
    %392 = vector.broadcast %377 : vector<1x1xf32> to vector<1x16xf32>
    %393 = arith.mulf %391, %392 : vector<1x16xf32>
    %cst_75 = arith.constant 0.000000e+00 : f32
    %394 = vector.broadcast %cst_75 : f32 to vector<1x16xf32>
    %395 = arith.select %390, %393, %394 : vector<1x16xi1>, vector<1x16xf32>
    %396 = vector.broadcast %384 : vector<16x1xf32> to vector<16x16xf32>
    %397 = vector.broadcast %395 : vector<1x16xf32> to vector<16x16xf32>
    %398 = arith.mulf %396, %397 : vector<16x16xf32>
    %399 = arith.subf %373, %398 : vector<16x16xf32>
    %400 = vector.extract_strided_slice %399 {offsets = [13, 13], sizes = [1, 1], strides = [1, 1]} : vector<16x16xf32> to vector<1x1xf32>
    %cst_76 = arith.constant 9.99999996E-13 : f32
    %401 = vector.broadcast %cst_76 : f32 to vector<1x1xf32>
    %402 = arith.maximumf %400, %401 : vector<1x1xf32>
    %403 = math.rsqrt %402 : vector<1x1xf32>
    %c13_i32 = arith.constant 13 : i32
    %404 = vector.broadcast %c13_i32 : i32 to vector<16x1xi32>
    %405 = arith.cmpi sge, %6, %404 : vector<16x1xi32>
    %406 = vector.extract_strided_slice %399 {offsets = [0, 13], sizes = [16, 1], strides = [1, 1]} : vector<16x16xf32> to vector<16x1xf32>
    %407 = vector.broadcast %403 : vector<1x1xf32> to vector<16x1xf32>
    %408 = arith.mulf %406, %407 : vector<16x1xf32>
    %cst_77 = arith.constant 0.000000e+00 : f32
    %409 = vector.broadcast %cst_77 : f32 to vector<16x1xf32>
    %410 = arith.select %405, %408, %409 : vector<16x1xi1>, vector<16x1xf32>
    %411 = vector.extract_strided_slice %58 {offsets = [0, 13], sizes = [1, 1], strides = [1, 1]} : vector<1x16xf32> to vector<1x1xf32>
    %412 = vector.broadcast %411 : vector<1x1xf32> to vector<16x1xf32>
    %413 = arith.mulf %410, %412 : vector<16x1xf32>
    %414 = arith.addf %388, %413 : vector<16x1xf32>
    %c13_i32_78 = arith.constant 13 : i32
    %415 = vector.broadcast %c13_i32_78 : i32 to vector<1x16xi32>
    %416 = arith.cmpi sgt, %7, %415 : vector<1x16xi32>
    %417 = vector.extract_strided_slice %399 {offsets = [13, 0], sizes = [1, 16], strides = [1, 1]} : vector<16x16xf32> to vector<1x16xf32>
    %418 = vector.broadcast %403 : vector<1x1xf32> to vector<1x16xf32>
    %419 = arith.mulf %417, %418 : vector<1x16xf32>
    %cst_79 = arith.constant 0.000000e+00 : f32
    %420 = vector.broadcast %cst_79 : f32 to vector<1x16xf32>
    %421 = arith.select %416, %419, %420 : vector<1x16xi1>, vector<1x16xf32>
    %422 = vector.broadcast %410 : vector<16x1xf32> to vector<16x16xf32>
    %423 = vector.broadcast %421 : vector<1x16xf32> to vector<16x16xf32>
    %424 = arith.mulf %422, %423 : vector<16x16xf32>
    %425 = arith.subf %399, %424 : vector<16x16xf32>
    %426 = vector.extract_strided_slice %425 {offsets = [14, 14], sizes = [1, 1], strides = [1, 1]} : vector<16x16xf32> to vector<1x1xf32>
    %cst_80 = arith.constant 9.99999996E-13 : f32
    %427 = vector.broadcast %cst_80 : f32 to vector<1x1xf32>
    %428 = arith.maximumf %426, %427 : vector<1x1xf32>
    %429 = math.rsqrt %428 : vector<1x1xf32>
    %c14_i32 = arith.constant 14 : i32
    %430 = vector.broadcast %c14_i32 : i32 to vector<16x1xi32>
    %431 = arith.cmpi sge, %6, %430 : vector<16x1xi32>
    %432 = vector.extract_strided_slice %425 {offsets = [0, 14], sizes = [16, 1], strides = [1, 1]} : vector<16x16xf32> to vector<16x1xf32>
    %433 = vector.broadcast %429 : vector<1x1xf32> to vector<16x1xf32>
    %434 = arith.mulf %432, %433 : vector<16x1xf32>
    %cst_81 = arith.constant 0.000000e+00 : f32
    %435 = vector.broadcast %cst_81 : f32 to vector<16x1xf32>
    %436 = arith.select %431, %434, %435 : vector<16x1xi1>, vector<16x1xf32>
    %437 = vector.extract_strided_slice %58 {offsets = [0, 14], sizes = [1, 1], strides = [1, 1]} : vector<1x16xf32> to vector<1x1xf32>
    %438 = vector.broadcast %437 : vector<1x1xf32> to vector<16x1xf32>
    %439 = arith.mulf %436, %438 : vector<16x1xf32>
    %440 = arith.addf %414, %439 : vector<16x1xf32>
    %c14_i32_82 = arith.constant 14 : i32
    %441 = vector.broadcast %c14_i32_82 : i32 to vector<1x16xi32>
    %442 = arith.cmpi sgt, %7, %441 : vector<1x16xi32>
    %443 = vector.extract_strided_slice %425 {offsets = [14, 0], sizes = [1, 16], strides = [1, 1]} : vector<16x16xf32> to vector<1x16xf32>
    %444 = vector.broadcast %429 : vector<1x1xf32> to vector<1x16xf32>
    %445 = arith.mulf %443, %444 : vector<1x16xf32>
    %cst_83 = arith.constant 0.000000e+00 : f32
    %446 = vector.broadcast %cst_83 : f32 to vector<1x16xf32>
    %447 = arith.select %442, %445, %446 : vector<1x16xi1>, vector<1x16xf32>
    %448 = vector.broadcast %436 : vector<16x1xf32> to vector<16x16xf32>
    %449 = vector.broadcast %447 : vector<1x16xf32> to vector<16x16xf32>
    %450 = arith.mulf %448, %449 : vector<16x16xf32>
    %451 = arith.subf %425, %450 : vector<16x16xf32>
    %452 = vector.extract_strided_slice %451 {offsets = [15, 15], sizes = [1, 1], strides = [1, 1]} : vector<16x16xf32> to vector<1x1xf32>
    %cst_84 = arith.constant 9.99999996E-13 : f32
    %453 = vector.broadcast %cst_84 : f32 to vector<1x1xf32>
    %454 = arith.maximumf %452, %453 : vector<1x1xf32>
    %455 = math.rsqrt %454 : vector<1x1xf32>
    %c15_i32 = arith.constant 15 : i32
    %456 = vector.broadcast %c15_i32 : i32 to vector<16x1xi32>
    %457 = arith.cmpi sge, %6, %456 : vector<16x1xi32>
    %458 = vector.extract_strided_slice %451 {offsets = [0, 15], sizes = [16, 1], strides = [1, 1]} : vector<16x16xf32> to vector<16x1xf32>
    %459 = vector.broadcast %455 : vector<1x1xf32> to vector<16x1xf32>
    %460 = arith.mulf %458, %459 : vector<16x1xf32>
    %cst_85 = arith.constant 0.000000e+00 : f32
    %461 = vector.broadcast %cst_85 : f32 to vector<16x1xf32>
    %462 = arith.select %457, %460, %461 : vector<16x1xi1>, vector<16x1xf32>
    %463 = vector.extract_strided_slice %58 {offsets = [0, 15], sizes = [1, 1], strides = [1, 1]} : vector<1x16xf32> to vector<1x1xf32>
    %464 = vector.broadcast %463 : vector<1x1xf32> to vector<16x1xf32>
    %465 = arith.mulf %462, %464 : vector<16x1xf32>
    %466 = arith.addf %440, %465 : vector<16x1xf32>
    %cst_86 = arith.constant 0.000000e+00 : f32
    %467 = vector.shape_cast %54 : vector<1x16xf32> to vector<1x16xf32>
    %468 = vector.broadcast %467 : vector<1x16xf32> to vector<16x16xf32>
    %469 = vector.broadcast %cst_86 : f32 to vector<16x16xf32>
    %470 = arith.select %2, %468, %469 : vector<16x16xi1>, vector<16x16xf32>
    %cst_87 = arith.constant dense<0.000000e+00> : vector<16xf32>
    %471 = vector.multi_reduction <add>, %470, %cst_87 [1] : vector<16x16xf32> to vector<16xf32>
    %472 = vector.shape_cast %471 : vector<16xf32> to vector<16x1xf32>
    %473 = arith.addf %472, %466 : vector<16x1xf32>
    %474 = vector.broadcast %473 : vector<16x1xf32> to vector<16x4xf32>
    %475 = vector.broadcast %59 : vector<1x4xf32> to vector<16x4xf32>
    %476 = arith.mulf %474, %475 : vector<16x4xf32>
    %477 = vector.broadcast %60 : vector<1x4xf32> to vector<16x4xf32>
    %478 = arith.addf %476, %477 : vector<16x4xf32>
    %c1 = arith.constant 1 : index
    %479 = memref.load %arg4[%c1] : memref<3xf32, #tpu.memory_space<smem>>
    %c0_88 = arith.constant 0 : index
    %c0_89 = arith.constant 0 : index
    %480 = vector.load %arg2[%c0_88, %c0_89] : memref<72x128xf32, #tpu.memory_space<vmem>>, vector<32x5xf32>
    %481 = vector.extract_strided_slice %480 {offsets = [0, 0], sizes = [32, 4], strides = [1, 1]} : vector<32x5xf32> to vector<32x4xf32>
    %482 = vector.extract_strided_slice %480 {offsets = [0, 4], sizes = [32, 1], strides = [1, 1]} : vector<32x5xf32> to vector<32x1xf32>
    %c32_90 = arith.constant 32 : index
    %c0_91 = arith.constant 0 : index
    %483 = vector.load %arg2[%c32_90, %c0_91] : memref<72x128xf32, #tpu.memory_space<vmem>>, vector<33x32xf32>
    %c65_92 = arith.constant 65 : index
    %c0_93 = arith.constant 0 : index
    %484 = vector.load %arg2[%c65_92, %c0_93] : memref<72x128xf32, #tpu.memory_space<vmem>>, vector<1x4xf32>
    %485 = vector.broadcast %484 : vector<1x4xf32> to vector<16x4xf32>
    %486 = arith.mulf %478, %485 : vector<16x4xf32>
    %487 = arith.mulf %486, %486 : vector<16x4xf32>
    %cst_94 = arith.constant dense<0.000000e+00> : vector<16xf32>
    %488 = vector.multi_reduction <add>, %487, %cst_94 [1] : vector<16x4xf32> to vector<16xf32>
    %489 = vector.shape_cast %488 : vector<16xf32> to vector<16x1xf32>
    %cst_95 = arith.constant dense<0.000000e+00> : vector<32x16xf32>
    %490 = tpu.matmul %481, %486, %cst_95 {dimension_numbers = #tpu.dot_dimension_numbers<[1], [1], [0], [0], [0, 0, 1, 0], [], []>} : vector<32x4xf32>, vector<16x4xf32>, vector<32x16xf32> -> vector<32x16xf32>
    %cst_96 = arith.constant dense<0.000000e+00> : vector<16x16xf32>
    %491 = tpu.matmul %486, %486, %cst_96 {dimension_numbers = #tpu.dot_dimension_numbers<[1], [1], [0], [0], [0, 0, 1, 0], [], []>} : vector<16x4xf32>, vector<16x4xf32>, vector<16x16xf32> -> vector<16x16xf32>
    %cst_97 = arith.constant 0.000000e+00 : f32
    %492 = vector.broadcast %cst_97 : f32 to vector<16x16xf32>
    %493 = arith.select %2, %491, %492 : vector<16x16xi1>, vector<16x16xf32>
    %cst_98 = arith.constant dense<0.000000e+00> : vector<16xf32>
    %494 = vector.multi_reduction <add>, %493, %cst_98 [0] : vector<16x16xf32> to vector<16xf32>
    %495 = vector.shape_cast %494 : vector<16xf32> to vector<1x16xf32>
    %496 = vector.broadcast %482 : vector<32x1xf32> to vector<32x16xf32>
    %497 = vector.broadcast %495 : vector<1x16xf32> to vector<32x16xf32>
    %498 = arith.addf %496, %497 : vector<32x16xf32>
    %cst_99 = arith.constant 2.000000e+00 : f32
    %499 = vector.broadcast %cst_99 : f32 to vector<32x16xf32>
    %500 = arith.mulf %499, %490 : vector<32x16xf32>
    %501 = arith.subf %498, %500 : vector<32x16xf32>
    %cst_100 = arith.constant 0.000000e+00 : f32
    %502 = vector.broadcast %cst_100 : f32 to vector<32x16xf32>
    %503 = arith.maximumf %501, %502 : vector<32x16xf32>
    %cst_101 = arith.constant -5.000000e-01 : f32
    %504 = vector.broadcast %cst_101 : f32 to vector<32x16xf32>
    %505 = arith.mulf %504, %503 : vector<32x16xf32>
    %506 = math.exp %505 : vector<32x16xf32>
    %507 = vector.broadcast %479 : f32 to vector<32x16xf32>
    %508 = arith.mulf %507, %506 : vector<32x16xf32>
    %509 = vector.broadcast %489 : vector<16x1xf32> to vector<16x16xf32>
    %510 = vector.broadcast %495 : vector<1x16xf32> to vector<16x16xf32>
    %511 = arith.addf %509, %510 : vector<16x16xf32>
    %cst_102 = arith.constant 2.000000e+00 : f32
    %512 = vector.broadcast %cst_102 : f32 to vector<16x16xf32>
    %513 = arith.mulf %512, %491 : vector<16x16xf32>
    %514 = arith.subf %511, %513 : vector<16x16xf32>
    %cst_103 = arith.constant 0.000000e+00 : f32
    %515 = vector.broadcast %cst_103 : f32 to vector<16x16xf32>
    %516 = arith.maximumf %514, %515 : vector<16x16xf32>
    %cst_104 = arith.constant -5.000000e-01 : f32
    %517 = vector.broadcast %cst_104 : f32 to vector<16x16xf32>
    %518 = arith.mulf %517, %516 : vector<16x16xf32>
    %519 = math.exp %518 : vector<16x16xf32>
    %520 = vector.broadcast %479 : f32 to vector<16x16xf32>
    %521 = arith.mulf %520, %519 : vector<16x16xf32>
    %cst_105 = arith.constant dense<0.000000e+00> : vector<33x16xf32>
    %522 = tpu.matmul %483, %508, %cst_105 {dimension_numbers = #tpu.dot_dimension_numbers<[1], [0], [0], [1], [0, 0, 1, 1], [], []>} : vector<33x32xf32>, vector<32x16xf32>, vector<33x16xf32> -> vector<33x16xf32>
    %523 = vector.extract_strided_slice %522 {offsets = [0, 0], sizes = [32, 16], strides = [1, 1]} : vector<33x16xf32> to vector<32x16xf32>
    %524 = vector.extract_strided_slice %522 {offsets = [32, 0], sizes = [1, 16], strides = [1, 1]} : vector<33x16xf32> to vector<1x16xf32>
    %cst_106 = arith.constant dense<0.000000e+00> : vector<16x16xf32>
    %525 = tpu.matmul %508, %523, %cst_106 {dimension_numbers = #tpu.dot_dimension_numbers<[0], [0], [1], [1], [0, 1, 1, 1], [], []>} : vector<32x16xf32>, vector<32x16xf32>, vector<16x16xf32> -> vector<16x16xf32>
    %526 = arith.addf %521, %525 : vector<16x16xf32>
    %527 = arith.addf %526, %5 : vector<16x16xf32>
    %c66_107 = arith.constant 66 : index
    %c0_108 = arith.constant 0 : index
    %528 = vector.load %arg2[%c66_107, %c0_108] : memref<72x128xf32, #tpu.memory_space<vmem>>, vector<1x16xf32>
    %c67_109 = arith.constant 67 : index
    %c0_110 = arith.constant 0 : index
    %529 = vector.load %arg2[%c67_109, %c0_110] : memref<72x128xf32, #tpu.memory_space<vmem>>, vector<1x4xf32>
    %c68_111 = arith.constant 68 : index
    %c0_112 = arith.constant 0 : index
    %530 = vector.load %arg2[%c68_111, %c0_112] : memref<72x128xf32, #tpu.memory_space<vmem>>, vector<1x4xf32>
    %cst_113 = arith.constant 0.000000e+00 : f32
    %531 = vector.broadcast %cst_113 : f32 to vector<16x1xf32>
    %532 = vector.extract_strided_slice %527 {offsets = [0, 0], sizes = [1, 1], strides = [1, 1]} : vector<16x16xf32> to vector<1x1xf32>
    %cst_114 = arith.constant 9.99999996E-13 : f32
    %533 = vector.broadcast %cst_114 : f32 to vector<1x1xf32>
    %534 = arith.maximumf %532, %533 : vector<1x1xf32>
    %535 = math.rsqrt %534 : vector<1x1xf32>
    %c0_i32_115 = arith.constant 0 : i32
    %536 = vector.broadcast %c0_i32_115 : i32 to vector<16x1xi32>
    %537 = arith.cmpi sge, %6, %536 : vector<16x1xi32>
    %538 = vector.extract_strided_slice %527 {offsets = [0, 0], sizes = [16, 1], strides = [1, 1]} : vector<16x16xf32> to vector<16x1xf32>
    %539 = vector.broadcast %535 : vector<1x1xf32> to vector<16x1xf32>
    %540 = arith.mulf %538, %539 : vector<16x1xf32>
    %cst_116 = arith.constant 0.000000e+00 : f32
    %541 = vector.broadcast %cst_116 : f32 to vector<16x1xf32>
    %542 = arith.select %537, %540, %541 : vector<16x1xi1>, vector<16x1xf32>
    %543 = vector.extract_strided_slice %528 {offsets = [0, 0], sizes = [1, 1], strides = [1, 1]} : vector<1x16xf32> to vector<1x1xf32>
    %544 = vector.broadcast %543 : vector<1x1xf32> to vector<16x1xf32>
    %545 = arith.mulf %542, %544 : vector<16x1xf32>
    %546 = arith.addf %531, %545 : vector<16x1xf32>
    %c0_i32_117 = arith.constant 0 : i32
    %547 = vector.broadcast %c0_i32_117 : i32 to vector<1x16xi32>
    %548 = arith.cmpi sgt, %7, %547 : vector<1x16xi32>
    %549 = vector.extract_strided_slice %527 {offsets = [0, 0], sizes = [1, 16], strides = [1, 1]} : vector<16x16xf32> to vector<1x16xf32>
    %550 = vector.broadcast %535 : vector<1x1xf32> to vector<1x16xf32>
    %551 = arith.mulf %549, %550 : vector<1x16xf32>
    %cst_118 = arith.constant 0.000000e+00 : f32
    %552 = vector.broadcast %cst_118 : f32 to vector<1x16xf32>
    %553 = arith.select %548, %551, %552 : vector<1x16xi1>, vector<1x16xf32>
    %554 = vector.broadcast %542 : vector<16x1xf32> to vector<16x16xf32>
    %555 = vector.broadcast %553 : vector<1x16xf32> to vector<16x16xf32>
    %556 = arith.mulf %554, %555 : vector<16x16xf32>
    %557 = arith.subf %527, %556 : vector<16x16xf32>
    %558 = vector.extract_strided_slice %557 {offsets = [1, 1], sizes = [1, 1], strides = [1, 1]} : vector<16x16xf32> to vector<1x1xf32>
    %cst_119 = arith.constant 9.99999996E-13 : f32
    %559 = vector.broadcast %cst_119 : f32 to vector<1x1xf32>
    %560 = arith.maximumf %558, %559 : vector<1x1xf32>
    %561 = math.rsqrt %560 : vector<1x1xf32>
    %c1_i32_120 = arith.constant 1 : i32
    %562 = vector.broadcast %c1_i32_120 : i32 to vector<16x1xi32>
    %563 = arith.cmpi sge, %6, %562 : vector<16x1xi32>
    %564 = vector.extract_strided_slice %557 {offsets = [0, 1], sizes = [16, 1], strides = [1, 1]} : vector<16x16xf32> to vector<16x1xf32>
    %565 = vector.broadcast %561 : vector<1x1xf32> to vector<16x1xf32>
    %566 = arith.mulf %564, %565 : vector<16x1xf32>
    %cst_121 = arith.constant 0.000000e+00 : f32
    %567 = vector.broadcast %cst_121 : f32 to vector<16x1xf32>
    %568 = arith.select %563, %566, %567 : vector<16x1xi1>, vector<16x1xf32>
    %569 = vector.extract_strided_slice %528 {offsets = [0, 1], sizes = [1, 1], strides = [1, 1]} : vector<1x16xf32> to vector<1x1xf32>
    %570 = vector.broadcast %569 : vector<1x1xf32> to vector<16x1xf32>
    %571 = arith.mulf %568, %570 : vector<16x1xf32>
    %572 = arith.addf %546, %571 : vector<16x1xf32>
    %c1_i32_122 = arith.constant 1 : i32
    %573 = vector.broadcast %c1_i32_122 : i32 to vector<1x16xi32>
    %574 = arith.cmpi sgt, %7, %573 : vector<1x16xi32>
    %575 = vector.extract_strided_slice %557 {offsets = [1, 0], sizes = [1, 16], strides = [1, 1]} : vector<16x16xf32> to vector<1x16xf32>
    %576 = vector.broadcast %561 : vector<1x1xf32> to vector<1x16xf32>
    %577 = arith.mulf %575, %576 : vector<1x16xf32>
    %cst_123 = arith.constant 0.000000e+00 : f32
    %578 = vector.broadcast %cst_123 : f32 to vector<1x16xf32>
    %579 = arith.select %574, %577, %578 : vector<1x16xi1>, vector<1x16xf32>
    %580 = vector.broadcast %568 : vector<16x1xf32> to vector<16x16xf32>
    %581 = vector.broadcast %579 : vector<1x16xf32> to vector<16x16xf32>
    %582 = arith.mulf %580, %581 : vector<16x16xf32>
    %583 = arith.subf %557, %582 : vector<16x16xf32>
    %584 = vector.extract_strided_slice %583 {offsets = [2, 2], sizes = [1, 1], strides = [1, 1]} : vector<16x16xf32> to vector<1x1xf32>
    %cst_124 = arith.constant 9.99999996E-13 : f32
    %585 = vector.broadcast %cst_124 : f32 to vector<1x1xf32>
    %586 = arith.maximumf %584, %585 : vector<1x1xf32>
    %587 = math.rsqrt %586 : vector<1x1xf32>
    %c2_i32_125 = arith.constant 2 : i32
    %588 = vector.broadcast %c2_i32_125 : i32 to vector<16x1xi32>
    %589 = arith.cmpi sge, %6, %588 : vector<16x1xi32>
    %590 = vector.extract_strided_slice %583 {offsets = [0, 2], sizes = [16, 1], strides = [1, 1]} : vector<16x16xf32> to vector<16x1xf32>
    %591 = vector.broadcast %587 : vector<1x1xf32> to vector<16x1xf32>
    %592 = arith.mulf %590, %591 : vector<16x1xf32>
    %cst_126 = arith.constant 0.000000e+00 : f32
    %593 = vector.broadcast %cst_126 : f32 to vector<16x1xf32>
    %594 = arith.select %589, %592, %593 : vector<16x1xi1>, vector<16x1xf32>
    %595 = vector.extract_strided_slice %528 {offsets = [0, 2], sizes = [1, 1], strides = [1, 1]} : vector<1x16xf32> to vector<1x1xf32>
    %596 = vector.broadcast %595 : vector<1x1xf32> to vector<16x1xf32>
    %597 = arith.mulf %594, %596 : vector<16x1xf32>
    %598 = arith.addf %572, %597 : vector<16x1xf32>
    %c2_i32_127 = arith.constant 2 : i32
    %599 = vector.broadcast %c2_i32_127 : i32 to vector<1x16xi32>
    %600 = arith.cmpi sgt, %7, %599 : vector<1x16xi32>
    %601 = vector.extract_strided_slice %583 {offsets = [2, 0], sizes = [1, 16], strides = [1, 1]} : vector<16x16xf32> to vector<1x16xf32>
    %602 = vector.broadcast %587 : vector<1x1xf32> to vector<1x16xf32>
    %603 = arith.mulf %601, %602 : vector<1x16xf32>
    %cst_128 = arith.constant 0.000000e+00 : f32
    %604 = vector.broadcast %cst_128 : f32 to vector<1x16xf32>
    %605 = arith.select %600, %603, %604 : vector<1x16xi1>, vector<1x16xf32>
    %606 = vector.broadcast %594 : vector<16x1xf32> to vector<16x16xf32>
    %607 = vector.broadcast %605 : vector<1x16xf32> to vector<16x16xf32>
    %608 = arith.mulf %606, %607 : vector<16x16xf32>
    %609 = arith.subf %583, %608 : vector<16x16xf32>
    %610 = vector.extract_strided_slice %609 {offsets = [3, 3], sizes = [1, 1], strides = [1, 1]} : vector<16x16xf32> to vector<1x1xf32>
    %cst_129 = arith.constant 9.99999996E-13 : f32
    %611 = vector.broadcast %cst_129 : f32 to vector<1x1xf32>
    %612 = arith.maximumf %610, %611 : vector<1x1xf32>
    %613 = math.rsqrt %612 : vector<1x1xf32>
    %c3_i32_130 = arith.constant 3 : i32
    %614 = vector.broadcast %c3_i32_130 : i32 to vector<16x1xi32>
    %615 = arith.cmpi sge, %6, %614 : vector<16x1xi32>
    %616 = vector.extract_strided_slice %609 {offsets = [0, 3], sizes = [16, 1], strides = [1, 1]} : vector<16x16xf32> to vector<16x1xf32>
    %617 = vector.broadcast %613 : vector<1x1xf32> to vector<16x1xf32>
    %618 = arith.mulf %616, %617 : vector<16x1xf32>
    %cst_131 = arith.constant 0.000000e+00 : f32
    %619 = vector.broadcast %cst_131 : f32 to vector<16x1xf32>
    %620 = arith.select %615, %618, %619 : vector<16x1xi1>, vector<16x1xf32>
    %621 = vector.extract_strided_slice %528 {offsets = [0, 3], sizes = [1, 1], strides = [1, 1]} : vector<1x16xf32> to vector<1x1xf32>
    %622 = vector.broadcast %621 : vector<1x1xf32> to vector<16x1xf32>
    %623 = arith.mulf %620, %622 : vector<16x1xf32>
    %624 = arith.addf %598, %623 : vector<16x1xf32>
    %c3_i32_132 = arith.constant 3 : i32
    %625 = vector.broadcast %c3_i32_132 : i32 to vector<1x16xi32>
    %626 = arith.cmpi sgt, %7, %625 : vector<1x16xi32>
    %627 = vector.extract_strided_slice %609 {offsets = [3, 0], sizes = [1, 16], strides = [1, 1]} : vector<16x16xf32> to vector<1x16xf32>
    %628 = vector.broadcast %613 : vector<1x1xf32> to vector<1x16xf32>
    %629 = arith.mulf %627, %628 : vector<1x16xf32>
    %cst_133 = arith.constant 0.000000e+00 : f32
    %630 = vector.broadcast %cst_133 : f32 to vector<1x16xf32>
    %631 = arith.select %626, %629, %630 : vector<1x16xi1>, vector<1x16xf32>
    %632 = vector.broadcast %620 : vector<16x1xf32> to vector<16x16xf32>
    %633 = vector.broadcast %631 : vector<1x16xf32> to vector<16x16xf32>
    %634 = arith.mulf %632, %633 : vector<16x16xf32>
    %635 = arith.subf %609, %634 : vector<16x16xf32>
    %636 = vector.extract_strided_slice %635 {offsets = [4, 4], sizes = [1, 1], strides = [1, 1]} : vector<16x16xf32> to vector<1x1xf32>
    %cst_134 = arith.constant 9.99999996E-13 : f32
    %637 = vector.broadcast %cst_134 : f32 to vector<1x1xf32>
    %638 = arith.maximumf %636, %637 : vector<1x1xf32>
    %639 = math.rsqrt %638 : vector<1x1xf32>
    %c4_i32_135 = arith.constant 4 : i32
    %640 = vector.broadcast %c4_i32_135 : i32 to vector<16x1xi32>
    %641 = arith.cmpi sge, %6, %640 : vector<16x1xi32>
    %642 = vector.extract_strided_slice %635 {offsets = [0, 4], sizes = [16, 1], strides = [1, 1]} : vector<16x16xf32> to vector<16x1xf32>
    %643 = vector.broadcast %639 : vector<1x1xf32> to vector<16x1xf32>
    %644 = arith.mulf %642, %643 : vector<16x1xf32>
    %cst_136 = arith.constant 0.000000e+00 : f32
    %645 = vector.broadcast %cst_136 : f32 to vector<16x1xf32>
    %646 = arith.select %641, %644, %645 : vector<16x1xi1>, vector<16x1xf32>
    %647 = vector.extract_strided_slice %528 {offsets = [0, 4], sizes = [1, 1], strides = [1, 1]} : vector<1x16xf32> to vector<1x1xf32>
    %648 = vector.broadcast %647 : vector<1x1xf32> to vector<16x1xf32>
    %649 = arith.mulf %646, %648 : vector<16x1xf32>
    %650 = arith.addf %624, %649 : vector<16x1xf32>
    %c4_i32_137 = arith.constant 4 : i32
    %651 = vector.broadcast %c4_i32_137 : i32 to vector<1x16xi32>
    %652 = arith.cmpi sgt, %7, %651 : vector<1x16xi32>
    %653 = vector.extract_strided_slice %635 {offsets = [4, 0], sizes = [1, 16], strides = [1, 1]} : vector<16x16xf32> to vector<1x16xf32>
    %654 = vector.broadcast %639 : vector<1x1xf32> to vector<1x16xf32>
    %655 = arith.mulf %653, %654 : vector<1x16xf32>
    %cst_138 = arith.constant 0.000000e+00 : f32
    %656 = vector.broadcast %cst_138 : f32 to vector<1x16xf32>
    %657 = arith.select %652, %655, %656 : vector<1x16xi1>, vector<1x16xf32>
    %658 = vector.broadcast %646 : vector<16x1xf32> to vector<16x16xf32>
    %659 = vector.broadcast %657 : vector<1x16xf32> to vector<16x16xf32>
    %660 = arith.mulf %658, %659 : vector<16x16xf32>
    %661 = arith.subf %635, %660 : vector<16x16xf32>
    %662 = vector.extract_strided_slice %661 {offsets = [5, 5], sizes = [1, 1], strides = [1, 1]} : vector<16x16xf32> to vector<1x1xf32>
    %cst_139 = arith.constant 9.99999996E-13 : f32
    %663 = vector.broadcast %cst_139 : f32 to vector<1x1xf32>
    %664 = arith.maximumf %662, %663 : vector<1x1xf32>
    %665 = math.rsqrt %664 : vector<1x1xf32>
    %c5_i32_140 = arith.constant 5 : i32
    %666 = vector.broadcast %c5_i32_140 : i32 to vector<16x1xi32>
    %667 = arith.cmpi sge, %6, %666 : vector<16x1xi32>
    %668 = vector.extract_strided_slice %661 {offsets = [0, 5], sizes = [16, 1], strides = [1, 1]} : vector<16x16xf32> to vector<16x1xf32>
    %669 = vector.broadcast %665 : vector<1x1xf32> to vector<16x1xf32>
    %670 = arith.mulf %668, %669 : vector<16x1xf32>
    %cst_141 = arith.constant 0.000000e+00 : f32
    %671 = vector.broadcast %cst_141 : f32 to vector<16x1xf32>
    %672 = arith.select %667, %670, %671 : vector<16x1xi1>, vector<16x1xf32>
    %673 = vector.extract_strided_slice %528 {offsets = [0, 5], sizes = [1, 1], strides = [1, 1]} : vector<1x16xf32> to vector<1x1xf32>
    %674 = vector.broadcast %673 : vector<1x1xf32> to vector<16x1xf32>
    %675 = arith.mulf %672, %674 : vector<16x1xf32>
    %676 = arith.addf %650, %675 : vector<16x1xf32>
    %c5_i32_142 = arith.constant 5 : i32
    %677 = vector.broadcast %c5_i32_142 : i32 to vector<1x16xi32>
    %678 = arith.cmpi sgt, %7, %677 : vector<1x16xi32>
    %679 = vector.extract_strided_slice %661 {offsets = [5, 0], sizes = [1, 16], strides = [1, 1]} : vector<16x16xf32> to vector<1x16xf32>
    %680 = vector.broadcast %665 : vector<1x1xf32> to vector<1x16xf32>
    %681 = arith.mulf %679, %680 : vector<1x16xf32>
    %cst_143 = arith.constant 0.000000e+00 : f32
    %682 = vector.broadcast %cst_143 : f32 to vector<1x16xf32>
    %683 = arith.select %678, %681, %682 : vector<1x16xi1>, vector<1x16xf32>
    %684 = vector.broadcast %672 : vector<16x1xf32> to vector<16x16xf32>
    %685 = vector.broadcast %683 : vector<1x16xf32> to vector<16x16xf32>
    %686 = arith.mulf %684, %685 : vector<16x16xf32>
    %687 = arith.subf %661, %686 : vector<16x16xf32>
    %688 = vector.extract_strided_slice %687 {offsets = [6, 6], sizes = [1, 1], strides = [1, 1]} : vector<16x16xf32> to vector<1x1xf32>
    %cst_144 = arith.constant 9.99999996E-13 : f32
    %689 = vector.broadcast %cst_144 : f32 to vector<1x1xf32>
    %690 = arith.maximumf %688, %689 : vector<1x1xf32>
    %691 = math.rsqrt %690 : vector<1x1xf32>
    %c6_i32_145 = arith.constant 6 : i32
    %692 = vector.broadcast %c6_i32_145 : i32 to vector<16x1xi32>
    %693 = arith.cmpi sge, %6, %692 : vector<16x1xi32>
    %694 = vector.extract_strided_slice %687 {offsets = [0, 6], sizes = [16, 1], strides = [1, 1]} : vector<16x16xf32> to vector<16x1xf32>
    %695 = vector.broadcast %691 : vector<1x1xf32> to vector<16x1xf32>
    %696 = arith.mulf %694, %695 : vector<16x1xf32>
    %cst_146 = arith.constant 0.000000e+00 : f32
    %697 = vector.broadcast %cst_146 : f32 to vector<16x1xf32>
    %698 = arith.select %693, %696, %697 : vector<16x1xi1>, vector<16x1xf32>
    %699 = vector.extract_strided_slice %528 {offsets = [0, 6], sizes = [1, 1], strides = [1, 1]} : vector<1x16xf32> to vector<1x1xf32>
    %700 = vector.broadcast %699 : vector<1x1xf32> to vector<16x1xf32>
    %701 = arith.mulf %698, %700 : vector<16x1xf32>
    %702 = arith.addf %676, %701 : vector<16x1xf32>
    %c6_i32_147 = arith.constant 6 : i32
    %703 = vector.broadcast %c6_i32_147 : i32 to vector<1x16xi32>
    %704 = arith.cmpi sgt, %7, %703 : vector<1x16xi32>
    %705 = vector.extract_strided_slice %687 {offsets = [6, 0], sizes = [1, 16], strides = [1, 1]} : vector<16x16xf32> to vector<1x16xf32>
    %706 = vector.broadcast %691 : vector<1x1xf32> to vector<1x16xf32>
    %707 = arith.mulf %705, %706 : vector<1x16xf32>
    %cst_148 = arith.constant 0.000000e+00 : f32
    %708 = vector.broadcast %cst_148 : f32 to vector<1x16xf32>
    %709 = arith.select %704, %707, %708 : vector<1x16xi1>, vector<1x16xf32>
    %710 = vector.broadcast %698 : vector<16x1xf32> to vector<16x16xf32>
    %711 = vector.broadcast %709 : vector<1x16xf32> to vector<16x16xf32>
    %712 = arith.mulf %710, %711 : vector<16x16xf32>
    %713 = arith.subf %687, %712 : vector<16x16xf32>
    %714 = vector.extract_strided_slice %713 {offsets = [7, 7], sizes = [1, 1], strides = [1, 1]} : vector<16x16xf32> to vector<1x1xf32>
    %cst_149 = arith.constant 9.99999996E-13 : f32
    %715 = vector.broadcast %cst_149 : f32 to vector<1x1xf32>
    %716 = arith.maximumf %714, %715 : vector<1x1xf32>
    %717 = math.rsqrt %716 : vector<1x1xf32>
    %c7_i32_150 = arith.constant 7 : i32
    %718 = vector.broadcast %c7_i32_150 : i32 to vector<16x1xi32>
    %719 = arith.cmpi sge, %6, %718 : vector<16x1xi32>
    %720 = vector.extract_strided_slice %713 {offsets = [0, 7], sizes = [16, 1], strides = [1, 1]} : vector<16x16xf32> to vector<16x1xf32>
    %721 = vector.broadcast %717 : vector<1x1xf32> to vector<16x1xf32>
    %722 = arith.mulf %720, %721 : vector<16x1xf32>
    %cst_151 = arith.constant 0.000000e+00 : f32
    %723 = vector.broadcast %cst_151 : f32 to vector<16x1xf32>
    %724 = arith.select %719, %722, %723 : vector<16x1xi1>, vector<16x1xf32>
    %725 = vector.extract_strided_slice %528 {offsets = [0, 7], sizes = [1, 1], strides = [1, 1]} : vector<1x16xf32> to vector<1x1xf32>
    %726 = vector.broadcast %725 : vector<1x1xf32> to vector<16x1xf32>
    %727 = arith.mulf %724, %726 : vector<16x1xf32>
    %728 = arith.addf %702, %727 : vector<16x1xf32>
    %c7_i32_152 = arith.constant 7 : i32
    %729 = vector.broadcast %c7_i32_152 : i32 to vector<1x16xi32>
    %730 = arith.cmpi sgt, %7, %729 : vector<1x16xi32>
    %731 = vector.extract_strided_slice %713 {offsets = [7, 0], sizes = [1, 16], strides = [1, 1]} : vector<16x16xf32> to vector<1x16xf32>
    %732 = vector.broadcast %717 : vector<1x1xf32> to vector<1x16xf32>
    %733 = arith.mulf %731, %732 : vector<1x16xf32>
    %cst_153 = arith.constant 0.000000e+00 : f32
    %734 = vector.broadcast %cst_153 : f32 to vector<1x16xf32>
    %735 = arith.select %730, %733, %734 : vector<1x16xi1>, vector<1x16xf32>
    %736 = vector.broadcast %724 : vector<16x1xf32> to vector<16x16xf32>
    %737 = vector.broadcast %735 : vector<1x16xf32> to vector<16x16xf32>
    %738 = arith.mulf %736, %737 : vector<16x16xf32>
    %739 = arith.subf %713, %738 : vector<16x16xf32>
    %740 = vector.extract_strided_slice %739 {offsets = [8, 8], sizes = [1, 1], strides = [1, 1]} : vector<16x16xf32> to vector<1x1xf32>
    %cst_154 = arith.constant 9.99999996E-13 : f32
    %741 = vector.broadcast %cst_154 : f32 to vector<1x1xf32>
    %742 = arith.maximumf %740, %741 : vector<1x1xf32>
    %743 = math.rsqrt %742 : vector<1x1xf32>
    %c8_i32_155 = arith.constant 8 : i32
    %744 = vector.broadcast %c8_i32_155 : i32 to vector<16x1xi32>
    %745 = arith.cmpi sge, %6, %744 : vector<16x1xi32>
    %746 = vector.extract_strided_slice %739 {offsets = [0, 8], sizes = [16, 1], strides = [1, 1]} : vector<16x16xf32> to vector<16x1xf32>
    %747 = vector.broadcast %743 : vector<1x1xf32> to vector<16x1xf32>
    %748 = arith.mulf %746, %747 : vector<16x1xf32>
    %cst_156 = arith.constant 0.000000e+00 : f32
    %749 = vector.broadcast %cst_156 : f32 to vector<16x1xf32>
    %750 = arith.select %745, %748, %749 : vector<16x1xi1>, vector<16x1xf32>
    %751 = vector.extract_strided_slice %528 {offsets = [0, 8], sizes = [1, 1], strides = [1, 1]} : vector<1x16xf32> to vector<1x1xf32>
    %752 = vector.broadcast %751 : vector<1x1xf32> to vector<16x1xf32>
    %753 = arith.mulf %750, %752 : vector<16x1xf32>
    %754 = arith.addf %728, %753 : vector<16x1xf32>
    %c8_i32_157 = arith.constant 8 : i32
    %755 = vector.broadcast %c8_i32_157 : i32 to vector<1x16xi32>
    %756 = arith.cmpi sgt, %7, %755 : vector<1x16xi32>
    %757 = vector.extract_strided_slice %739 {offsets = [8, 0], sizes = [1, 16], strides = [1, 1]} : vector<16x16xf32> to vector<1x16xf32>
    %758 = vector.broadcast %743 : vector<1x1xf32> to vector<1x16xf32>
    %759 = arith.mulf %757, %758 : vector<1x16xf32>
    %cst_158 = arith.constant 0.000000e+00 : f32
    %760 = vector.broadcast %cst_158 : f32 to vector<1x16xf32>
    %761 = arith.select %756, %759, %760 : vector<1x16xi1>, vector<1x16xf32>
    %762 = vector.broadcast %750 : vector<16x1xf32> to vector<16x16xf32>
    %763 = vector.broadcast %761 : vector<1x16xf32> to vector<16x16xf32>
    %764 = arith.mulf %762, %763 : vector<16x16xf32>
    %765 = arith.subf %739, %764 : vector<16x16xf32>
    %766 = vector.extract_strided_slice %765 {offsets = [9, 9], sizes = [1, 1], strides = [1, 1]} : vector<16x16xf32> to vector<1x1xf32>
    %cst_159 = arith.constant 9.99999996E-13 : f32
    %767 = vector.broadcast %cst_159 : f32 to vector<1x1xf32>
    %768 = arith.maximumf %766, %767 : vector<1x1xf32>
    %769 = math.rsqrt %768 : vector<1x1xf32>
    %c9_i32_160 = arith.constant 9 : i32
    %770 = vector.broadcast %c9_i32_160 : i32 to vector<16x1xi32>
    %771 = arith.cmpi sge, %6, %770 : vector<16x1xi32>
    %772 = vector.extract_strided_slice %765 {offsets = [0, 9], sizes = [16, 1], strides = [1, 1]} : vector<16x16xf32> to vector<16x1xf32>
    %773 = vector.broadcast %769 : vector<1x1xf32> to vector<16x1xf32>
    %774 = arith.mulf %772, %773 : vector<16x1xf32>
    %cst_161 = arith.constant 0.000000e+00 : f32
    %775 = vector.broadcast %cst_161 : f32 to vector<16x1xf32>
    %776 = arith.select %771, %774, %775 : vector<16x1xi1>, vector<16x1xf32>
    %777 = vector.extract_strided_slice %528 {offsets = [0, 9], sizes = [1, 1], strides = [1, 1]} : vector<1x16xf32> to vector<1x1xf32>
    %778 = vector.broadcast %777 : vector<1x1xf32> to vector<16x1xf32>
    %779 = arith.mulf %776, %778 : vector<16x1xf32>
    %780 = arith.addf %754, %779 : vector<16x1xf32>
    %c9_i32_162 = arith.constant 9 : i32
    %781 = vector.broadcast %c9_i32_162 : i32 to vector<1x16xi32>
    %782 = arith.cmpi sgt, %7, %781 : vector<1x16xi32>
    %783 = vector.extract_strided_slice %765 {offsets = [9, 0], sizes = [1, 16], strides = [1, 1]} : vector<16x16xf32> to vector<1x16xf32>
    %784 = vector.broadcast %769 : vector<1x1xf32> to vector<1x16xf32>
    %785 = arith.mulf %783, %784 : vector<1x16xf32>
    %cst_163 = arith.constant 0.000000e+00 : f32
    %786 = vector.broadcast %cst_163 : f32 to vector<1x16xf32>
    %787 = arith.select %782, %785, %786 : vector<1x16xi1>, vector<1x16xf32>
    %788 = vector.broadcast %776 : vector<16x1xf32> to vector<16x16xf32>
    %789 = vector.broadcast %787 : vector<1x16xf32> to vector<16x16xf32>
    %790 = arith.mulf %788, %789 : vector<16x16xf32>
    %791 = arith.subf %765, %790 : vector<16x16xf32>
    %792 = vector.extract_strided_slice %791 {offsets = [10, 10], sizes = [1, 1], strides = [1, 1]} : vector<16x16xf32> to vector<1x1xf32>
    %cst_164 = arith.constant 9.99999996E-13 : f32
    %793 = vector.broadcast %cst_164 : f32 to vector<1x1xf32>
    %794 = arith.maximumf %792, %793 : vector<1x1xf32>
    %795 = math.rsqrt %794 : vector<1x1xf32>
    %c10_i32_165 = arith.constant 10 : i32
    %796 = vector.broadcast %c10_i32_165 : i32 to vector<16x1xi32>
    %797 = arith.cmpi sge, %6, %796 : vector<16x1xi32>
    %798 = vector.extract_strided_slice %791 {offsets = [0, 10], sizes = [16, 1], strides = [1, 1]} : vector<16x16xf32> to vector<16x1xf32>
    %799 = vector.broadcast %795 : vector<1x1xf32> to vector<16x1xf32>
    %800 = arith.mulf %798, %799 : vector<16x1xf32>
    %cst_166 = arith.constant 0.000000e+00 : f32
    %801 = vector.broadcast %cst_166 : f32 to vector<16x1xf32>
    %802 = arith.select %797, %800, %801 : vector<16x1xi1>, vector<16x1xf32>
    %803 = vector.extract_strided_slice %528 {offsets = [0, 10], sizes = [1, 1], strides = [1, 1]} : vector<1x16xf32> to vector<1x1xf32>
    %804 = vector.broadcast %803 : vector<1x1xf32> to vector<16x1xf32>
    %805 = arith.mulf %802, %804 : vector<16x1xf32>
    %806 = arith.addf %780, %805 : vector<16x1xf32>
    %c10_i32_167 = arith.constant 10 : i32
    %807 = vector.broadcast %c10_i32_167 : i32 to vector<1x16xi32>
    %808 = arith.cmpi sgt, %7, %807 : vector<1x16xi32>
    %809 = vector.extract_strided_slice %791 {offsets = [10, 0], sizes = [1, 16], strides = [1, 1]} : vector<16x16xf32> to vector<1x16xf32>
    %810 = vector.broadcast %795 : vector<1x1xf32> to vector<1x16xf32>
    %811 = arith.mulf %809, %810 : vector<1x16xf32>
    %cst_168 = arith.constant 0.000000e+00 : f32
    %812 = vector.broadcast %cst_168 : f32 to vector<1x16xf32>
    %813 = arith.select %808, %811, %812 : vector<1x16xi1>, vector<1x16xf32>
    %814 = vector.broadcast %802 : vector<16x1xf32> to vector<16x16xf32>
    %815 = vector.broadcast %813 : vector<1x16xf32> to vector<16x16xf32>
    %816 = arith.mulf %814, %815 : vector<16x16xf32>
    %817 = arith.subf %791, %816 : vector<16x16xf32>
    %818 = vector.extract_strided_slice %817 {offsets = [11, 11], sizes = [1, 1], strides = [1, 1]} : vector<16x16xf32> to vector<1x1xf32>
    %cst_169 = arith.constant 9.99999996E-13 : f32
    %819 = vector.broadcast %cst_169 : f32 to vector<1x1xf32>
    %820 = arith.maximumf %818, %819 : vector<1x1xf32>
    %821 = math.rsqrt %820 : vector<1x1xf32>
    %c11_i32_170 = arith.constant 11 : i32
    %822 = vector.broadcast %c11_i32_170 : i32 to vector<16x1xi32>
    %823 = arith.cmpi sge, %6, %822 : vector<16x1xi32>
    %824 = vector.extract_strided_slice %817 {offsets = [0, 11], sizes = [16, 1], strides = [1, 1]} : vector<16x16xf32> to vector<16x1xf32>
    %825 = vector.broadcast %821 : vector<1x1xf32> to vector<16x1xf32>
    %826 = arith.mulf %824, %825 : vector<16x1xf32>
    %cst_171 = arith.constant 0.000000e+00 : f32
    %827 = vector.broadcast %cst_171 : f32 to vector<16x1xf32>
    %828 = arith.select %823, %826, %827 : vector<16x1xi1>, vector<16x1xf32>
    %829 = vector.extract_strided_slice %528 {offsets = [0, 11], sizes = [1, 1], strides = [1, 1]} : vector<1x16xf32> to vector<1x1xf32>
    %830 = vector.broadcast %829 : vector<1x1xf32> to vector<16x1xf32>
    %831 = arith.mulf %828, %830 : vector<16x1xf32>
    %832 = arith.addf %806, %831 : vector<16x1xf32>
    %c11_i32_172 = arith.constant 11 : i32
    %833 = vector.broadcast %c11_i32_172 : i32 to vector<1x16xi32>
    %834 = arith.cmpi sgt, %7, %833 : vector<1x16xi32>
    %835 = vector.extract_strided_slice %817 {offsets = [11, 0], sizes = [1, 16], strides = [1, 1]} : vector<16x16xf32> to vector<1x16xf32>
    %836 = vector.broadcast %821 : vector<1x1xf32> to vector<1x16xf32>
    %837 = arith.mulf %835, %836 : vector<1x16xf32>
    %cst_173 = arith.constant 0.000000e+00 : f32
    %838 = vector.broadcast %cst_173 : f32 to vector<1x16xf32>
    %839 = arith.select %834, %837, %838 : vector<1x16xi1>, vector<1x16xf32>
    %840 = vector.broadcast %828 : vector<16x1xf32> to vector<16x16xf32>
    %841 = vector.broadcast %839 : vector<1x16xf32> to vector<16x16xf32>
    %842 = arith.mulf %840, %841 : vector<16x16xf32>
    %843 = arith.subf %817, %842 : vector<16x16xf32>
    %844 = vector.extract_strided_slice %843 {offsets = [12, 12], sizes = [1, 1], strides = [1, 1]} : vector<16x16xf32> to vector<1x1xf32>
    %cst_174 = arith.constant 9.99999996E-13 : f32
    %845 = vector.broadcast %cst_174 : f32 to vector<1x1xf32>
    %846 = arith.maximumf %844, %845 : vector<1x1xf32>
    %847 = math.rsqrt %846 : vector<1x1xf32>
    %c12_i32_175 = arith.constant 12 : i32
    %848 = vector.broadcast %c12_i32_175 : i32 to vector<16x1xi32>
    %849 = arith.cmpi sge, %6, %848 : vector<16x1xi32>
    %850 = vector.extract_strided_slice %843 {offsets = [0, 12], sizes = [16, 1], strides = [1, 1]} : vector<16x16xf32> to vector<16x1xf32>
    %851 = vector.broadcast %847 : vector<1x1xf32> to vector<16x1xf32>
    %852 = arith.mulf %850, %851 : vector<16x1xf32>
    %cst_176 = arith.constant 0.000000e+00 : f32
    %853 = vector.broadcast %cst_176 : f32 to vector<16x1xf32>
    %854 = arith.select %849, %852, %853 : vector<16x1xi1>, vector<16x1xf32>
    %855 = vector.extract_strided_slice %528 {offsets = [0, 12], sizes = [1, 1], strides = [1, 1]} : vector<1x16xf32> to vector<1x1xf32>
    %856 = vector.broadcast %855 : vector<1x1xf32> to vector<16x1xf32>
    %857 = arith.mulf %854, %856 : vector<16x1xf32>
    %858 = arith.addf %832, %857 : vector<16x1xf32>
    %c12_i32_177 = arith.constant 12 : i32
    %859 = vector.broadcast %c12_i32_177 : i32 to vector<1x16xi32>
    %860 = arith.cmpi sgt, %7, %859 : vector<1x16xi32>
    %861 = vector.extract_strided_slice %843 {offsets = [12, 0], sizes = [1, 16], strides = [1, 1]} : vector<16x16xf32> to vector<1x16xf32>
    %862 = vector.broadcast %847 : vector<1x1xf32> to vector<1x16xf32>
    %863 = arith.mulf %861, %862 : vector<1x16xf32>
    %cst_178 = arith.constant 0.000000e+00 : f32
    %864 = vector.broadcast %cst_178 : f32 to vector<1x16xf32>
    %865 = arith.select %860, %863, %864 : vector<1x16xi1>, vector<1x16xf32>
    %866 = vector.broadcast %854 : vector<16x1xf32> to vector<16x16xf32>
    %867 = vector.broadcast %865 : vector<1x16xf32> to vector<16x16xf32>
    %868 = arith.mulf %866, %867 : vector<16x16xf32>
    %869 = arith.subf %843, %868 : vector<16x16xf32>
    %870 = vector.extract_strided_slice %869 {offsets = [13, 13], sizes = [1, 1], strides = [1, 1]} : vector<16x16xf32> to vector<1x1xf32>
    %cst_179 = arith.constant 9.99999996E-13 : f32
    %871 = vector.broadcast %cst_179 : f32 to vector<1x1xf32>
    %872 = arith.maximumf %870, %871 : vector<1x1xf32>
    %873 = math.rsqrt %872 : vector<1x1xf32>
    %c13_i32_180 = arith.constant 13 : i32
    %874 = vector.broadcast %c13_i32_180 : i32 to vector<16x1xi32>
    %875 = arith.cmpi sge, %6, %874 : vector<16x1xi32>
    %876 = vector.extract_strided_slice %869 {offsets = [0, 13], sizes = [16, 1], strides = [1, 1]} : vector<16x16xf32> to vector<16x1xf32>
    %877 = vector.broadcast %873 : vector<1x1xf32> to vector<16x1xf32>
    %878 = arith.mulf %876, %877 : vector<16x1xf32>
    %cst_181 = arith.constant 0.000000e+00 : f32
    %879 = vector.broadcast %cst_181 : f32 to vector<16x1xf32>
    %880 = arith.select %875, %878, %879 : vector<16x1xi1>, vector<16x1xf32>
    %881 = vector.extract_strided_slice %528 {offsets = [0, 13], sizes = [1, 1], strides = [1, 1]} : vector<1x16xf32> to vector<1x1xf32>
    %882 = vector.broadcast %881 : vector<1x1xf32> to vector<16x1xf32>
    %883 = arith.mulf %880, %882 : vector<16x1xf32>
    %884 = arith.addf %858, %883 : vector<16x1xf32>
    %c13_i32_182 = arith.constant 13 : i32
    %885 = vector.broadcast %c13_i32_182 : i32 to vector<1x16xi32>
    %886 = arith.cmpi sgt, %7, %885 : vector<1x16xi32>
    %887 = vector.extract_strided_slice %869 {offsets = [13, 0], sizes = [1, 16], strides = [1, 1]} : vector<16x16xf32> to vector<1x16xf32>
    %888 = vector.broadcast %873 : vector<1x1xf32> to vector<1x16xf32>
    %889 = arith.mulf %887, %888 : vector<1x16xf32>
    %cst_183 = arith.constant 0.000000e+00 : f32
    %890 = vector.broadcast %cst_183 : f32 to vector<1x16xf32>
    %891 = arith.select %886, %889, %890 : vector<1x16xi1>, vector<1x16xf32>
    %892 = vector.broadcast %880 : vector<16x1xf32> to vector<16x16xf32>
    %893 = vector.broadcast %891 : vector<1x16xf32> to vector<16x16xf32>
    %894 = arith.mulf %892, %893 : vector<16x16xf32>
    %895 = arith.subf %869, %894 : vector<16x16xf32>
    %896 = vector.extract_strided_slice %895 {offsets = [14, 14], sizes = [1, 1], strides = [1, 1]} : vector<16x16xf32> to vector<1x1xf32>
    %cst_184 = arith.constant 9.99999996E-13 : f32
    %897 = vector.broadcast %cst_184 : f32 to vector<1x1xf32>
    %898 = arith.maximumf %896, %897 : vector<1x1xf32>
    %899 = math.rsqrt %898 : vector<1x1xf32>
    %c14_i32_185 = arith.constant 14 : i32
    %900 = vector.broadcast %c14_i32_185 : i32 to vector<16x1xi32>
    %901 = arith.cmpi sge, %6, %900 : vector<16x1xi32>
    %902 = vector.extract_strided_slice %895 {offsets = [0, 14], sizes = [16, 1], strides = [1, 1]} : vector<16x16xf32> to vector<16x1xf32>
    %903 = vector.broadcast %899 : vector<1x1xf32> to vector<16x1xf32>
    %904 = arith.mulf %902, %903 : vector<16x1xf32>
    %cst_186 = arith.constant 0.000000e+00 : f32
    %905 = vector.broadcast %cst_186 : f32 to vector<16x1xf32>
    %906 = arith.select %901, %904, %905 : vector<16x1xi1>, vector<16x1xf32>
    %907 = vector.extract_strided_slice %528 {offsets = [0, 14], sizes = [1, 1], strides = [1, 1]} : vector<1x16xf32> to vector<1x1xf32>
    %908 = vector.broadcast %907 : vector<1x1xf32> to vector<16x1xf32>
    %909 = arith.mulf %906, %908 : vector<16x1xf32>
    %910 = arith.addf %884, %909 : vector<16x1xf32>
    %c14_i32_187 = arith.constant 14 : i32
    %911 = vector.broadcast %c14_i32_187 : i32 to vector<1x16xi32>
    %912 = arith.cmpi sgt, %7, %911 : vector<1x16xi32>
    %913 = vector.extract_strided_slice %895 {offsets = [14, 0], sizes = [1, 16], strides = [1, 1]} : vector<16x16xf32> to vector<1x16xf32>
    %914 = vector.broadcast %899 : vector<1x1xf32> to vector<1x16xf32>
    %915 = arith.mulf %913, %914 : vector<1x16xf32>
    %cst_188 = arith.constant 0.000000e+00 : f32
    %916 = vector.broadcast %cst_188 : f32 to vector<1x16xf32>
    %917 = arith.select %912, %915, %916 : vector<1x16xi1>, vector<1x16xf32>
    %918 = vector.broadcast %906 : vector<16x1xf32> to vector<16x16xf32>
    %919 = vector.broadcast %917 : vector<1x16xf32> to vector<16x16xf32>
    %920 = arith.mulf %918, %919 : vector<16x16xf32>
    %921 = arith.subf %895, %920 : vector<16x16xf32>
    %922 = vector.extract_strided_slice %921 {offsets = [15, 15], sizes = [1, 1], strides = [1, 1]} : vector<16x16xf32> to vector<1x1xf32>
    %cst_189 = arith.constant 9.99999996E-13 : f32
    %923 = vector.broadcast %cst_189 : f32 to vector<1x1xf32>
    %924 = arith.maximumf %922, %923 : vector<1x1xf32>
    %925 = math.rsqrt %924 : vector<1x1xf32>
    %c15_i32_190 = arith.constant 15 : i32
    %926 = vector.broadcast %c15_i32_190 : i32 to vector<16x1xi32>
    %927 = arith.cmpi sge, %6, %926 : vector<16x1xi32>
    %928 = vector.extract_strided_slice %921 {offsets = [0, 15], sizes = [16, 1], strides = [1, 1]} : vector<16x16xf32> to vector<16x1xf32>
    %929 = vector.broadcast %925 : vector<1x1xf32> to vector<16x1xf32>
    %930 = arith.mulf %928, %929 : vector<16x1xf32>
    %cst_191 = arith.constant 0.000000e+00 : f32
    %931 = vector.broadcast %cst_191 : f32 to vector<16x1xf32>
    %932 = arith.select %927, %930, %931 : vector<16x1xi1>, vector<16x1xf32>
    %933 = vector.extract_strided_slice %528 {offsets = [0, 15], sizes = [1, 1], strides = [1, 1]} : vector<1x16xf32> to vector<1x1xf32>
    %934 = vector.broadcast %933 : vector<1x1xf32> to vector<16x1xf32>
    %935 = arith.mulf %932, %934 : vector<16x1xf32>
    %936 = arith.addf %910, %935 : vector<16x1xf32>
    %cst_192 = arith.constant 0.000000e+00 : f32
    %937 = vector.shape_cast %524 : vector<1x16xf32> to vector<1x16xf32>
    %938 = vector.broadcast %937 : vector<1x16xf32> to vector<16x16xf32>
    %939 = vector.broadcast %cst_192 : f32 to vector<16x16xf32>
    %940 = arith.select %2, %938, %939 : vector<16x16xi1>, vector<16x16xf32>
    %cst_193 = arith.constant dense<0.000000e+00> : vector<16xf32>
    %941 = vector.multi_reduction <add>, %940, %cst_193 [1] : vector<16x16xf32> to vector<16xf32>
    %942 = vector.shape_cast %941 : vector<16xf32> to vector<16x1xf32>
    %943 = arith.addf %942, %936 : vector<16x1xf32>
    %944 = vector.broadcast %943 : vector<16x1xf32> to vector<16x4xf32>
    %945 = vector.broadcast %529 : vector<1x4xf32> to vector<16x4xf32>
    %946 = arith.mulf %944, %945 : vector<16x4xf32>
    %947 = vector.broadcast %530 : vector<1x4xf32> to vector<16x4xf32>
    %948 = arith.addf %946, %947 : vector<16x4xf32>
    %c2 = arith.constant 2 : index
    %949 = memref.load %arg4[%c2] : memref<3xf32, #tpu.memory_space<smem>>
    %c0_194 = arith.constant 0 : index
    %c0_195 = arith.constant 0 : index
    %950 = vector.load %arg3[%c0_194, %c0_195] : memref<72x128xf32, #tpu.memory_space<vmem>>, vector<32x5xf32>
    %951 = vector.extract_strided_slice %950 {offsets = [0, 0], sizes = [32, 4], strides = [1, 1]} : vector<32x5xf32> to vector<32x4xf32>
    %952 = vector.extract_strided_slice %950 {offsets = [0, 4], sizes = [32, 1], strides = [1, 1]} : vector<32x5xf32> to vector<32x1xf32>
    %c32_196 = arith.constant 32 : index
    %c0_197 = arith.constant 0 : index
    %953 = vector.load %arg3[%c32_196, %c0_197] : memref<72x128xf32, #tpu.memory_space<vmem>>, vector<33x32xf32>
    %c65_198 = arith.constant 65 : index
    %c0_199 = arith.constant 0 : index
    %954 = vector.load %arg3[%c65_198, %c0_199] : memref<72x128xf32, #tpu.memory_space<vmem>>, vector<1x4xf32>
    %955 = vector.broadcast %954 : vector<1x4xf32> to vector<16x4xf32>
    %956 = arith.mulf %948, %955 : vector<16x4xf32>
    %957 = arith.mulf %956, %956 : vector<16x4xf32>
    %cst_200 = arith.constant dense<0.000000e+00> : vector<16xf32>
    %958 = vector.multi_reduction <add>, %957, %cst_200 [1] : vector<16x4xf32> to vector<16xf32>
    %959 = vector.shape_cast %958 : vector<16xf32> to vector<16x1xf32>
    %cst_201 = arith.constant dense<0.000000e+00> : vector<32x16xf32>
    %960 = tpu.matmul %951, %956, %cst_201 {dimension_numbers = #tpu.dot_dimension_numbers<[1], [1], [0], [0], [0, 0, 1, 0], [], []>} : vector<32x4xf32>, vector<16x4xf32>, vector<32x16xf32> -> vector<32x16xf32>
    %cst_202 = arith.constant dense<0.000000e+00> : vector<16x16xf32>
    %961 = tpu.matmul %956, %956, %cst_202 {dimension_numbers = #tpu.dot_dimension_numbers<[1], [1], [0], [0], [0, 0, 1, 0], [], []>} : vector<16x4xf32>, vector<16x4xf32>, vector<16x16xf32> -> vector<16x16xf32>
    %cst_203 = arith.constant 0.000000e+00 : f32
    %962 = vector.broadcast %cst_203 : f32 to vector<16x16xf32>
    %963 = arith.select %2, %961, %962 : vector<16x16xi1>, vector<16x16xf32>
    %cst_204 = arith.constant dense<0.000000e+00> : vector<16xf32>
    %964 = vector.multi_reduction <add>, %963, %cst_204 [0] : vector<16x16xf32> to vector<16xf32>
    %965 = vector.shape_cast %964 : vector<16xf32> to vector<1x16xf32>
    %966 = vector.broadcast %952 : vector<32x1xf32> to vector<32x16xf32>
    %967 = vector.broadcast %965 : vector<1x16xf32> to vector<32x16xf32>
    %968 = arith.addf %966, %967 : vector<32x16xf32>
    %cst_205 = arith.constant 2.000000e+00 : f32
    %969 = vector.broadcast %cst_205 : f32 to vector<32x16xf32>
    %970 = arith.mulf %969, %960 : vector<32x16xf32>
    %971 = arith.subf %968, %970 : vector<32x16xf32>
    %cst_206 = arith.constant 0.000000e+00 : f32
    %972 = vector.broadcast %cst_206 : f32 to vector<32x16xf32>
    %973 = arith.maximumf %971, %972 : vector<32x16xf32>
    %cst_207 = arith.constant -5.000000e-01 : f32
    %974 = vector.broadcast %cst_207 : f32 to vector<32x16xf32>
    %975 = arith.mulf %974, %973 : vector<32x16xf32>
    %976 = math.exp %975 : vector<32x16xf32>
    %977 = vector.broadcast %949 : f32 to vector<32x16xf32>
    %978 = arith.mulf %977, %976 : vector<32x16xf32>
    %979 = vector.broadcast %959 : vector<16x1xf32> to vector<16x16xf32>
    %980 = vector.broadcast %965 : vector<1x16xf32> to vector<16x16xf32>
    %981 = arith.addf %979, %980 : vector<16x16xf32>
    %cst_208 = arith.constant 2.000000e+00 : f32
    %982 = vector.broadcast %cst_208 : f32 to vector<16x16xf32>
    %983 = arith.mulf %982, %961 : vector<16x16xf32>
    %984 = arith.subf %981, %983 : vector<16x16xf32>
    %cst_209 = arith.constant 0.000000e+00 : f32
    %985 = vector.broadcast %cst_209 : f32 to vector<16x16xf32>
    %986 = arith.maximumf %984, %985 : vector<16x16xf32>
    %cst_210 = arith.constant -5.000000e-01 : f32
    %987 = vector.broadcast %cst_210 : f32 to vector<16x16xf32>
    %988 = arith.mulf %987, %986 : vector<16x16xf32>
    %989 = math.exp %988 : vector<16x16xf32>
    %990 = vector.broadcast %949 : f32 to vector<16x16xf32>
    %991 = arith.mulf %990, %989 : vector<16x16xf32>
    %cst_211 = arith.constant dense<0.000000e+00> : vector<33x16xf32>
    %992 = tpu.matmul %953, %978, %cst_211 {dimension_numbers = #tpu.dot_dimension_numbers<[1], [0], [0], [1], [0, 0, 1, 1], [], []>} : vector<33x32xf32>, vector<32x16xf32>, vector<33x16xf32> -> vector<33x16xf32>
    %993 = vector.extract_strided_slice %992 {offsets = [0, 0], sizes = [32, 16], strides = [1, 1]} : vector<33x16xf32> to vector<32x16xf32>
    %994 = vector.extract_strided_slice %992 {offsets = [32, 0], sizes = [1, 16], strides = [1, 1]} : vector<33x16xf32> to vector<1x16xf32>
    %cst_212 = arith.constant dense<0.000000e+00> : vector<16x16xf32>
    %995 = tpu.matmul %978, %993, %cst_212 {dimension_numbers = #tpu.dot_dimension_numbers<[0], [0], [1], [1], [0, 1, 1, 1], [], []>} : vector<32x16xf32>, vector<32x16xf32>, vector<16x16xf32> -> vector<16x16xf32>
    %996 = arith.addf %991, %995 : vector<16x16xf32>
    %997 = arith.addf %996, %5 : vector<16x16xf32>
    %c0_213 = arith.constant 0 : index
    %c0_214 = arith.constant 0 : index
    %998 = vector.load %arg5[%c0_213, %c0_214] : memref<1x16xf32, #tpu.memory_space<vmem>>, vector<1x16xf32>
    tpu.vector_store %arg5[%c0_213, %c0_214], %994 {strides = array<i32>} : memref<1x16xf32, #tpu.memory_space<vmem>>, vector<1x16xf32>,
    %c0_215 = arith.constant 0 : index
    %c0_216 = arith.constant 0 : index
    %999 = vector.load %arg6[%c0_215, %c0_216] : memref<16x16xf32, #tpu.memory_space<vmem>>, vector<16x16xf32>
    tpu.vector_store %arg6[%c0_215, %c0_216], %997 {strides = array<i32>} : memref<16x16xf32, #tpu.memory_space<vmem>>, vector<16x16xf32>,
    return
  }
}

</mosaic_0001>

<llo_original>
// kernel: forward.1
$region0: #{forward.1}
  #allocation0 [shape = 'u32[]', space=smem, size = 0x4, offset = 0x4, fixed_abs, tag = 'smem constant byte address 0x4 - core index']
  #allocation1 [shape = 'u32[144,128]{1,0:T(1,128)}', space=vmem, size = 0x12000, scoped, tag = 'internal scratch']
  %s0 = inlined_call_operand.vmem [shape: f32[16,8], index: 0, kind: input, shape index: {}]
  %s1 = inlined_call_operand.hbm [shape: f32[72,128], index: 1, kind: input, shape index: {}]
  %s2 = inlined_call_operand.hbm [shape: f32[72,128], index: 2, kind: input, shape index: {}]
  %s3 = inlined_call_operand.hbm [shape: f32[72,128], index: 3, kind: input, shape index: {}]
  %s4 = inlined_call_operand.vmem [shape: f32[3], index: 4, kind: input, shape index: {}]
  %s5 = inlined_call_operand.hbm [shape: f32[1,16], index: 5, kind: output, shape index: {0}]
  %s6 = inlined_call_operand.hbm [shape: f32[16,16], index: 6, kind: output, shape index: {1}]
  %7 = xla_tuple %s5, %s6
  %s8 = sld [smem:[#allocation0]]
  $region54: #{forward.1} parent=0
    _
  %s10 = ssub.s32 1, %s8
  %s11 = scalar_select 0, %s10, %s8
  $region1: #{forward.1} parent=0
    #allocation2 [shape = 'u8[36864]{0}', space=vmem, size = 0x9000, scoped, tag = 'input window, operand 1, single buffered']
    #allocation3 [shape = 's32[1]{0}', space=sflag, size = 0x4, scoped, tag = 'scoped memory for forward.1']
    #allocation4 [shape = 's32[1]{0}', space=sflag, size = 0x4, scoped, tag = 'scoped memory for forward.1']
    #allocation5 [shape = 's32[1]{0}', space=sflag, size = 0x4, scoped, tag = 'scoped memory for forward.1']
    #allocation6 [shape = 'u8[36864]{0}', space=vmem, size = 0x9000, scoped, tag = 'input window, operand 2, single buffered']
    #allocation7 [shape = 's32[1]{0}', space=sflag, size = 0x4, scoped, tag = 'scoped memory for forward.1']
    #allocation8 [shape = 'u8[36864]{0}', space=vmem, size = 0x9000, scoped, tag = 'input window, operand 3, single buffered']
    #allocation9 [shape = 'u8[512]{0}', space=smem, size = 0x200, scoped, tag = 'input window, operand 4, single buffered']
    #allocation10 [shape = 'u8[512]{0}', space=vmem, size = 0x400, scoped, tag = 'output window, operand 0, single buffered']
    #allocation11 [shape = 'u8[8192]{0}', space=vmem, size = 0x2000, scoped, tag = 'output window, operand 1, single buffered']
    #allocation12 [shape = 's32[1]{0}', space=sflag, size = 0x4, scoped, tag = 'scoped memory for forward.1']
    %12 = vsyncpa [#allocation3], 0
    %13 = vsyncpa [#allocation7], 0
    %14 = vsyncpa [#allocation5], 0
    %15 = vsyncpa [#allocation4], 0
    %16 = vsyncpa [#allocation12], 0
    // Predicated region
    $region2: #{forward.1} parent=1 // pred_check
      _
    $region3: #{forward.1} parent=1 // pred_check_branch
      %18 = sbr.rel (0) target = $region5
    $region4: #{forward.1} parent=1 // pred_region
      _
    $region5: #{forward.1} parent=1 // pred_fallthru
      _
    // Predicated region
    $region6: #{forward.1} parent=1 // pred_check
      _
    $region7: #{forward.1} parent=1 // pred_check_branch
      %20 = sbr.rel (0) target = $region9
    $region8: #{forward.1} parent=1 // pred_region
      %s22 = ssub.s32 1152, 1152
      %23 = vsyncadd [#allocation3], %s22
      %s24 = sshll.u32 [#allocation2], 4
      %s25 = int_to_ptr.vmem [resolvable:$true] %s24
      %30 = dma.hbm_to_vmem [thread:$0]  %s1, 1152, %s25, [#allocation3], 128, 128, 8
    $region9: #{forward.1} parent=1 // pred_fallthru
      _
    // Predicated region
    $region10: #{forward.1} parent=1 // pred_check
      _
    $region11: #{forward.1} parent=1 // pred_check_branch
      %32 = sbr.rel (0) target = $region13
    $region12: #{forward.1} parent=1 // pred_region
      %s34 = ssub.s32 1152, 1152
      %35 = vsyncadd [#allocation7], %s34
      %s36 = sshll.u32 [#allocation6], 4
      %s37 = int_to_ptr.vmem [resolvable:$true] %s36
      %42 = dma.hbm_to_vmem [thread:$0]  %s2, 1152, %s37, [#allocation7], 128, 128, 8
    $region13: #{forward.1} parent=1 // pred_fallthru
      _
    // Predicated region
    $region14: #{forward.1} parent=1 // pred_check
      _
    $region15: #{forward.1} parent=1 // pred_check_branch
      %44 = sbr.rel (0) target = $region17
    $region16: #{forward.1} parent=1 // pred_region
      %s46 = ssub.s32 1152, 1152
      %47 = vsyncadd [#allocation7], %s46
      %s48 = sshll.u32 [#allocation8], 4
      %s49 = int_to_ptr.vmem [resolvable:$true] %s48
      %54 = dma.hbm_to_vmem [thread:$0]  %s3, 1152, %s49, [#allocation7], 128, 128, 8
    $region17: #{forward.1} parent=1 // pred_fallthru
      _
    // Predicated region
    $region18: #{forward.1} parent=1 // pred_check
      _
    $region19: #{forward.1} parent=1 // pred_check_branch
      %56 = sbr.rel (0) target = $region21
    $region20: #{forward.1} parent=1 // pred_region
      %s58 = ssub.s32 16, 16
      %59 = vsyncadd [#allocation5], %s58
      %s61 = sshll.u32 %s4, 4
      %s62 = int_to_ptr.vmem [resolvable:$true] %s61
      %64 = dma.vmem_to_smem %s62, 16, [#allocation9], [#allocation5]
    $region21: #{forward.1} parent=1 // pred_fallthru
      _
    // Predicated region
    $region22: #{forward.1} parent=1 // pred_check
      _
    $region23: #{forward.1} parent=1 // pred_check_branch
      %66 = sbr.rel (0) target = $region25
    $region24: #{forward.1} parent=1 // pred_region
      %67 = dma.done [#allocation3], 1152
    $region25: #{forward.1} parent=1 // pred_fallthru
      _
    // Predicated region
    $region26: #{forward.1} parent=1 // pred_check
      _
    $region27: #{forward.1} parent=1 // pred_check_branch
      %69 = sbr.rel (0) target = $region29
    $region28: #{forward.1} parent=1 // pred_region
      %70 = dma.done [#allocation7], 1152
    $region29: #{forward.1} parent=1 // pred_fallthru
      _
    // Predicated region
    $region30: #{forward.1} parent=1 // pred_check
      _
    $region31: #{forward.1} parent=1 // pred_check_branch
      %72 = sbr.rel (0) target = $region33
    $region32: #{forward.1} parent=1 // pred_region
      %73 = dma.done [#allocation7], 1152
    $region33: #{forward.1} parent=1 // pred_fallthru
      _
    // Predicated region
    $region34: #{forward.1} parent=1 // pred_check
      _
    $region35: #{forward.1} parent=1 // pred_check_branch
      %75 = sbr.rel (0) target = $region37
    $region36: #{forward.1} parent=1 // pred_region
      %76 = dma.done [#allocation5], 16
    $region37: #{forward.1} parent=1 // pred_fallthru
      _
    %77 = sfence
    %v78 = vlaneseq
    %v79 = vshrl.u32 %v78, 7
    %v80 = vadd.s32 %v79, 8
    %v81 = vlaneseq
    %v82 = vand.u32 %v81, 127
    %vm83 = vcmp.eq.s32.totalorder %v79, %v82
    %vm84 = vcmp.eq.s32.totalorder %v80, %v82
    %v85 = vsel %vm83, 0.0001, 0.0
    %v86 = vsel %vm84, 0.0001, 0.0
    %v87 = vld [vmem:[%s0] sm:$0xff]
    %v88 = vld [vmem:[%s0 + $0x8] sm:$0xff]
    %s89 = sld [smem:[#allocation9]]
    %v90 = vld [vmem:[#allocation2] sm:$0xff]
    %v91 = vld [vmem:[#allocation2 + $0x8] sm:$0xff]
    %v92 = vld [vmem:[#allocation2 + $0x10] sm:$0xff]
    %v93 = vld [vmem:[#allocation2 + $0x18] sm:$0xff]
    %v94 = vld [vmem:[#allocation2 + $0x20] sm:$0xff]
    %v95 = vld [vmem:[#allocation2 + $0x28] sm:$0xff]
    %v96 = vld [vmem:[#allocation2 + $0x30] sm:$0xff]
    %v97 = vld [vmem:[#allocation2 + $0x38] sm:$0xff]
    %v98 = vld [vmem:[#allocation2 + $0x40] sm:$0x1]
    %v99 = vld [vmem:[#allocation2 + $0x41] sm:$0x1]
    %v100 = vlaneseq
    %v101 = vshrl.u32 %v100, 7
    %v102 = vsub.s32 0, %v101
    %v103 = vrot.slane %v99, %v102
    %v104 = vmul.f32 %v87, %v103
    %v105 = vmul.f32 %v88, %v103
    %v106 = vmul.f32 %v104, %v104
    %v107 = vmul.f32 %v105, %v105
    %vm108 = vcmask 64512
    %v109 = vsel %vm108, %v106, 0.0
    %110 = vadd.xlane.f32.xlu0 %v109
    %v111 = vpop.xlane.xlu0 %110
    %v112 = vsel %vm108, %v107, 0.0
    %113 = vadd.xlane.f32.xlu0 %v112
    %v114 = vpop.xlane.xlu0 %113
    %v116 = vsel %vm108, %v90, 0
    %v119 = vsel %vm108, %v91, 0
    %v122 = vsel %vm108, %v92, 0
    %v125 = vsel %vm108, %v93, 0
    %v128 = vsel %vm108, %v104, 0
    %v131 = vsel %vm108, %v105, 0
    %133 = vmatprep.subr.mxu0 0.0
    %134 = vmatpush1.xpose.msra.mxu0 %v128
    %135 = vmatprep.subr.mxu0 0.0
    %136 = vmatpush1.xpose.msra.mxu0 %v131
    %137 = vmatprep.subr.mxu0 0.0
    %138 = vmatpush1.xpose.msra.mxu0 0.0
    %139 = vmatprep.subr.mxu0 0.0
    %140 = vmatpush1.xpose.msra.mxu0 0.0
    %141 = vmatprep.subr.mxu0 0.0
    %142 = vmatpush1.xpose.msra.mxu0 0.0
    %143 = vmatprep.subr.mxu0 0.0
    %144 = vmatpush1.xpose.msra.mxu0 0.0
    %145 = vmatprep.subr.mxu0 0.0
    %146 = vmatpush1.xpose.msra.mxu0 0.0
    %147 = vmatprep.subr.mxu0 0.0
    %148 = vmatpush1.xpose.msra.mxu0 0.0
    %149 = vmatprep.subr.mxu0 0.0
    %150 = vmatpush1.xpose.msra.mxu0 0.0
    %151 = vmatprep.subr.mxu0 0.0
    %152 = vmatpush1.xpose.msra.mxu0 0.0
    %153 = vmatprep.subr.mxu0 0.0
    %154 = vmatpush1.xpose.msra.mxu0 0.0
    %155 = vmatprep.subr.mxu0 0.0
    %156 = vmatpush1.xpose.msra.mxu0 0.0
    %157 = vmatprep.subr.mxu0 0.0
    %158 = vmatpush1.xpose.msra.mxu0 0.0
    %159 = vmatprep.subr.mxu0 0.0
    %160 = vmatpush1.xpose.msra.mxu0 0.0
    %161 = vmatprep.subr.mxu0 0.0
    %162 = vmatpush1.xpose.msra.mxu0 0.0
    %163 = vmatprep.subr.mxu0 0.0
    %164 = vmatpush1.xpose.msra.mxu0 0.0
    %165 = vmatprep.subr.mxu0 0.0
    %166 = vmatpush1.xpose.msra.mxu0 0.0
    %167 = vmatprep.subr.mxu0 0.0
    %168 = vmatpush1.xpose.msra.mxu0 0.0
    %169 = vmatprep.subr.mxu0 0.0
    %170 = vmatpush1.xpose.msra.mxu0 0.0
    %171 = vmatprep.subr.mxu0 0.0
    %172 = vmatpush1.xpose.msra.mxu0 0.0
    %173 = vmatprep.subr.mxu0 0.0
    %174 = vmatpush1.xpose.msra.mxu0 0.0
    %175 = vmatprep.subr.mxu0 0.0
    %176 = vmatpush1.xpose.msra.mxu0 0.0
    %177 = vmatprep.subr.mxu0 0.0
    %178 = vmatpush1.xpose.msra.mxu0 0.0
    %179 = vmatprep.subr.mxu0 0.0
    %180 = vmatpush1.xpose.msra.mxu0 0.0
    %181 = vmatprep.subr.mxu0 0.0
    %182 = vmatpush1.xpose.msra.mxu0 0.0
    %183 = vmatprep.subr.mxu0 0.0
    %184 = vmatpush1.xpose.msra.mxu0 0.0
    %185 = vmatprep.subr.mxu0 0.0
    %186 = vmatpush1.xpose.msra.mxu0 0.0
    %187 = vmatprep.subr.mxu0 0.0
    %188 = vmatpush1.xpose.msra.mxu0 0.0
    %189 = vmatprep.subr.mxu0 0.0
    %190 = vmatpush1.xpose.msra.mxu0 0.0
    %191 = vmatprep.subr.mxu0 0.0
    %192 = vmatpush1.xpose.msra.mxu0 0.0
    %193 = vmatprep.subr.mxu0 0.0
    %194 = vmatpush1.xpose.msra.mxu0 0.0
    %195 = vmatprep.subr.mxu0 0.0
    %196 = vmatpush1.xpose.msra.mxu0 0.0
    %197 = vmatprep.mubr.f32.mxu0 0.0
    %198 = vmatmul.mubr.f32.gmra.mrb[0].mxu0 %v116
    %v199 = vpop.f32.mrb[0].mxu0
    %v200 = vadd.f32 0.0, %v199
    %v201 = vpop.f32.mrb[0].mxu0
    %202 = vmatprep.mubr.f32.mxu0 0.0
    %203 = vmatmul.mubr.f32.gmra.mrb[0].mxu0 %v119
    %v204 = vpop.f32.mrb[0].mxu0
    %v205 = vadd.f32 0.0, %v204
    %v206 = vpop.f32.mrb[0].mxu0
    %207 = vmatprep.mubr.f32.mxu0 0.0
    %208 = vmatmul.mubr.f32.gmra.mrb[0].mxu0 %v122
    %v209 = vpop.f32.mrb[0].mxu0
    %v210 = vadd.f32 0.0, %v209
    %v211 = vpop.f32.mrb[0].mxu0
    %212 = vmatprep.mubr.f32.mxu0 0.0
    %213 = vmatmul.mubr.f32.gmra.mrb[0].mxu0 %v125
    %v214 = vpop.f32.mrb[0].mxu0
    %v215 = vadd.f32 0.0, %v214
    %v216 = vpop.f32.mrb[0].mxu0
    %217 = vdwg.mxu0
    %218 = vmatprep.subr.mxu0 0.0
    %219 = vmatpush1.xpose.msra.mxu0 %v128
    %220 = vmatprep.subr.mxu0 0.0
    %221 = vmatpush1.xpose.msra.mxu0 %v131
    %222 = vmatprep.subr.mxu0 0.0
    %223 = vmatpush1.xpose.msra.mxu0 0.0
    %224 = vmatprep.subr.mxu0 0.0
    %225 = vmatpush1.xpose.msra.mxu0 0.0
    %226 = vmatprep.subr.mxu0 0.0
    %227 = vmatpush1.xpose.msra.mxu0 0.0
    %228 = vmatprep.subr.mxu0 0.0
    %229 = vmatpush1.xpose.msra.mxu0 0.0
    %230 = vmatprep.subr.mxu0 0.0
    %231 = vmatpush1.xpose.msra.mxu0 0.0
    %232 = vmatprep.subr.mxu0 0.0
    %233 = vmatpush1.xpose.msra.mxu0 0.0
    %234 = vmatprep.subr.mxu0 0.0
    %235 = vmatpush1.xpose.msra.mxu0 0.0
    %236 = vmatprep.subr.mxu0 0.0
    %237 = vmatpush1.xpose.msra.mxu0 0.0
    %238 = vmatprep.subr.mxu0 0.0
    %239 = vmatpush1.xpose.msra.mxu0 0.0
    %240 = vmatprep.subr.mxu0 0.0
    %241 = vmatpush1.xpose.msra.mxu0 0.0
    %242 = vmatprep.subr.mxu0 0.0
    %243 = vmatpush1.xpose.msra.mxu0 0.0
    %244 = vmatprep.subr.mxu0 0.0
    %245 = vmatpush1.xpose.msra.mxu0 0.0
    %246 = vmatprep.subr.mxu0 0.0
    %247 = vmatpush1.xpose.msra.mxu0 0.0
    %248 = vmatprep.subr.mxu0 0.0
    %249 = vmatpush1.xpose.msra.mxu0 0.0
    %250 = vmatprep.subr.mxu0 0.0
    %251 = vmatpush1.xpose.msra.mxu0 0.0
    %252 = vmatprep.subr.mxu0 0.0
    %253 = vmatpush1.xpose.msra.mxu0 0.0
    %254 = vmatprep.subr.mxu0 0.0
    %255 = vmatpush1.xpose.msra.mxu0 0.0
    %256 = vmatprep.subr.mxu0 0.0
    %257 = vmatpush1.xpose.msra.mxu0 0.0
    %258 = vmatprep.subr.mxu0 0.0
    %259 = vmatpush1.xpose.msra.mxu0 0.0
    %260 = vmatprep.subr.mxu0 0.0
    %261 = vmatpush1.xpose.msra.mxu0 0.0
    %262 = vmatprep.subr.mxu0 0.0
    %263 = vmatpush1.xpose.msra.mxu0 0.0
    %264 = vmatprep.subr.mxu0 0.0
    %265 = vmatpush1.xpose.msra.mxu0 0.0
    %266 = vmatprep.subr.mxu0 0.0
    %267 = vmatpush1.xpose.msra.mxu0 0.0
    %268 = vmatprep.subr.mxu0 0.0
    %269 = vmatpush1.xpose.msra.mxu0 0.0
    %270 = vmatprep.subr.mxu0 0.0
    %271 = vmatpush1.xpose.msra.mxu0 0.0
    %272 = vmatprep.subr.mxu0 0.0
    %273 = vmatpush1.xpose.msra.mxu0 0.0
    %274 = vmatprep.subr.mxu0 0.0
    %275 = vmatpush1.xpose.msra.mxu0 0.0
    %276 = vmatprep.subr.mxu0 0.0
    %277 = vmatpush1.xpose.msra.mxu0 0.0
    %278 = vmatprep.subr.mxu0 0.0
    %279 = vmatpush1.xpose.msra.mxu0 0.0
    %280 = vmatprep.subr.mxu0 0.0
    %281 = vmatpush1.xpose.msra.mxu0 0.0
    %282 = vmatprep.mubr.f32.mxu0 0.0
    %283 = vmatmul.mubr.f32.gmra.mrb[0].mxu0 %v128
    %v284 = vpop.f32.mrb[0].mxu0
    %v285 = vadd.f32 0.0, %v284
    %v286 = vpop.f32.mrb[0].mxu0
    %287 = vmatprep.mubr.f32.mxu0 0.0
    %288 = vmatmul.mubr.f32.gmra.mrb[0].mxu0 %v131
    %v289 = vpop.f32.mrb[0].mxu0
    %v290 = vadd.f32 0.0, %v289
    %v291 = vpop.f32.mrb[0].mxu0
    %292 = vdwg.mxu0
    %v293 = vsel %vm83, %v285, 0.0
    %v294 = vsel %vm84, %v290, 0.0
    %vm295 = vcmask 130048
    %v296 = vsel %vm295, %v293, 0.0
    %v297 = vsel %vm295, %v294, 0.0
    %v298 = vadd.f32 %v296, %v297
    %v299 = vrot.slane %v298, 4
    %v300 = vadd.f32 %v298, %v299
    %v301 = vrot.slane %v300, 2
    %v302 = vadd.f32 %v300, %v301
    %v303 = vrot.slane %v302, 1
    %v304 = vadd.f32 %v302, %v303
    %305 = vset.pattern.permute.xlu0 8
    %306 = vperm.xlu0 %305, %v90
    %v307 = vpop.permute.xlu0 %306
    %309 = vset.pattern.permute.xlu0 8
    %310 = vperm.xlu0 %309, %v91
    %v311 = vpop.permute.xlu0 %310
    %313 = vset.pattern.permute.xlu0 8
    %314 = vperm.xlu0 %313, %v92
    %v315 = vpop.permute.xlu0 %314
    %317 = vset.pattern.permute.xlu0 8
    %318 = vperm.xlu0 %317, %v93
    %v319 = vpop.permute.xlu0 %318
    %v321 = vadd.f32 %v307, %v304
    %v322 = vadd.f32 %v311, %v304
    %v323 = vadd.f32 %v315, %v304
    %v324 = vadd.f32 %v319, %v304
    %v325 = vmul.f32 %v200, 2.0
    %v326 = vmul.f32 %v205, 2.0
    %v327 = vmul.f32 %v210, 2.0
    %v328 = vmul.f32 %v215, 2.0
    %v329 = vsub.f32 %v321, %v325
    %v330 = vsub.f32 %v322, %v326
    %v331 = vsub.f32 %v323, %v327
    %v332 = vsub.f32 %v324, %v328
    %v333 = vmax.f32 %v329, 0.0
    %v334 = vmax.f32 %v330, 0.0
    %v335 = vmax.f32 %v331, 0.0
    %v336 = vmax.f32 %v332, 0.0
    %v337 = vmul.f32 %v333, -0.5
    %v338 = vmul.f32 %v334, -0.5
    %v339 = vmul.f32 %v335, -0.5
    %v340 = vmul.f32 %v336, -0.5
    %v341 = vmul.f32 %v337, 1.442695
    %v342 = vpow.pop %v341
    %v343 = vmul.f32 %v338, 1.442695
    %v344 = vpow.pop %v343
    %v345 = vmul.f32 %v339, 1.442695
    %v346 = vpow.pop %v345
    %v347 = vmul.f32 %v340, 1.442695
    %v348 = vpow.pop %v347
    %v349 = vstv %s89
    %v350 = vmul.f32 %v349, %v342
    %v351 = vmul.f32 %v349, %v344
    %v352 = vmul.f32 %v349, %v346
    %v353 = vmul.f32 %v349, %v348
    %v354 = vadd.f32 %v111, %v304
    %v355 = vadd.f32 %v114, %v304
    %v356 = vmul.f32 %v285, 2.0
    %v357 = vmul.f32 %v290, 2.0
    %v358 = vsub.f32 %v354, %v356
    %v359 = vsub.f32 %v355, %v357
    %v360 = vmax.f32 %v358, 0.0
    %v361 = vmax.f32 %v359, 0.0
    %v362 = vmul.f32 %v360, -0.5
    %v363 = vmul.f32 %v361, -0.5
    %v364 = vmul.f32 %v362, 1.442695
    %v365 = vpow.pop %v364
    %v366 = vmul.f32 %v363, 1.442695
    %v367 = vpow.pop %v366
    %v368 = vmul.f32 %v349, %v365
    %v369 = vmul.f32 %v349, %v367
    %vm370 = vcmask 261120
    %v372 = vsel %vm370, %v94, 0
    %v375 = vsel %vm370, %v95, 0
    %v378 = vsel %vm370, %v96, 0
    %v381 = vsel %vm370, %v97, 0
    %v384 = vsel %vm370, %v98, 0
    %386 = vmatprep.subr.mxu0 0.0
    %387 = vmatpush1.msra.mxu0 %v350
    %388 = vmatprep.subr.mxu0 0.0
    %389 = vmatpush1.msra.mxu0 %v351
    %390 = vmatprep.subr.mxu0 0.0
    %391 = vmatpush1.msra.mxu0 %v352
    %392 = vmatprep.subr.mxu0 0.0
    %393 = vmatpush1.msra.mxu0 %v353
    %394 = vmatprep.subr.mxu0 0.0
    %395 = vmatpush1.msra.mxu0 0.0
    %396 = vmatprep.subr.mxu0 0.0
    %397 = vmatpush1.msra.mxu0 0.0
    %398 = vmatprep.subr.mxu0 0.0
    %399 = vmatpush1.msra.mxu0 0.0
    %400 = vmatprep.subr.mxu0 0.0
    %401 = vmatpush1.msra.mxu0 0.0
    %402 = vmatprep.subr.mxu0 0.0
    %403 = vmatpush1.msra.mxu0 0.0
    %404 = vmatprep.subr.mxu0 0.0
    %405 = vmatpush1.msra.mxu0 0.0
    %406 = vmatprep.subr.mxu0 0.0
    %407 = vmatpush1.msra.mxu0 0.0
    %408 = vmatprep.subr.mxu0 0.0
    %409 = vmatpush1.msra.mxu0 0.0
    %410 = vmatprep.subr.mxu0 0.0
    %411 = vmatpush1.msra.mxu0 0.0
    %412 = vmatprep.subr.mxu0 0.0
    %413 = vmatpush1.msra.mxu0 0.0
    %414 = vmatprep.subr.mxu0 0.0
    %415 = vmatpush1.msra.mxu0 0.0
    %416 = vmatprep.subr.mxu0 0.0
    %417 = vmatpush1.msra.mxu0 0.0
    %418 = vmatprep.subr.mxu0 0.0
    %419 = vmatpush1.msra.mxu0 0.0
    %420 = vmatprep.subr.mxu0 0.0
    %421 = vmatpush1.msra.mxu0 0.0
    %422 = vmatprep.subr.mxu0 0.0
    %423 = vmatpush1.msra.mxu0 0.0
    %424 = vmatprep.subr.mxu0 0.0
    %425 = vmatpush1.msra.mxu0 0.0
    %426 = vmatprep.subr.mxu0 0.0
    %427 = vmatpush1.msra.mxu0 0.0
    %428 = vmatprep.subr.mxu0 0.0
    %429 = vmatpush1.msra.mxu0 0.0
    %430 = vmatprep.subr.mxu0 0.0
    %431 = vmatpush1.msra.mxu0 0.0
    %432 = vmatprep.subr.mxu0 0.0
    %433 = vmatpush1.msra.mxu0 0.0
    %434 = vmatprep.subr.mxu0 0.0
    %435 = vmatpush1.msra.mxu0 0.0
    %436 = vmatprep.subr.mxu0 0.0
    %437 = vmatpush1.msra.mxu0 0.0
    %438 = vmatprep.subr.mxu0 0.0
    %439 = vmatpush1.msra.mxu0 0.0
    %440 = vmatprep.subr.mxu0 0.0
    %441 = vmatpush1.msra.mxu0 0.0
    %442 = vmatprep.subr.mxu0 0.0
    %443 = vmatpush1.msra.mxu0 0.0
    %444 = vmatprep.subr.mxu0 0.0
    %445 = vmatpush1.msra.mxu0 0.0
    %446 = vmatprep.subr.mxu0 0.0
    %447 = vmatpush1.msra.mxu0 0.0
    %448 = vmatprep.subr.mxu0 0.0
    %449 = vmatpush1.msra.mxu0 0.0
    %450 = vmatprep.mubr.f32.mxu0 0.0
    %451 = vmatmul.mubr.f32.gmra.mrb[0].mxu0 %v372
    %v452 = vpop.f32.mrb[0].mxu0
    %v453 = vadd.f32 0.0, %v452
    %v454 = vpop.f32.mrb[0].mxu0
    %455 = vmatprep.mubr.f32.mxu0 0.0
    %456 = vmatmul.mubr.f32.gmra.mrb[0].mxu0 %v375
    %v457 = vpop.f32.mrb[0].mxu0
    %v458 = vadd.f32 0.0, %v457
    %v459 = vpop.f32.mrb[0].mxu0
    %460 = vmatprep.mubr.f32.mxu0 0.0
    %461 = vmatmul.mubr.f32.gmra.mrb[0].mxu0 %v378
    %v462 = vpop.f32.mrb[0].mxu0
    %v463 = vadd.f32 0.0, %v462
    %v464 = vpop.f32.mrb[0].mxu0
    %465 = vmatprep.mubr.f32.mxu0 0.0
    %466 = vmatmul.mubr.f32.gmra.mrb[0].mxu0 %v381
    %v467 = vpop.f32.mrb[0].mxu0
    %v468 = vadd.f32 0.0, %v467
    %v469 = vpop.f32.mrb[0].mxu0
    %470 = vmatprep.mubr.f32.mxu0 0.0
    %471 = vmatmul.mubr.f32.gmra.mrb[0].mxu0 %v384
    %v472 = vpop.f32.mrb[0].mxu0
    %v473 = vadd.f32 0.0, %v472
    %v474 = vpop.f32.mrb[0].mxu0
    %475 = vdwg.mxu0
    %476 = vxpose.xlu0.b32.start [1/16] %v350, 128
    %477 = vxpose.xlu0.b32.cont [2/16] %v351, 128
    %478 = vxpose.xlu0.b32.cont [3/16] %v352, 128
    %479 = vxpose.xlu0.b32.cont [4/16] %v353, 128
    %480 = vxpose.xlu0.b32.cont [5/16] 0.0, 128
    %481 = vxpose.xlu0.b32.cont [6/16] 0.0, 128
    %482 = vxpose.xlu0.b32.cont [7/16] 0.0, 128
    %483 = vxpose.xlu0.b32.cont [8/16] 0.0, 128
    %484 = vxpose.xlu0.b32.cont [9/16] 0.0, 128
    %485 = vxpose.xlu0.b32.cont [10/16] 0.0, 128
    %486 = vxpose.xlu0.b32.cont [11/16] 0.0, 128
    %487 = vxpose.xlu0.b32.cont [12/16] 0.0, 128
    %488 = vxpose.xlu0.b32.cont [13/16] 0.0, 128
    %489 = vxpose.xlu0.b32.cont [14/16] 0.0, 128
    %490 = vxpose.xlu0.b32.cont [15/16] 0.0, 128
    %491 = vxpose.xlu0.b32.end [16/16] 0.0, 128
    %v492 = vpop.trf.xlu0
    %v493 = vpop.trf.xlu0
    %v494 = vpop.trf.xlu0
    %v495 = vpop.trf.xlu0
    %v496 = vpop.trf.xlu0
    %v497 = vpop.trf.xlu0
    %v498 = vpop.trf.xlu0
    %v499 = vpop.trf.xlu0
    %v500 = vpop.trf.xlu0
    %v501 = vpop.trf.xlu0
    %v502 = vpop.trf.xlu0
    %v503 = vpop.trf.xlu0
    %v504 = vpop.trf.xlu0
    %v505 = vpop.trf.xlu0
    %v506 = vpop.trf.xlu0
    %v507 = vpop.trf.xlu0
    %v509 = vsel %vm370, %v492, 0
    %v512 = vsel %vm370, %v493, 0
    %514 = vmatprep.subr.mxu0 0.0
    %515 = vmatpush1.msra.mxu0 %v453
    %516 = vmatprep.subr.mxu0 0.0
    %517 = vmatpush1.msra.mxu0 %v458
    %518 = vmatprep.subr.mxu0 0.0
    %519 = vmatpush1.msra.mxu0 %v463
    %520 = vmatprep.subr.mxu0 0.0
    %521 = vmatpush1.msra.mxu0 %v468
    %522 = vmatprep.subr.mxu0 0.0
    %523 = vmatpush1.msra.mxu0 0.0
    %524 = vmatprep.subr.mxu0 0.0
    %525 = vmatpush1.msra.mxu0 0.0
    %526 = vmatprep.subr.mxu0 0.0
    %527 = vmatpush1.msra.mxu0 0.0
    %528 = vmatprep.subr.mxu0 0.0
    %529 = vmatpush1.msra.mxu0 0.0
    %530 = vmatprep.subr.mxu0 0.0
    %531 = vmatpush1.msra.mxu0 0.0
    %532 = vmatprep.subr.mxu0 0.0
    %533 = vmatpush1.msra.mxu0 0.0
    %534 = vmatprep.subr.mxu0 0.0
    %535 = vmatpush1.msra.mxu0 0.0
    %536 = vmatprep.subr.mxu0 0.0
    %537 = vmatpush1.msra.mxu0 0.0
    %538 = vmatprep.subr.mxu0 0.0
    %539 = vmatpush1.msra.mxu0 0.0
    %540 = vmatprep.subr.mxu0 0.0
    %541 = vmatpush1.msra.mxu0 0.0
    %542 = vmatprep.subr.mxu0 0.0
    %543 = vmatpush1.msra.mxu0 0.0
    %544 = vmatprep.subr.mxu0 0.0
    %545 = vmatpush1.msra.mxu0 0.0
    %546 = vmatprep.subr.mxu0 0.0
    %547 = vmatpush1.msra.mxu0 0.0
    %548 = vmatprep.subr.mxu0 0.0
    %549 = vmatpush1.msra.mxu0 0.0
    %550 = vmatprep.subr.mxu0 0.0
    %551 = vmatpush1.msra.mxu0 0.0
    %552 = vmatprep.subr.mxu0 0.0
    %553 = vmatpush1.msra.mxu0 0.0
    %554 = vmatprep.subr.mxu0 0.0
    %555 = vmatpush1.msra.mxu0 0.0
    %556 = vmatprep.subr.mxu0 0.0
    %557 = vmatpush1.msra.mxu0 0.0
    %558 = vmatprep.subr.mxu0 0.0
    %559 = vmatpush1.msra.mxu0 0.0
    %560 = vmatprep.subr.mxu0 0.0
    %561 = vmatpush1.msra.mxu0 0.0
    %562 = vmatprep.subr.mxu0 0.0
    %563 = vmatpush1.msra.mxu0 0.0
    %564 = vmatprep.subr.mxu0 0.0
    %565 = vmatpush1.msra.mxu0 0.0
    %566 = vmatprep.subr.mxu0 0.0
    %567 = vmatpush1.msra.mxu0 0.0
    %568 = vmatprep.subr.mxu0 0.0
    %569 = vmatpush1.msra.mxu0 0.0
    %570 = vmatprep.subr.mxu0 0.0
    %571 = vmatpush1.msra.mxu0 0.0
    %572 = vmatprep.subr.mxu0 0.0
    %573 = vmatpush1.msra.mxu0 0.0
    %574 = vmatprep.subr.mxu0 0.0
    %575 = vmatpush1.msra.mxu0 0.0
    %576 = vmatprep.subr.mxu0 0.0
    %577 = vmatpush1.msra.mxu0 0.0
    %578 = vmatprep.mubr.f32.mxu0 0.0
    %579 = vmatmul.mubr.f32.gmra.mrb[0].mxu0 %v509
    %v580 = vpop.f32.mrb[0].mxu0
    %v581 = vadd.f32 0.0, %v580
    %v582 = vpop.f32.mrb[0].mxu0
    %583 = vmatprep.mubr.f32.mxu0 0.0
    %584 = vmatmul.mubr.f32.gmra.mrb[0].mxu0 %v512
    %v585 = vpop.f32.mrb[0].mxu0
    %v586 = vadd.f32 0.0, %v585
    %v587 = vpop.f32.mrb[0].mxu0
    %588 = vdwg.mxu0
    %v589 = vadd.f32 %v368, %v581
    %v590 = vadd.f32 %v369, %v586
    %v591 = vadd.f32 %v589, %v85
    %v592 = vadd.f32 %v590, %v86
    %v593 = vld [vmem:[#allocation2 + $0x42] sm:$0x1]
    %v594 = vld [vmem:[#allocation2 + $0x43] sm:$0x1]
    %v595 = vld [vmem:[#allocation2 + $0x44] sm:$0x1]
    %v596 = vmax.f32 %v591, 1e-12
    %v597 = vrsqrt.pop %v596
    %vm598 = vcmp.ge.s32.totalorder %v79, 0
    %vm599 = vcmp.ge.s32.totalorder %v80, 0
    %v600 = vlaneseq
    %v601 = vshrl.u32 %v600, 7
    %v602 = vsub.s32 0, %v601
    %v603 = vrot.slane %v597, %v602
    %v604 = vmul.f32 %v591, %v603
    %v605 = vmul.f32 %v592, %v603
    %v606 = vsel %vm598, %v604, 0.0
    %v607 = vsel %vm599, %v605, 0.0
    %v608 = vlaneseq
    %v609 = vshrl.u32 %v608, 7
    %v610 = vsub.s32 0, %v609
    %v611 = vrot.slane %v593, %v610
    %v612 = vmul.f32 %v606, %v611
    %v613 = vmul.f32 %v607, %v611
    %v614 = vadd.f32 %v612, 0.0
    %v615 = vadd.f32 %v613, 0.0
    %vm616 = vcmp.gt.s32.totalorder %v82, 0
    %618 = vset.pattern.permute.xlu0 0
    %619 = vperm.xlu0 %618, %v597
    %v620 = vpop.permute.xlu0 %619
    %v622 = vmul.f32 %v591, %v620
    %v623 = vsel %vm616, %v622, 0.0
    %625 = vset.pattern.permute.xlu0 0
    %626 = vperm.xlu0 %625, %v606
    %v627 = vpop.permute.xlu0 %626
    %630 = vset.pattern.permute.xlu0 0
    %631 = vperm.xlu0 %630, %v607
    %v632 = vpop.permute.xlu0 %631
    %v634 = vlaneseq
    %v635 = vshrl.u32 %v634, 7
    %v636 = vsub.s32 0, %v635
    %v637 = vrot.slane %v623, %v636
    %v638 = vmul.f32 %v627, %v637
    %v639 = vmul.f32 %v632, %v637
    %v640 = vsub.f32 %v591, %v638
    %v641 = vsub.f32 %v592, %v639
    %v642 = vmax.f32 %v640, 1e-12
    %v643 = vrsqrt.pop %v642
    %vm644 = vcmp.ge.s32.totalorder %v79, 1
    %vm645 = vcmp.ge.s32.totalorder %v80, 1
    %v646 = vlaneseq
    %v647 = vshrl.u32 %v646, 7
    %v648 = vsub.s32 1, %v647
    %v649 = vrot.slane %v643, %v648
    %v650 = vmul.f32 %v640, %v649
    %v651 = vmul.f32 %v641, %v649
    %v652 = vsel %vm644, %v650, 0.0
    %v653 = vsel %vm645, %v651, 0.0
    %v654 = vmul.f32 %v652, %v611
    %v655 = vmul.f32 %v653, %v611
    %658 = vrot.lane.b32.xlu0 %v654, 127
    %v659 = vpop.permute.xlu0 %658
    %660 = vrot.lane.b32.xlu0 %v655, 127
    %v661 = vpop.permute.xlu0 %660
    %v664 = vadd.f32 %v614, %v659
    %v665 = vadd.f32 %v615, %v661
    %vm666 = vcmp.gt.s32.totalorder %v82, 1
    %668 = vset.pattern.permute.xlu0 1
    %669 = vperm.xlu0 %668, %v643
    %v670 = vpop.permute.xlu0 %669
    %v672 = vmul.f32 %v640, %v670
    %v673 = vsel %vm666, %v672, 0.0
    %675 = vset.pattern.permute.xlu0 1
    %676 = vperm.xlu0 %675, %v652
    %v677 = vpop.permute.xlu0 %676
    %680 = vset.pattern.permute.xlu0 1
    %681 = vperm.xlu0 %680, %v653
    %v682 = vpop.permute.xlu0 %681
    %v684 = vlaneseq
    %v685 = vshrl.u32 %v684, 7
    %v686 = vsub.s32 1, %v685
    %v687 = vrot.slane %v673, %v686
    %v688 = vmul.f32 %v677, %v687
    %v689 = vmul.f32 %v682, %v687
    %v690 = vsub.f32 %v640, %v688
    %v691 = vsub.f32 %v641, %v689
    %v692 = vmax.f32 %v690, 1e-12
    %v693 = vrsqrt.pop %v692
    %vm694 = vcmp.ge.s32.totalorder %v79, 2
    %vm695 = vcmp.ge.s32.totalorder %v80, 2
    %v696 = vlaneseq
    %v697 = vshrl.u32 %v696, 7
    %v698 = vsub.s32 2, %v697
    %v699 = vrot.slane %v693, %v698
    %v700 = vmul.f32 %v690, %v699
    %v701 = vmul.f32 %v691, %v699
    %v702 = vsel %vm694, %v700, 0.0
    %v703 = vsel %vm695, %v701, 0.0
    %v704 = vmul.f32 %v702, %v611
    %v705 = vmul.f32 %v703, %v611
    %708 = vrot.lane.b32.xlu0 %v704, 126
    %v709 = vpop.permute.xlu0 %708
    %710 = vrot.lane.b32.xlu0 %v705, 126
    %v711 = vpop.permute.xlu0 %710
    %v714 = vadd.f32 %v664, %v709
    %v715 = vadd.f32 %v665, %v711
    %vm716 = vcmp.gt.s32.totalorder %v82, 2
    %718 = vset.pattern.permute.xlu0 2
    %719 = vperm.xlu0 %718, %v693
    %v720 = vpop.permute.xlu0 %719
    %v722 = vmul.f32 %v690, %v720
    %v723 = vsel %vm716, %v722, 0.0
    %725 = vset.pattern.permute.xlu0 2
    %726 = vperm.xlu0 %725, %v702
    %v727 = vpop.permute.xlu0 %726
    %730 = vset.pattern.permute.xlu0 2
    %731 = vperm.xlu0 %730, %v703
    %v732 = vpop.permute.xlu0 %731
    %v734 = vlaneseq
    %v735 = vshrl.u32 %v734, 7
    %v736 = vsub.s32 2, %v735
    %v737 = vrot.slane %v723, %v736
    %v738 = vmul.f32 %v727, %v737
    %v739 = vmul.f32 %v732, %v737
    %v740 = vsub.f32 %v690, %v738
    %v741 = vsub.f32 %v691, %v739
    %v742 = vmax.f32 %v740, 1e-12
    %v743 = vrsqrt.pop %v742
    %vm744 = vcmp.ge.s32.totalorder %v79, 3
    %vm745 = vcmp.ge.s32.totalorder %v80, 3
    %v746 = vlaneseq
    %v747 = vshrl.u32 %v746, 7
    %v748 = vsub.s32 3, %v747
    %v749 = vrot.slane %v743, %v748
    %v750 = vmul.f32 %v740, %v749
    %v751 = vmul.f32 %v741, %v749
    %v752 = vsel %vm744, %v750, 0.0
    %v753 = vsel %vm745, %v751, 0.0
    %v754 = vmul.f32 %v752, %v611
    %v755 = vmul.f32 %v753, %v611
    %758 = vrot.lane.b32.xlu0 %v754, 125
    %v759 = vpop.permute.xlu0 %758
    %760 = vrot.lane.b32.xlu0 %v755, 125
    %v761 = vpop.permute.xlu0 %760
    %v764 = vadd.f32 %v714, %v759
    %v765 = vadd.f32 %v715, %v761
    %vm766 = vcmp.gt.s32.totalorder %v82, 3
    %768 = vset.pattern.permute.xlu0 3
    %769 = vperm.xlu0 %768, %v743
    %v770 = vpop.permute.xlu0 %769
    %v772 = vmul.f32 %v740, %v770
    %v773 = vsel %vm766, %v772, 0.0
    %775 = vset.pattern.permute.xlu0 3
    %776 = vperm.xlu0 %775, %v752
    %v777 = vpop.permute.xlu0 %776
    %780 = vset.pattern.permute.xlu0 3
    %781 = vperm.xlu0 %780, %v753
    %v782 = vpop.permute.xlu0 %781
    %v784 = vlaneseq
    %v785 = vshrl.u32 %v784, 7
    %v786 = vsub.s32 3, %v785
    %v787 = vrot.slane %v773, %v786
    %v788 = vmul.f32 %v777, %v787
    %v789 = vmul.f32 %v782, %v787
    %v790 = vsub.f32 %v740, %v788
    %v791 = vsub.f32 %v741, %v789
    %v792 = vmax.f32 %v790, 1e-12
    %v793 = vrsqrt.pop %v792
    %vm794 = vcmp.ge.s32.totalorder %v79, 4
    %vm795 = vcmp.ge.s32.totalorder %v80, 4
    %v796 = vlaneseq
    %v797 = vshrl.u32 %v796, 7
    %v798 = vsub.s32 4, %v797
    %v799 = vrot.slane %v793, %v798
    %v800 = vmul.f32 %v790, %v799
    %v801 = vmul.f32 %v791, %v799
    %v802 = vsel %vm794, %v800, 0.0
    %v803 = vsel %vm795, %v801, 0.0
    %v804 = vmul.f32 %v802, %v611
    %v805 = vmul.f32 %v803, %v611
    %808 = vrot.lane.b32.xlu0 %v804, 124
    %v809 = vpop.permute.xlu0 %808
    %810 = vrot.lane.b32.xlu0 %v805, 124
    %v811 = vpop.permute.xlu0 %810
    %v814 = vadd.f32 %v764, %v809
    %v815 = vadd.f32 %v765, %v811
    %vm816 = vcmp.gt.s32.totalorder %v82, 4
    %818 = vset.pattern.permute.xlu0 4
    %819 = vperm.xlu0 %818, %v793
    %v820 = vpop.permute.xlu0 %819
    %v822 = vmul.f32 %v790, %v820
    %v823 = vsel %vm816, %v822, 0.0
    %825 = vset.pattern.permute.xlu0 4
    %826 = vperm.xlu0 %825, %v802
    %v827 = vpop.permute.xlu0 %826
    %830 = vset.pattern.permute.xlu0 4
    %831 = vperm.xlu0 %830, %v803
    %v832 = vpop.permute.xlu0 %831
    %v834 = vlaneseq
    %v835 = vshrl.u32 %v834, 7
    %v836 = vsub.s32 4, %v835
    %v837 = vrot.slane %v823, %v836
    %v838 = vmul.f32 %v827, %v837
    %v839 = vmul.f32 %v832, %v837
    %v840 = vsub.f32 %v790, %v838
    %v841 = vsub.f32 %v791, %v839
    %v842 = vmax.f32 %v840, 1e-12
    %v843 = vrsqrt.pop %v842
    %vm844 = vcmp.ge.s32.totalorder %v79, 5
    %vm845 = vcmp.ge.s32.totalorder %v80, 5
    %v846 = vlaneseq
    %v847 = vshrl.u32 %v846, 7
    %v848 = vsub.s32 5, %v847
    %v849 = vrot.slane %v843, %v848
    %v850 = vmul.f32 %v840, %v849
    %v851 = vmul.f32 %v841, %v849
    %v852 = vsel %vm844, %v850, 0.0
    %v853 = vsel %vm845, %v851, 0.0
    %v854 = vmul.f32 %v852, %v611
    %v855 = vmul.f32 %v853, %v611
    %858 = vrot.lane.b32.xlu0 %v854, 123
    %v859 = vpop.permute.xlu0 %858
    %860 = vrot.lane.b32.xlu0 %v855, 123
    %v861 = vpop.permute.xlu0 %860
    %v864 = vadd.f32 %v814, %v859
    %v865 = vadd.f32 %v815, %v861
    %vm866 = vcmp.gt.s32.totalorder %v82, 5
    %868 = vset.pattern.permute.xlu0 5
    %869 = vperm.xlu0 %868, %v843
    %v870 = vpop.permute.xlu0 %869
    %v872 = vmul.f32 %v840, %v870
    %v873 = vsel %vm866, %v872, 0.0
    %875 = vset.pattern.permute.xlu0 5
    %876 = vperm.xlu0 %875, %v852
    %v877 = vpop.permute.xlu0 %876
    %880 = vset.pattern.permute.xlu0 5
    %881 = vperm.xlu0 %880, %v853
    %v882 = vpop.permute.xlu0 %881
    %v884 = vlaneseq
    %v885 = vshrl.u32 %v884, 7
    %v886 = vsub.s32 5, %v885
    %v887 = vrot.slane %v873, %v886
    %v888 = vmul.f32 %v877, %v887
    %v889 = vmul.f32 %v882, %v887
    %v890 = vsub.f32 %v840, %v888
    %v891 = vsub.f32 %v841, %v889
    %v892 = vmax.f32 %v890, 1e-12
    %v893 = vrsqrt.pop %v892
    %vm894 = vcmp.ge.s32.totalorder %v79, 6
    %vm895 = vcmp.ge.s32.totalorder %v80, 6
    %v896 = vlaneseq
    %v897 = vshrl.u32 %v896, 7
    %v898 = vsub.s32 6, %v897
    %v899 = vrot.slane %v893, %v898
    %v900 = vmul.f32 %v890, %v899
    %v901 = vmul.f32 %v891, %v899
    %v902 = vsel %vm894, %v900, 0.0
    %v903 = vsel %vm895, %v901, 0.0
    %v904 = vmul.f32 %v902, %v611
    %v905 = vmul.f32 %v903, %v611
    %908 = vrot.lane.b32.xlu0 %v904, 122
    %v909 = vpop.permute.xlu0 %908
    %910 = vrot.lane.b32.xlu0 %v905, 122
    %v911 = vpop.permute.xlu0 %910
    %v914 = vadd.f32 %v864, %v909
    %v915 = vadd.f32 %v865, %v911
    %vm916 = vcmp.gt.s32.totalorder %v82, 6
    %918 = vset.pattern.permute.xlu0 6
    %919 = vperm.xlu0 %918, %v893
    %v920 = vpop.permute.xlu0 %919
    %v922 = vmul.f32 %v890, %v920
    %v923 = vsel %vm916, %v922, 0.0
    %925 = vset.pattern.permute.xlu0 6
    %926 = vperm.xlu0 %925, %v902
    %v927 = vpop.permute.xlu0 %926
    %930 = vset.pattern.permute.xlu0 6
    %931 = vperm.xlu0 %930, %v903
    %v932 = vpop.permute.xlu0 %931
    %v934 = vlaneseq
    %v935 = vshrl.u32 %v934, 7
    %v936 = vsub.s32 6, %v935
    %v937 = vrot.slane %v923, %v936
    %v938 = vmul.f32 %v927, %v937
    %v939 = vmul.f32 %v932, %v937
    %v940 = vsub.f32 %v890, %v938
    %v941 = vsub.f32 %v891, %v939
    %v942 = vmax.f32 %v940, 1e-12
    %v943 = vrsqrt.pop %v942
    %vm944 = vcmp.ge.s32.totalorder %v79, 7
    %vm945 = vcmp.ge.s32.totalorder %v80, 7
    %v946 = vlaneseq
    %v947 = vshrl.u32 %v946, 7
    %v948 = vsub.s32 7, %v947
    %v949 = vrot.slane %v943, %v948
    %v950 = vmul.f32 %v940, %v949
    %v951 = vmul.f32 %v941, %v949
    %v952 = vsel %vm944, %v950, 0.0
    %v953 = vsel %vm945, %v951, 0.0
    %v954 = vmul.f32 %v952, %v611
    %v955 = vmul.f32 %v953, %v611
    %958 = vrot.lane.b32.xlu0 %v954, 121
    %v959 = vpop.permute.xlu0 %958
    %960 = vrot.lane.b32.xlu0 %v955, 121
    %v961 = vpop.permute.xlu0 %960
    %v964 = vadd.f32 %v914, %v959
    %v965 = vadd.f32 %v915, %v961
    %vm966 = vcmp.gt.s32.totalorder %v82, 7
    %968 = vset.pattern.permute.xlu0 7
    %969 = vperm.xlu0 %968, %v943
    %v970 = vpop.permute.xlu0 %969
    %v972 = vmul.f32 %v940, %v970
    %v973 = vsel %vm966, %v972, 0.0
    %975 = vset.pattern.permute.xlu0 7
    %976 = vperm.xlu0 %975, %v952
    %v977 = vpop.permute.xlu0 %976
    %980 = vset.pattern.permute.xlu0 7
    %981 = vperm.xlu0 %980, %v953
    %v982 = vpop.permute.xlu0 %981
    %v984 = vlaneseq
    %v985 = vshrl.u32 %v984, 7
    %v986 = vsub.s32 7, %v985
    %v987 = vrot.slane %v973, %v986
    %v988 = vmul.f32 %v977, %v987
    %v989 = vmul.f32 %v982, %v987
    %v990 = vsub.f32 %v940, %v988
    %v991 = vsub.f32 %v941, %v989
    %v992 = vmax.f32 %v991, 1e-12
    %v993 = vrsqrt.pop %v992
    %vm994 = vcmp.ge.s32.totalorder %v79, 8
    %vm995 = vcmp.ge.s32.totalorder %v80, 8
    %v996 = vlaneseq
    %v997 = vshrl.u32 %v996, 7
    %v998 = vsub.s32 0, %v997
    %v999 = vrot.slane %v993, %v998
    %v1000 = vmul.f32 %v990, %v999
    %v1001 = vmul.f32 %v991, %v999
    %v1002 = vsel %vm994, %v1000, 0.0
    %v1003 = vsel %vm995, %v1001, 0.0
    %v1004 = vmul.f32 %v1002, %v611
    %v1005 = vmul.f32 %v1003, %v611
    %1008 = vrot.lane.b32.xlu0 %v1004, 120
    %v1009 = vpop.permute.xlu0 %1008
    %1010 = vrot.lane.b32.xlu0 %v1005, 120
    %v1011 = vpop.permute.xlu0 %1010
    %v1014 = vadd.f32 %v964, %v1009
    %v1015 = vadd.f32 %v965, %v1011
    %vm1016 = vcmp.gt.s32.totalorder %v82, 8
    %1018 = vset.pattern.permute.xlu0 8
    %1019 = vperm.xlu0 %1018, %v993
    %v1020 = vpop.permute.xlu0 %1019
    %v1022 = vmul.f32 %v991, %v1020
    %v1023 = vsel %vm1016, %v1022, 0.0
    %1025 = vset.pattern.permute.xlu0 8
    %1026 = vperm.xlu0 %1025, %v1002
    %v1027 = vpop.permute.xlu0 %1026
    %1030 = vset.pattern.permute.xlu0 8
    %1031 = vperm.xlu0 %1030, %v1003
    %v1032 = vpop.permute.xlu0 %1031
    %v1034 = vlaneseq
    %v1035 = vshrl.u32 %v1034, 7
    %v1036 = vsub.s32 0, %v1035
    %v1037 = vrot.slane %v1023, %v1036
    %v1038 = vmul.f32 %v1027, %v1037
    %v1039 = vmul.f32 %v1032, %v1037
    %v1040 = vsub.f32 %v990, %v1038
    %v1041 = vsub.f32 %v991, %v1039
    %v1042 = vmax.f32 %v1041, 1e-12
    %v1043 = vrsqrt.pop %v1042
    %vm1044 = vcmp.ge.s32.totalorder %v79, 9
    %vm1045 = vcmp.ge.s32.totalorder %v80, 9
    %v1046 = vlaneseq
    %v1047 = vshrl.u32 %v1046, 7
    %v1048 = vsub.s32 1, %v1047
    %v1049 = vrot.slane %v1043, %v1048
    %v1050 = vmul.f32 %v1040, %v1049
    %v1051 = vmul.f32 %v1041, %v1049
    %v1052 = vsel %vm1044, %v1050, 0.0
    %v1053 = vsel %vm1045, %v1051, 0.0
    %v1054 = vmul.f32 %v1052, %v611
    %v1055 = vmul.f32 %v1053, %v611
    %1058 = vrot.lane.b32.xlu0 %v1054, 119
    %v1059 = vpop.permute.xlu0 %1058
    %1060 = vrot.lane.b32.xlu0 %v1055, 119
    %v1061 = vpop.permute.xlu0 %1060
    %v1064 = vadd.f32 %v1014, %v1059
    %v1065 = vadd.f32 %v1015, %v1061
    %vm1066 = vcmp.gt.s32.totalorder %v82, 9
    %1068 = vset.pattern.permute.xlu0 9
    %1069 = vperm.xlu0 %1068, %v1043
    %v1070 = vpop.permute.xlu0 %1069
    %v1072 = vmul.f32 %v1041, %v1070
    %v1073 = vsel %vm1066, %v1072, 0.0
    %1075 = vset.pattern.permute.xlu0 9
    %1076 = vperm.xlu0 %1075, %v1052
    %v1077 = vpop.permute.xlu0 %1076
    %1080 = vset.pattern.permute.xlu0 9
    %1081 = vperm.xlu0 %1080, %v1053
    %v1082 = vpop.permute.xlu0 %1081
    %v1084 = vlaneseq
    %v1085 = vshrl.u32 %v1084, 7
    %v1086 = vsub.s32 1, %v1085
    %v1087 = vrot.slane %v1073, %v1086
    %v1088 = vmul.f32 %v1077, %v1087
    %v1089 = vmul.f32 %v1082, %v1087
    %v1090 = vsub.f32 %v1040, %v1088
    %v1091 = vsub.f32 %v1041, %v1089
    %v1092 = vmax.f32 %v1091, 1e-12
    %v1093 = vrsqrt.pop %v1092
    %vm1094 = vcmp.ge.s32.totalorder %v79, 10
    %vm1095 = vcmp.ge.s32.totalorder %v80, 10
    %v1096 = vlaneseq
    %v1097 = vshrl.u32 %v1096, 7
    %v1098 = vsub.s32 2, %v1097
    %v1099 = vrot.slane %v1093, %v1098
    %v1100 = vmul.f32 %v1090, %v1099
    %v1101 = vmul.f32 %v1091, %v1099
    %v1102 = vsel %vm1094, %v1100, 0.0
    %v1103 = vsel %vm1095, %v1101, 0.0
    %v1104 = vmul.f32 %v1102, %v611
    %v1105 = vmul.f32 %v1103, %v611
    %1108 = vrot.lane.b32.xlu0 %v1104, 118
    %v1109 = vpop.permute.xlu0 %1108
    %1110 = vrot.lane.b32.xlu0 %v1105, 118
    %v1111 = vpop.permute.xlu0 %1110
    %v1114 = vadd.f32 %v1064, %v1109
    %v1115 = vadd.f32 %v1065, %v1111
    %vm1116 = vcmp.gt.s32.totalorder %v82, 10
    %1118 = vset.pattern.permute.xlu0 10
    %1119 = vperm.xlu0 %1118, %v1093
    %v1120 = vpop.permute.xlu0 %1119
    %v1122 = vmul.f32 %v1091, %v1120
    %v1123 = vsel %vm1116, %v1122, 0.0
    %1125 = vset.pattern.permute.xlu0 10
    %1126 = vperm.xlu0 %1125, %v1102
    %v1127 = vpop.permute.xlu0 %1126
    %1130 = vset.pattern.permute.xlu0 10
    %1131 = vperm.xlu0 %1130, %v1103
    %v1132 = vpop.permute.xlu0 %1131
    %v1134 = vlaneseq
    %v1135 = vshrl.u32 %v1134, 7
    %v1136 = vsub.s32 2, %v1135
    %v1137 = vrot.slane %v1123, %v1136
    %v1138 = vmul.f32 %v1127, %v1137
    %v1139 = vmul.f32 %v1132, %v1137
    %v1140 = vsub.f32 %v1090, %v1138
    %v1141 = vsub.f32 %v1091, %v1139
    %v1142 = vmax.f32 %v1141, 1e-12
    %v1143 = vrsqrt.pop %v1142
    %vm1144 = vcmp.ge.s32.totalorder %v79, 11
    %vm1145 = vcmp.ge.s32.totalorder %v80, 11
    %v1146 = vlaneseq
    %v1147 = vshrl.u32 %v1146, 7
    %v1148 = vsub.s32 3, %v1147
    %v1149 = vrot.slane %v1143, %v1148
    %v1150 = vmul.f32 %v1140, %v1149
    %v1151 = vmul.f32 %v1141, %v1149
    %v1152 = vsel %vm1144, %v1150, 0.0
    %v1153 = vsel %vm1145, %v1151, 0.0
    %v1154 = vmul.f32 %v1152, %v611
    %v1155 = vmul.f32 %v1153, %v611
    %1158 = vrot.lane.b32.xlu0 %v1154, 117
    %v1159 = vpop.permute.xlu0 %1158
    %1160 = vrot.lane.b32.xlu0 %v1155, 117
    %v1161 = vpop.permute.xlu0 %1160
    %v1164 = vadd.f32 %v1114, %v1159
    %v1165 = vadd.f32 %v1115, %v1161
    %vm1166 = vcmp.gt.s32.totalorder %v82, 11
    %1168 = vset.pattern.permute.xlu0 11
    %1169 = vperm.xlu0 %1168, %v1143
    %v1170 = vpop.permute.xlu0 %1169
    %v1172 = vmul.f32 %v1141, %v1170
    %v1173 = vsel %vm1166, %v1172, 0.0
    %1175 = vset.pattern.permute.xlu0 11
    %1176 = vperm.xlu0 %1175, %v1152
    %v1177 = vpop.permute.xlu0 %1176
    %1180 = vset.pattern.permute.xlu0 11
    %1181 = vperm.xlu0 %1180, %v1153
    %v1182 = vpop.permute.xlu0 %1181
    %v1184 = vlaneseq
    %v1185 = vshrl.u32 %v1184, 7
    %v1186 = vsub.s32 3, %v1185
    %v1187 = vrot.slane %v1173, %v1186
    %v1188 = vmul.f32 %v1177, %v1187
    %v1189 = vmul.f32 %v1182, %v1187
    %v1190 = vsub.f32 %v1140, %v1188
    %v1191 = vsub.f32 %v1141, %v1189
    %v1192 = vmax.f32 %v1191, 1e-12
    %v1193 = vrsqrt.pop %v1192
    %vm1194 = vcmp.ge.s32.totalorder %v79, 12
    %vm1195 = vcmp.ge.s32.totalorder %v80, 12
    %v1196 = vlaneseq
    %v1197 = vshrl.u32 %v1196, 7
    %v1198 = vsub.s32 4, %v1197
    %v1199 = vrot.slane %v1193, %v1198
    %v1200 = vmul.f32 %v1190, %v1199
    %v1201 = vmul.f32 %v1191, %v1199
    %v1202 = vsel %vm1194, %v1200, 0.0
    %v1203 = vsel %vm1195, %v1201, 0.0
    %v1204 = vmul.f32 %v1202, %v611
    %v1205 = vmul.f32 %v1203, %v611
    %1208 = vrot.lane.b32.xlu0 %v1204, 116
    %v1209 = vpop.permute.xlu0 %1208
    %1210 = vrot.lane.b32.xlu0 %v1205, 116
    %v1211 = vpop.permute.xlu0 %1210
    %v1214 = vadd.f32 %v1164, %v1209
    %v1215 = vadd.f32 %v1165, %v1211
    %vm1216 = vcmp.gt.s32.totalorder %v82, 12
    %1218 = vset.pattern.permute.xlu0 12
    %1219 = vperm.xlu0 %1218, %v1193
    %v1220 = vpop.permute.xlu0 %1219
    %v1222 = vmul.f32 %v1191, %v1220
    %v1223 = vsel %vm1216, %v1222, 0.0
    %1225 = vset.pattern.permute.xlu0 12
    %1226 = vperm.xlu0 %1225, %v1202
    %v1227 = vpop.permute.xlu0 %1226
    %1230 = vset.pattern.permute.xlu0 12
    %1231 = vperm.xlu0 %1230, %v1203
    %v1232 = vpop.permute.xlu0 %1231
    %v1234 = vlaneseq
    %v1235 = vshrl.u32 %v1234, 7
    %v1236 = vsub.s32 4, %v1235
    %v1237 = vrot.slane %v1223, %v1236
    %v1238 = vmul.f32 %v1227, %v1237
    %v1239 = vmul.f32 %v1232, %v1237
    %v1240 = vsub.f32 %v1190, %v1238
    %v1241 = vsub.f32 %v1191, %v1239
    %v1242 = vmax.f32 %v1241, 1e-12
    %v1243 = vrsqrt.pop %v1242
    %vm1244 = vcmp.ge.s32.totalorder %v79, 13
    %vm1245 = vcmp.ge.s32.totalorder %v80, 13
    %v1246 = vlaneseq
    %v1247 = vshrl.u32 %v1246, 7
    %v1248 = vsub.s32 5, %v1247
    %v1249 = vrot.slane %v1243, %v1248
    %v1250 = vmul.f32 %v1240, %v1249
    %v1251 = vmul.f32 %v1241, %v1249
    %v1252 = vsel %vm1244, %v1250, 0.0
    %v1253 = vsel %vm1245, %v1251, 0.0
    %v1254 = vmul.f32 %v1252, %v611
    %v1255 = vmul.f32 %v1253, %v611
    %1258 = vrot.lane.b32.xlu0 %v1254, 115
    %v1259 = vpop.permute.xlu0 %1258
    %1260 = vrot.lane.b32.xlu0 %v1255, 115
    %v1261 = vpop.permute.xlu0 %1260
    %v1264 = vadd.f32 %v1214, %v1259
    %v1265 = vadd.f32 %v1215, %v1261
    %vm1266 = vcmp.gt.s32.totalorder %v82, 13
    %1268 = vset.pattern.permute.xlu0 13
    %1269 = vperm.xlu0 %1268, %v1243
    %v1270 = vpop.permute.xlu0 %1269
    %v1272 = vmul.f32 %v1241, %v1270
    %v1273 = vsel %vm1266, %v1272, 0.0
    %1275 = vset.pattern.permute.xlu0 13
    %1276 = vperm.xlu0 %1275, %v1252
    %v1277 = vpop.permute.xlu0 %1276
    %1280 = vset.pattern.permute.xlu0 13
    %1281 = vperm.xlu0 %1280, %v1253
    %v1282 = vpop.permute.xlu0 %1281
    %v1284 = vlaneseq
    %v1285 = vshrl.u32 %v1284, 7
    %v1286 = vsub.s32 5, %v1285
    %v1287 = vrot.slane %v1273, %v1286
    %v1288 = vmul.f32 %v1277, %v1287
    %v1289 = vmul.f32 %v1282, %v1287
    %v1290 = vsub.f32 %v1240, %v1288
    %v1291 = vsub.f32 %v1241, %v1289
    %v1292 = vmax.f32 %v1291, 1e-12
    %v1293 = vrsqrt.pop %v1292
    %vm1294 = vcmp.ge.s32.totalorder %v79, 14
    %vm1295 = vcmp.ge.s32.totalorder %v80, 14
    %v1296 = vlaneseq
    %v1297 = vshrl.u32 %v1296, 7
    %v1298 = vsub.s32 6, %v1297
    %v1299 = vrot.slane %v1293, %v1298
    %v1300 = vmul.f32 %v1290, %v1299
    %v1301 = vmul.f32 %v1291, %v1299
    %v1302 = vsel %vm1294, %v1300, 0.0
    %v1303 = vsel %vm1295, %v1301, 0.0
    %v1304 = vmul.f32 %v1302, %v611
    %v1305 = vmul.f32 %v1303, %v611
    %1308 = vrot.lane.b32.xlu0 %v1304, 114
    %v1309 = vpop.permute.xlu0 %1308
    %1310 = vrot.lane.b32.xlu0 %v1305, 114
    %v1311 = vpop.permute.xlu0 %1310
    %v1314 = vadd.f32 %v1264, %v1309
    %v1315 = vadd.f32 %v1265, %v1311
    %vm1316 = vcmp.gt.s32.totalorder %v82, 14
    %1318 = vset.pattern.permute.xlu0 14
    %1319 = vperm.xlu0 %1318, %v1293
    %v1320 = vpop.permute.xlu0 %1319
    %v1322 = vmul.f32 %v1291, %v1320
    %v1323 = vsel %vm1316, %v1322, 0.0
    %1325 = vset.pattern.permute.xlu0 14
    %1326 = vperm.xlu0 %1325, %v1302
    %v1327 = vpop.permute.xlu0 %1326
    %1330 = vset.pattern.permute.xlu0 14
    %1331 = vperm.xlu0 %1330, %v1303
    %v1332 = vpop.permute.xlu0 %1331
    %v1334 = vlaneseq
    %v1335 = vshrl.u32 %v1334, 7
    %v1336 = vsub.s32 6, %v1335
    %v1337 = vrot.slane %v1323, %v1336
    %v1338 = vmul.f32 %v1327, %v1337
    %v1339 = vmul.f32 %v1332, %v1337
    %v1340 = vsub.f32 %v1290, %v1338
    %v1341 = vsub.f32 %v1291, %v1339
    %v1342 = vmax.f32 %v1341, 1e-12
    %v1343 = vrsqrt.pop %v1342
    %vm1344 = vcmp.ge.s32.totalorder %v79, 15
    %vm1345 = vcmp.ge.s32.totalorder %v80, 15
    %v1346 = vlaneseq
    %v1347 = vshrl.u32 %v1346, 7
    %v1348 = vsub.s32 7, %v1347
    %v1349 = vrot.slane %v1343, %v1348
    %v1350 = vmul.f32 %v1340, %v1349
    %v1351 = vmul.f32 %v1341, %v1349
    %v1352 = vsel %vm1344, %v1350, 0.0
    %v1353 = vsel %vm1345, %v1351, 0.0
    %v1354 = vmul.f32 %v1352, %v611
    %v1355 = vmul.f32 %v1353, %v611
    %1358 = vrot.lane.b32.xlu0 %v1354, 113
    %v1359 = vpop.permute.xlu0 %1358
    %1360 = vrot.lane.b32.xlu0 %v1355, 113
    %v1361 = vpop.permute.xlu0 %1360
    %v1364 = vadd.f32 %v1314, %v1359
    %v1365 = vadd.f32 %v1315, %v1361
    %v1366 = vlaneseq
    %v1367 = vshrl.u32 %v1366, 7
    %v1368 = vsub.s32 0, %v1367
    %v1369 = vrot.slane %v473, %v1368
    %v1370 = vsel %vm83, %v1369, 0.0
    %v1371 = vsel %vm84, %v1369, 0.0
    %v1372 = vsel %vm295, %v1370, 0.0
    %1373 = vadd.xlane.f32.xlu0 %v1372
    %v1374 = vpop.xlane.xlu0 %1373
    %v1375 = vsel %vm295, %v1371, 0.0
    %1376 = vadd.xlane.f32.xlu0 %v1375
    %v1377 = vpop.xlane.xlu0 %1376
    %v1378 = vadd.f32 %v1374, %v1364
    %v1379 = vadd.f32 %v1377, %v1365
    %1381 = vset.pattern.permute.xlu0 0
    %1382 = vperm.xlu0 %1381, %v1378
    %v1383 = vpop.permute.xlu0 %1382
    %1386 = vset.pattern.permute.xlu0 0
    %1387 = vperm.xlu0 %1386, %v1379
    %v1388 = vpop.permute.xlu0 %1387
    %v1390 = vlaneseq
    %v1391 = vshrl.u32 %v1390, 7
    %v1392 = vsub.s32 0, %v1391
    %v1393 = vrot.slane %v594, %v1392
    %v1394 = vmul.f32 %v1383, %v1393
    %v1395 = vmul.f32 %v1388, %v1393
    %v1396 = vlaneseq
    %v1397 = vshrl.u32 %v1396, 7
    %v1398 = vsub.s32 0, %v1397
    %v1399 = vrot.slane %v595, %v1398
    %v1400 = vadd.f32 %v1394, %v1399
    %v1401 = vadd.f32 %v1395, %v1399
    %s1402 = sld [smem:[#allocation9 + $0x1]]
    %v1403 = vld [vmem:[#allocation6] sm:$0xff]
    %v1404 = vld [vmem:[#allocation6 + $0x8] sm:$0xff]
    %v1405 = vld [vmem:[#allocation6 + $0x10] sm:$0xff]
    %v1406 = vld [vmem:[#allocation6 + $0x18] sm:$0xff]
    %v1407 = vld [vmem:[#allocation6 + $0x20] sm:$0xff]
    %v1408 = vld [vmem:[#allocation6 + $0x28] sm:$0xff]
    %v1409 = vld [vmem:[#allocation6 + $0x30] sm:$0xff]
    %v1410 = vld [vmem:[#allocation6 + $0x38] sm:$0xff]
    %v1411 = vld [vmem:[#allocation6 + $0x40] sm:$0x1]
    %v1412 = vld [vmem:[#allocation6 + $0x41] sm:$0x1]
    %v1413 = vlaneseq
    %v1414 = vshrl.u32 %v1413, 7
    %v1415 = vsub.s32 0, %v1414
    %v1416 = vrot.slane %v1412, %v1415
    %v1417 = vmul.f32 %v1400, %v1416
    %v1418 = vmul.f32 %v1401, %v1416
    %v1419 = vmul.f32 %v1417, %v1417
    %v1420 = vmul.f32 %v1418, %v1418
    %vm1421 = vcmask 31744
    %v1422 = vsel %vm1421, %v1419, 0.0
    %1423 = vadd.xlane.f32.xlu0 %v1422
    %v1424 = vpop.xlane.xlu0 %1423
    %v1425 = vsel %vm1421, %v1420, 0.0
    %1426 = vadd.xlane.f32.xlu0 %v1425
    %v1427 = vpop.xlane.xlu0 %1426
    %v1429 = vsel %vm1421, %v1403, 0
    %v1432 = vsel %vm1421, %v1404, 0
    %v1435 = vsel %vm1421, %v1405, 0
    %v1438 = vsel %vm1421, %v1406, 0
    %v1441 = vsel %vm1421, %v1417, 0
    %v1444 = vsel %vm1421, %v1418, 0
    %1446 = vmatprep.subr.mxu0 0.0
    %1447 = vmatpush1.xpose.msra.mxu0 %v1441
    %1448 = vmatprep.subr.mxu0 0.0
    %1449 = vmatpush1.xpose.msra.mxu0 %v1444
    %1450 = vmatprep.subr.mxu0 0.0
    %1451 = vmatpush1.xpose.msra.mxu0 0.0
    %1452 = vmatprep.subr.mxu0 0.0
    %1453 = vmatpush1.xpose.msra.mxu0 0.0
    %1454 = vmatprep.subr.mxu0 0.0
    %1455 = vmatpush1.xpose.msra.mxu0 0.0
    %1456 = vmatprep.subr.mxu0 0.0
    %1457 = vmatpush1.xpose.msra.mxu0 0.0
    %1458 = vmatprep.subr.mxu0 0.0
    %1459 = vmatpush1.xpose.msra.mxu0 0.0
    %1460 = vmatprep.subr.mxu0 0.0
    %1461 = vmatpush1.xpose.msra.mxu0 0.0
    %1462 = vmatprep.subr.mxu0 0.0
    %1463 = vmatpush1.xpose.msra.mxu0 0.0
    %1464 = vmatprep.subr.mxu0 0.0
    %1465 = vmatpush1.xpose.msra.mxu0 0.0
    %1466 = vmatprep.subr.mxu0 0.0
    %1467 = vmatpush1.xpose.msra.mxu0 0.0
    %1468 = vmatprep.subr.mxu0 0.0
    %1469 = vmatpush1.xpose.msra.mxu0 0.0
    %1470 = vmatprep.subr.mxu0 0.0
    %1471 = vmatpush1.xpose.msra.mxu0 0.0
    %1472 = vmatprep.subr.mxu0 0.0
    %1473 = vmatpush1.xpose.msra.mxu0 0.0
    %1474 = vmatprep.subr.mxu0 0.0
    %1475 = vmatpush1.xpose.msra.mxu0 0.0
    %1476 = vmatprep.subr.mxu0 0.0
    %1477 = vmatpush1.xpose.msra.mxu0 0.0
    %1478 = vmatprep.subr.mxu0 0.0
    %1479 = vmatpush1.xpose.msra.mxu0 0.0
    %1480 = vmatprep.subr.mxu0 0.0
    %1481 = vmatpush1.xpose.msra.mxu0 0.0
    %1482 = vmatprep.subr.mxu0 0.0
    %1483 = vmatpush1.xpose.msra.mxu0 0.0
    %1484 = vmatprep.subr.mxu0 0.0
    %1485 = vmatpush1.xpose.msra.mxu0 0.0
    %1486 = vmatprep.subr.mxu0 0.0
    %1487 = vmatpush1.xpose.msra.mxu0 0.0
    %1488 = vmatprep.subr.mxu0 0.0
    %1489 = vmatpush1.xpose.msra.mxu0 0.0
    %1490 = vmatprep.subr.mxu0 0.0
    %1491 = vmatpush1.xpose.msra.mxu0 0.0
    %1492 = vmatprep.subr.mxu0 0.0
    %1493 = vmatpush1.xpose.msra.mxu0 0.0
    %1494 = vmatprep.subr.mxu0 0.0
    %1495 = vmatpush1.xpose.msra.mxu0 0.0
    %1496 = vmatprep.subr.mxu0 0.0
    %1497 = vmatpush1.xpose.msra.mxu0 0.0
    %1498 = vmatprep.subr.mxu0 0.0
    %1499 = vmatpush1.xpose.msra.mxu0 0.0
    %1500 = vmatprep.subr.mxu0 0.0
    %1501 = vmatpush1.xpose.msra.mxu0 0.0
    %1502 = vmatprep.subr.mxu0 0.0
    %1503 = vmatpush1.xpose.msra.mxu0 0.0
    %1504 = vmatprep.subr.mxu0 0.0
    %1505 = vmatpush1.xpose.msra.mxu0 0.0
    %1506 = vmatprep.subr.mxu0 0.0
    %1507 = vmatpush1.xpose.msra.mxu0 0.0
    %1508 = vmatprep.subr.mxu0 0.0
    %1509 = vmatpush1.xpose.msra.mxu0 0.0
    %1510 = vmatprep.mubr.f32.mxu0 0.0
    %1511 = vmatmul.mubr.f32.gmra.mrb[0].mxu0 %v1429
    %v1512 = vpop.f32.mrb[0].mxu0
    %v1513 = vadd.f32 0.0, %v1512
    %v1514 = vpop.f32.mrb[0].mxu0
    %1515 = vmatprep.mubr.f32.mxu0 0.0
    %1516 = vmatmul.mubr.f32.gmra.mrb[0].mxu0 %v1432
    %v1517 = vpop.f32.mrb[0].mxu0
    %v1518 = vadd.f32 0.0, %v1517
    %v1519 = vpop.f32.mrb[0].mxu0
    %1520 = vmatprep.mubr.f32.mxu0 0.0
    %1521 = vmatmul.mubr.f32.gmra.mrb[0].mxu0 %v1435
    %v1522 = vpop.f32.mrb[0].mxu0
    %v1523 = vadd.f32 0.0, %v1522
    %v1524 = vpop.f32.mrb[0].mxu0
    %1525 = vmatprep.mubr.f32.mxu0 0.0
    %1526 = vmatmul.mubr.f32.gmra.mrb[0].mxu0 %v1438
    %v1527 = vpop.f32.mrb[0].mxu0
    %v1528 = vadd.f32 0.0, %v1527
    %v1529 = vpop.f32.mrb[0].mxu0
    %1530 = vdwg.mxu0
    %1531 = vmatprep.subr.mxu0 0.0
    %1532 = vmatpush1.xpose.msra.mxu0 %v1441
    %1533 = vmatprep.subr.mxu0 0.0
    %1534 = vmatpush1.xpose.msra.mxu0 %v1444
    %1535 = vmatprep.subr.mxu0 0.0
    %1536 = vmatpush1.xpose.msra.mxu0 0.0
    %1537 = vmatprep.subr.mxu0 0.0
    %1538 = vmatpush1.xpose.msra.mxu0 0.0
    %1539 = vmatprep.subr.mxu0 0.0
    %1540 = vmatpush1.xpose.msra.mxu0 0.0
    %1541 = vmatprep.subr.mxu0 0.0
    %1542 = vmatpush1.xpose.msra.mxu0 0.0
    %1543 = vmatprep.subr.mxu0 0.0
    %1544 = vmatpush1.xpose.msra.mxu0 0.0
    %1545 = vmatprep.subr.mxu0 0.0
    %1546 = vmatpush1.xpose.msra.mxu0 0.0
    %1547 = vmatprep.subr.mxu0 0.0
    %1548 = vmatpush1.xpose.msra.mxu0 0.0
    %1549 = vmatprep.subr.mxu0 0.0
    %1550 = vmatpush1.xpose.msra.mxu0 0.0
    %1551 = vmatprep.subr.mxu0 0.0
    %1552 = vmatpush1.xpose.msra.mxu0 0.0
    %1553 = vmatprep.subr.mxu0 0.0
    %1554 = vmatpush1.xpose.msra.mxu0 0.0
    %1555 = vmatprep.subr.mxu0 0.0
    %1556 = vmatpush1.xpose.msra.mxu0 0.0
    %1557 = vmatprep.subr.mxu0 0.0
    %1558 = vmatpush1.xpose.msra.mxu0 0.0
    %1559 = vmatprep.subr.mxu0 0.0
    %1560 = vmatpush1.xpose.msra.mxu0 0.0
    %1561 = vmatprep.subr.mxu0 0.0
    %1562 = vmatpush1.xpose.msra.mxu0 0.0
    %1563 = vmatprep.subr.mxu0 0.0
    %1564 = vmatpush1.xpose.msra.mxu0 0.0
    %1565 = vmatprep.subr.mxu0 0.0
    %1566 = vmatpush1.xpose.msra.mxu0 0.0
    %1567 = vmatprep.subr.mxu0 0.0
    %1568 = vmatpush1.xpose.msra.mxu0 0.0
    %1569 = vmatprep.subr.mxu0 0.0
    %1570 = vmatpush1.xpose.msra.mxu0 0.0
    %1571 = vmatprep.subr.mxu0 0.0
    %1572 = vmatpush1.xpose.msra.mxu0 0.0
    %1573 = vmatprep.subr.mxu0 0.0
    %1574 = vmatpush1.xpose.msra.mxu0 0.0
    %1575 = vmatprep.subr.mxu0 0.0
    %1576 = vmatpush1.xpose.msra.mxu0 0.0
    %1577 = vmatprep.subr.mxu0 0.0
    %1578 = vmatpush1.xpose.msra.mxu0 0.0
    %1579 = vmatprep.subr.mxu0 0.0
    %1580 = vmatpush1.xpose.msra.mxu0 0.0
    %1581 = vmatprep.subr.mxu0 0.0
    %1582 = vmatpush1.xpose.msra.mxu0 0.0
    %1583 = vmatprep.subr.mxu0 0.0
    %1584 = vmatpush1.xpose.msra.mxu0 0.0
    %1585 = vmatprep.subr.mxu0 0.0
    %1586 = vmatpush1.xpose.msra.mxu0 0.0
    %1587 = vmatprep.subr.mxu0 0.0
    %1588 = vmatpush1.xpose.msra.mxu0 0.0
    %1589 = vmatprep.subr.mxu0 0.0
    %1590 = vmatpush1.xpose.msra.mxu0 0.0
    %1591 = vmatprep.subr.mxu0 0.0
    %1592 = vmatpush1.xpose.msra.mxu0 0.0
    %1593 = vmatprep.subr.mxu0 0.0
    %1594 = vmatpush1.xpose.msra.mxu0 0.0
    %1595 = vmatprep.mubr.f32.mxu0 0.0
    %1596 = vmatmul.mubr.f32.gmra.mrb[0].mxu0 %v1441
    %v1597 = vpop.f32.mrb[0].mxu0
    %v1598 = vadd.f32 0.0, %v1597
    %v1599 = vpop.f32.mrb[0].mxu0
    %1600 = vmatprep.mubr.f32.mxu0 0.0
    %1601 = vmatmul.mubr.f32.gmra.mrb[0].mxu0 %v1444
    %v1602 = vpop.f32.mrb[0].mxu0
    %v1603 = vadd.f32 0.0, %v1602
    %v1604 = vpop.f32.mrb[0].mxu0
    %1605 = vdwg.mxu0
    %v1606 = vsel %vm83, %v1598, 0.0
    %v1607 = vsel %vm84, %v1603, 0.0
    %v1608 = vsel %vm295, %v1606, 0.0
    %v1609 = vsel %vm295, %v1607, 0.0
    %v1610 = vadd.f32 %v1608, %v1609
    %v1611 = vrot.slane %v1610, 4
    %v1612 = vadd.f32 %v1610, %v1611
    %v1613 = vrot.slane %v1612, 2
    %v1614 = vadd.f32 %v1612, %v1613
    %v1615 = vrot.slane %v1614, 1
    %v1616 = vadd.f32 %v1614, %v1615
    %1617 = vset.pattern.permute.xlu0 4
    %1618 = vperm.xlu0 %1617, %v1403
    %v1619 = vpop.permute.xlu0 %1618
    %1621 = vset.pattern.permute.xlu0 4
    %1622 = vperm.xlu0 %1621, %v1404
    %v1623 = vpop.permute.xlu0 %1622
    %1625 = vset.pattern.permute.xlu0 4
    %1626 = vperm.xlu0 %1625, %v1405
    %v1627 = vpop.permute.xlu0 %1626
    %1629 = vset.pattern.permute.xlu0 4
    %1630 = vperm.xlu0 %1629, %v1406
    %v1631 = vpop.permute.xlu0 %1630
    %v1633 = vadd.f32 %v1619, %v1616
    %v1634 = vadd.f32 %v1623, %v1616
    %v1635 = vadd.f32 %v1627, %v1616
    %v1636 = vadd.f32 %v1631, %v1616
    %v1637 = vmul.f32 %v1513, 2.0
    %v1638 = vmul.f32 %v1518, 2.0
    %v1639 = vmul.f32 %v1523, 2.0
    %v1640 = vmul.f32 %v1528, 2.0
    %v1641 = vsub.f32 %v1633, %v1637
    %v1642 = vsub.f32 %v1634, %v1638
    %v1643 = vsub.f32 %v1635, %v1639
    %v1644 = vsub.f32 %v1636, %v1640
    %v1645 = vmax.f32 %v1641, 0.0
    %v1646 = vmax.f32 %v1642, 0.0
    %v1647 = vmax.f32 %v1643, 0.0
    %v1648 = vmax.f32 %v1644, 0.0
    %v1649 = vmul.f32 %v1645, -0.5
    %v1650 = vmul.f32 %v1646, -0.5
    %v1651 = vmul.f32 %v1647, -0.5
    %v1652 = vmul.f32 %v1648, -0.5
    %v1653 = vmul.f32 %v1649, 1.442695
    %v1654 = vpow.pop %v1653
    %v1655 = vmul.f32 %v1650, 1.442695
    %v1656 = vpow.pop %v1655
    %v1657 = vmul.f32 %v1651, 1.442695
    %v1658 = vpow.pop %v1657
    %v1659 = vmul.f32 %v1652, 1.442695
    %v1660 = vpow.pop %v1659
    %v1661 = vstv %s1402
    %v1662 = vmul.f32 %v1661, %v1654
    %v1663 = vmul.f32 %v1661, %v1656
    %v1664 = vmul.f32 %v1661, %v1658
    %v1665 = vmul.f32 %v1661, %v1660
    %v1666 = vadd.f32 %v1424, %v1616
    %v1667 = vadd.f32 %v1427, %v1616
    %v1668 = vmul.f32 %v1598, 2.0
    %v1669 = vmul.f32 %v1603, 2.0
    %v1670 = vsub.f32 %v1666, %v1668
    %v1671 = vsub.f32 %v1667, %v1669
    %v1672 = vmax.f32 %v1670, 0.0
    %v1673 = vmax.f32 %v1671, 0.0
    %v1674 = vmul.f32 %v1672, -0.5
    %v1675 = vmul.f32 %v1673, -0.5
    %v1676 = vmul.f32 %v1674, 1.442695
    %v1677 = vpow.pop %v1676
    %v1678 = vmul.f32 %v1675, 1.442695
    %v1679 = vpow.pop %v1678
    %v1680 = vmul.f32 %v1661, %v1677
    %v1681 = vmul.f32 %v1661, %v1679
    %v1683 = vsel %vm370, %v1407, 0
    %v1686 = vsel %vm370, %v1408, 0
    %v1689 = vsel %vm370, %v1409, 0
    %v1692 = vsel %vm370, %v1410, 0
    %v1695 = vsel %vm370, %v1411, 0
    %1697 = vmatprep.subr.mxu0 0.0
    %1698 = vmatpush1.msra.mxu0 %v1662
    %1699 = vmatprep.subr.mxu0 0.0
    %1700 = vmatpush1.msra.mxu0 %v1663
    %1701 = vmatprep.subr.mxu0 0.0
    %1702 = vmatpush1.msra.mxu0 %v1664
    %1703 = vmatprep.subr.mxu0 0.0
    %1704 = vmatpush1.msra.mxu0 %v1665
    %1705 = vmatprep.subr.mxu0 0.0
    %1706 = vmatpush1.msra.mxu0 0.0
    %1707 = vmatprep.subr.mxu0 0.0
    %1708 = vmatpush1.msra.mxu0 0.0
    %1709 = vmatprep.subr.mxu0 0.0
    %1710 = vmatpush1.msra.mxu0 0.0
    %1711 = vmatprep.subr.mxu0 0.0
    %1712 = vmatpush1.msra.mxu0 0.0
    %1713 = vmatprep.subr.mxu0 0.0
    %1714 = vmatpush1.msra.mxu0 0.0
    %1715 = vmatprep.subr.mxu0 0.0
    %1716 = vmatpush1.msra.mxu0 0.0
    %1717 = vmatprep.subr.mxu0 0.0
    %1718 = vmatpush1.msra.mxu0 0.0
    %1719 = vmatprep.subr.mxu0 0.0
    %1720 = vmatpush1.msra.mxu0 0.0
    %1721 = vmatprep.subr.mxu0 0.0
    %1722 = vmatpush1.msra.mxu0 0.0
    %1723 = vmatprep.subr.mxu0 0.0
    %1724 = vmatpush1.msra.mxu0 0.0
    %1725 = vmatprep.subr.mxu0 0.0
    %1726 = vmatpush1.msra.mxu0 0.0
    %1727 = vmatprep.subr.mxu0 0.0
    %1728 = vmatpush1.msra.mxu0 0.0
    %1729 = vmatprep.subr.mxu0 0.0
    %1730 = vmatpush1.msra.mxu0 0.0
    %1731 = vmatprep.subr.mxu0 0.0
    %1732 = vmatpush1.msra.mxu0 0.0
    %1733 = vmatprep.subr.mxu0 0.0
    %1734 = vmatpush1.msra.mxu0 0.0
    %1735 = vmatprep.subr.mxu0 0.0
    %1736 = vmatpush1.msra.mxu0 0.0
    %1737 = vmatprep.subr.mxu0 0.0
    %1738 = vmatpush1.msra.mxu0 0.0
    %1739 = vmatprep.subr.mxu0 0.0
    %1740 = vmatpush1.msra.mxu0 0.0
    %1741 = vmatprep.subr.mxu0 0.0
    %1742 = vmatpush1.msra.mxu0 0.0
    %1743 = vmatprep.subr.mxu0 0.0
    %1744 = vmatpush1.msra.mxu0 0.0
    %1745 = vmatprep.subr.mxu0 0.0
    %1746 = vmatpush1.msra.mxu0 0.0
    %1747 = vmatprep.subr.mxu0 0.0
    %1748 = vmatpush1.msra.mxu0 0.0
    %1749 = vmatprep.subr.mxu0 0.0
    %1750 = vmatpush1.msra.mxu0 0.0
    %1751 = vmatprep.subr.mxu0 0.0
    %1752 = vmatpush1.msra.mxu0 0.0
    %1753 = vmatprep.subr.mxu0 0.0
    %1754 = vmatpush1.msra.mxu0 0.0
    %1755 = vmatprep.subr.mxu0 0.0
    %1756 = vmatpush1.msra.mxu0 0.0
    %1757 = vmatprep.subr.mxu0 0.0
    %1758 = vmatpush1.msra.mxu0 0.0
    %1759 = vmatprep.subr.mxu0 0.0
    %1760 = vmatpush1.msra.mxu0 0.0
    %1761 = vmatprep.mubr.f32.mxu0 0.0
    %1762 = vmatmul.mubr.f32.gmra.mrb[0].mxu0 %v1683
    %v1763 = vpop.f32.mrb[0].mxu0
    %v1764 = vadd.f32 0.0, %v1763
    %v1765 = vpop.f32.mrb[0].mxu0
    %1766 = vmatprep.mubr.f32.mxu0 0.0
    %1767 = vmatmul.mubr.f32.gmra.mrb[0].mxu0 %v1686
    %v1768 = vpop.f32.mrb[0].mxu0
    %v1769 = vadd.f32 0.0, %v1768
    %v1770 = vpop.f32.mrb[0].mxu0
    %1771 = vmatprep.mubr.f32.mxu0 0.0
    %1772 = vmatmul.mubr.f32.gmra.mrb[0].mxu0 %v1689
    %v1773 = vpop.f32.mrb[0].mxu0
    %v1774 = vadd.f32 0.0, %v1773
    %v1775 = vpop.f32.mrb[0].mxu0
    %1776 = vmatprep.mubr.f32.mxu0 0.0
    %1777 = vmatmul.mubr.f32.gmra.mrb[0].mxu0 %v1692
    %v1778 = vpop.f32.mrb[0].mxu0
    %v1779 = vadd.f32 0.0, %v1778
    %v1780 = vpop.f32.mrb[0].mxu0
    %1781 = vmatprep.mubr.f32.mxu0 0.0
    %1782 = vmatmul.mubr.f32.gmra.mrb[0].mxu0 %v1695
    %v1783 = vpop.f32.mrb[0].mxu0
    %v1784 = vadd.f32 0.0, %v1783
    %v1785 = vpop.f32.mrb[0].mxu0
    %1786 = vdwg.mxu0
    %1787 = vxpose.xlu0.b32.start [1/16] %v1662, 128
    %1788 = vxpose.xlu0.b32.cont [2/16] %v1663, 128
    %1789 = vxpose.xlu0.b32.cont [3/16] %v1664, 128
    %1790 = vxpose.xlu0.b32.cont [4/16] %v1665, 128
    %1791 = vxpose.xlu0.b32.cont [5/16] 0.0, 128
    %1792 = vxpose.xlu0.b32.cont [6/16] 0.0, 128
    %1793 = vxpose.xlu0.b32.cont [7/16] 0.0, 128
    %1794 = vxpose.xlu0.b32.cont [8/16] 0.0, 128
    %1795 = vxpose.xlu0.b32.cont [9/16] 0.0, 128
    %1796 = vxpose.xlu0.b32.cont [10/16] 0.0, 128
    %1797 = vxpose.xlu0.b32.cont [11/16] 0.0, 128
    %1798 = vxpose.xlu0.b32.cont [12/16] 0.0, 128
    %1799 = vxpose.xlu0.b32.cont [13/16] 0.0, 128
    %1800 = vxpose.xlu0.b32.cont [14/16] 0.0, 128
    %1801 = vxpose.xlu0.b32.cont [15/16] 0.0, 128
    %1802 = vxpose.xlu0.b32.end [16/16] 0.0, 128
    %v1803 = vpop.trf.xlu0
    %v1804 = vpop.trf.xlu0
    %v1805 = vpop.trf.xlu0
    %v1806 = vpop.trf.xlu0
    %v1807 = vpop.trf.xlu0
    %v1808 = vpop.trf.xlu0
    %v1809 = vpop.trf.xlu0
    %v1810 = vpop.trf.xlu0
    %v1811 = vpop.trf.xlu0
    %v1812 = vpop.trf.xlu0
    %v1813 = vpop.trf.xlu0
    %v1814 = vpop.trf.xlu0
    %v1815 = vpop.trf.xlu0
    %v1816 = vpop.trf.xlu0
    %v1817 = vpop.trf.xlu0
    %v1818 = vpop.trf.xlu0
    %v1820 = vsel %vm370, %v1803, 0
    %v1823 = vsel %vm370, %v1804, 0
    %1825 = vmatprep.subr.mxu0 0.0
    %1826 = vmatpush1.msra.mxu0 %v1764
    %1827 = vmatprep.subr.mxu0 0.0
    %1828 = vmatpush1.msra.mxu0 %v1769
    %1829 = vmatprep.subr.mxu0 0.0
    %1830 = vmatpush1.msra.mxu0 %v1774
    %1831 = vmatprep.subr.mxu0 0.0
    %1832 = vmatpush1.msra.mxu0 %v1779
    %1833 = vmatprep.subr.mxu0 0.0
    %1834 = vmatpush1.msra.mxu0 0.0
    %1835 = vmatprep.subr.mxu0 0.0
    %1836 = vmatpush1.msra.mxu0 0.0
    %1837 = vmatprep.subr.mxu0 0.0
    %1838 = vmatpush1.msra.mxu0 0.0
    %1839 = vmatprep.subr.mxu0 0.0
    %1840 = vmatpush1.msra.mxu0 0.0
    %1841 = vmatprep.subr.mxu0 0.0
    %1842 = vmatpush1.msra.mxu0 0.0
    %1843 = vmatprep.subr.mxu0 0.0
    %1844 = vmatpush1.msra.mxu0 0.0
    %1845 = vmatprep.subr.mxu0 0.0
    %1846 = vmatpush1.msra.mxu0 0.0
    %1847 = vmatprep.subr.mxu0 0.0
    %1848 = vmatpush1.msra.mxu0 0.0
    %1849 = vmatprep.subr.mxu0 0.0
    %1850 = vmatpush1.msra.mxu0 0.0
    %1851 = vmatprep.subr.mxu0 0.0
    %1852 = vmatpush1.msra.mxu0 0.0
    %1853 = vmatprep.subr.mxu0 0.0
    %1854 = vmatpush1.msra.mxu0 0.0
    %1855 = vmatprep.subr.mxu0 0.0
    %1856 = vmatpush1.msra.mxu0 0.0
    %1857 = vmatprep.subr.mxu0 0.0
    %1858 = vmatpush1.msra.mxu0 0.0
    %1859 = vmatprep.subr.mxu0 0.0
    %1860 = vmatpush1.msra.mxu0 0.0
    %1861 = vmatprep.subr.mxu0 0.0
    %1862 = vmatpush1.msra.mxu0 0.0
    %1863 = vmatprep.subr.mxu0 0.0
    %1864 = vmatpush1.msra.mxu0 0.0
    %1865 = vmatprep.subr.mxu0 0.0
    %1866 = vmatpush1.msra.mxu0 0.0
    %1867 = vmatprep.subr.mxu0 0.0
    %1868 = vmatpush1.msra.mxu0 0.0
    %1869 = vmatprep.subr.mxu0 0.0
    %1870 = vmatpush1.msra.mxu0 0.0
    %1871 = vmatprep.subr.mxu0 0.0
    %1872 = vmatpush1.msra.mxu0 0.0
    %1873 = vmatprep.subr.mxu0 0.0
    %1874 = vmatpush1.msra.mxu0 0.0
    %1875 = vmatprep.subr.mxu0 0.0
    %1876 = vmatpush1.msra.mxu0 0.0
    %1877 = vmatprep.subr.mxu0 0.0
    %1878 = vmatpush1.msra.mxu0 0.0
    %1879 = vmatprep.subr.mxu0 0.0
    %1880 = vmatpush1.msra.mxu0 0.0
    %1881 = vmatprep.subr.mxu0 0.0
    %1882 = vmatpush1.msra.mxu0 0.0
    %1883 = vmatprep.subr.mxu0 0.0
    %1884 = vmatpush1.msra.mxu0 0.0
    %1885 = vmatprep.subr.mxu0 0.0
    %1886 = vmatpush1.msra.mxu0 0.0
    %1887 = vmatprep.subr.mxu0 0.0
    %1888 = vmatpush1.msra.mxu0 0.0
    %1889 = vmatprep.mubr.f32.mxu0 0.0
    %1890 = vmatmul.mubr.f32.gmra.mrb[0].mxu0 %v1820
    %v1891 = vpop.f32.mrb[0].mxu0
    %v1892 = vadd.f32 0.0, %v1891
    %v1893 = vpop.f32.mrb[0].mxu0
    %1894 = vmatprep.mubr.f32.mxu0 0.0
    %1895 = vmatmul.mubr.f32.gmra.mrb[0].mxu0 %v1823
    %v1896 = vpop.f32.mrb[0].mxu0
    %v1897 = vadd.f32 0.0, %v1896
    %v1898 = vpop.f32.mrb[0].mxu0
    %1899 = vdwg.mxu0
    %v1900 = vadd.f32 %v1680, %v1892
    %v1901 = vadd.f32 %v1681, %v1897
    %v1902 = vadd.f32 %v1900, %v85
    %v1903 = vadd.f32 %v1901, %v86
    %v1904 = vld [vmem:[#allocation6 + $0x42] sm:$0x1]
    %v1905 = vld [vmem:[#allocation6 + $0x43] sm:$0x1]
    %v1906 = vld [vmem:[#allocation6 + $0x44] sm:$0x1]
    %v1907 = vmax.f32 %v1902, 1e-12
    %v1908 = vrsqrt.pop %v1907
    %v1909 = vlaneseq
    %v1910 = vshrl.u32 %v1909, 7
    %v1911 = vsub.s32 0, %v1910
    %v1912 = vrot.slane %v1908, %v1911
    %v1913 = vmul.f32 %v1902, %v1912
    %v1914 = vmul.f32 %v1903, %v1912
    %v1915 = vsel %vm598, %v1913, 0.0
    %v1916 = vsel %vm599, %v1914, 0.0
    %v1917 = vlaneseq
    %v1918 = vshrl.u32 %v1917, 7
    %v1919 = vsub.s32 0, %v1918
    %v1920 = vrot.slane %v1904, %v1919
    %v1921 = vmul.f32 %v1915, %v1920
    %v1922 = vmul.f32 %v1916, %v1920
    %v1923 = vadd.f32 %v1921, 0.0
    %v1924 = vadd.f32 %v1922, 0.0
    %1926 = vset.pattern.permute.xlu0 0
    %1927 = vperm.xlu0 %1926, %v1908
    %v1928 = vpop.permute.xlu0 %1927
    %v1930 = vmul.f32 %v1902, %v1928
    %v1931 = vsel %vm616, %v1930, 0.0
    %1933 = vset.pattern.permute.xlu0 0
    %1934 = vperm.xlu0 %1933, %v1915
    %v1935 = vpop.permute.xlu0 %1934
    %1938 = vset.pattern.permute.xlu0 0
    %1939 = vperm.xlu0 %1938, %v1916
    %v1940 = vpop.permute.xlu0 %1939
    %v1942 = vlaneseq
    %v1943 = vshrl.u32 %v1942, 7
    %v1944 = vsub.s32 0, %v1943
    %v1945 = vrot.slane %v1931, %v1944
    %v1946 = vmul.f32 %v1935, %v1945
    %v1947 = vmul.f32 %v1940, %v1945
    %v1948 = vsub.f32 %v1902, %v1946
    %v1949 = vsub.f32 %v1903, %v1947
    %v1950 = vmax.f32 %v1948, 1e-12
    %v1951 = vrsqrt.pop %v1950
    %v1952 = vlaneseq
    %v1953 = vshrl.u32 %v1952, 7
    %v1954 = vsub.s32 1, %v1953
    %v1955 = vrot.slane %v1951, %v1954
    %v1956 = vmul.f32 %v1948, %v1955
    %v1957 = vmul.f32 %v1949, %v1955
    %v1958 = vsel %vm644, %v1956, 0.0
    %v1959 = vsel %vm645, %v1957, 0.0
    %v1960 = vmul.f32 %v1958, %v1920
    %v1961 = vmul.f32 %v1959, %v1920
    %1964 = vrot.lane.b32.xlu0 %v1960, 127
    %v1965 = vpop.permute.xlu0 %1964
    %1966 = vrot.lane.b32.xlu0 %v1961, 127
    %v1967 = vpop.permute.xlu0 %1966
    %v1970 = vadd.f32 %v1923, %v1965
    %v1971 = vadd.f32 %v1924, %v1967
    %1973 = vset.pattern.permute.xlu0 1
    %1974 = vperm.xlu0 %1973, %v1951
    %v1975 = vpop.permute.xlu0 %1974
    %v1977 = vmul.f32 %v1948, %v1975
    %v1978 = vsel %vm666, %v1977, 0.0
    %1980 = vset.pattern.permute.xlu0 1
    %1981 = vperm.xlu0 %1980, %v1958
    %v1982 = vpop.permute.xlu0 %1981
    %1985 = vset.pattern.permute.xlu0 1
    %1986 = vperm.xlu0 %1985, %v1959
    %v1987 = vpop.permute.xlu0 %1986
    %v1989 = vlaneseq
    %v1990 = vshrl.u32 %v1989, 7
    %v1991 = vsub.s32 1, %v1990
    %v1992 = vrot.slane %v1978, %v1991
    %v1993 = vmul.f32 %v1982, %v1992
    %v1994 = vmul.f32 %v1987, %v1992
    %v1995 = vsub.f32 %v1948, %v1993
    %v1996 = vsub.f32 %v1949, %v1994
    %v1997 = vmax.f32 %v1995, 1e-12
    %v1998 = vrsqrt.pop %v1997
    %v1999 = vlaneseq
    %v2000 = vshrl.u32 %v1999, 7
    %v2001 = vsub.s32 2, %v2000
    %v2002 = vrot.slane %v1998, %v2001
    %v2003 = vmul.f32 %v1995, %v2002
    %v2004 = vmul.f32 %v1996, %v2002
    %v2005 = vsel %vm694, %v2003, 0.0
    %v2006 = vsel %vm695, %v2004, 0.0
    %v2007 = vmul.f32 %v2005, %v1920
    %v2008 = vmul.f32 %v2006, %v1920
    %2011 = vrot.lane.b32.xlu0 %v2007, 126
    %v2012 = vpop.permute.xlu0 %2011
    %2013 = vrot.lane.b32.xlu0 %v2008, 126
    %v2014 = vpop.permute.xlu0 %2013
    %v2017 = vadd.f32 %v1970, %v2012
    %v2018 = vadd.f32 %v1971, %v2014
    %2020 = vset.pattern.permute.xlu0 2
    %2021 = vperm.xlu0 %2020, %v1998
    %v2022 = vpop.permute.xlu0 %2021
    %v2024 = vmul.f32 %v1995, %v2022
    %v2025 = vsel %vm716, %v2024, 0.0
    %2027 = vset.pattern.permute.xlu0 2
    %2028 = vperm.xlu0 %2027, %v2005
    %v2029 = vpop.permute.xlu0 %2028
    %2032 = vset.pattern.permute.xlu0 2
    %2033 = vperm.xlu0 %2032, %v2006
    %v2034 = vpop.permute.xlu0 %2033
    %v2036 = vlaneseq
    %v2037 = vshrl.u32 %v2036, 7
    %v2038 = vsub.s32 2, %v2037
    %v2039 = vrot.slane %v2025, %v2038
    %v2040 = vmul.f32 %v2029, %v2039
    %v2041 = vmul.f32 %v2034, %v2039
    %v2042 = vsub.f32 %v1995, %v2040
    %v2043 = vsub.f32 %v1996, %v2041
    %v2044 = vmax.f32 %v2042, 1e-12
    %v2045 = vrsqrt.pop %v2044
    %v2046 = vlaneseq
    %v2047 = vshrl.u32 %v2046, 7
    %v2048 = vsub.s32 3, %v2047
    %v2049 = vrot.slane %v2045, %v2048
    %v2050 = vmul.f32 %v2042, %v2049
    %v2051 = vmul.f32 %v2043, %v2049
    %v2052 = vsel %vm744, %v2050, 0.0
    %v2053 = vsel %vm745, %v2051, 0.0
    %v2054 = vmul.f32 %v2052, %v1920
    %v2055 = vmul.f32 %v2053, %v1920
    %2058 = vrot.lane.b32.xlu0 %v2054, 125
    %v2059 = vpop.permute.xlu0 %2058
    %2060 = vrot.lane.b32.xlu0 %v2055, 125
    %v2061 = vpop.permute.xlu0 %2060
    %v2064 = vadd.f32 %v2017, %v2059
    %v2065 = vadd.f32 %v2018, %v2061
    %2067 = vset.pattern.permute.xlu0 3
    %2068 = vperm.xlu0 %2067, %v2045
    %v2069 = vpop.permute.xlu0 %2068
    %v2071 = vmul.f32 %v2042, %v2069
    %v2072 = vsel %vm766, %v2071, 0.0
    %2074 = vset.pattern.permute.xlu0 3
    %2075 = vperm.xlu0 %2074, %v2052
    %v2076 = vpop.permute.xlu0 %2075
    %2079 = vset.pattern.permute.xlu0 3
    %2080 = vperm.xlu0 %2079, %v2053
    %v2081 = vpop.permute.xlu0 %2080
    %v2083 = vlaneseq
    %v2084 = vshrl.u32 %v2083, 7
    %v2085 = vsub.s32 3, %v2084
    %v2086 = vrot.slane %v2072, %v2085
    %v2087 = vmul.f32 %v2076, %v2086
    %v2088 = vmul.f32 %v2081, %v2086
    %v2089 = vsub.f32 %v2042, %v2087
    %v2090 = vsub.f32 %v2043, %v2088
    %v2091 = vmax.f32 %v2089, 1e-12
    %v2092 = vrsqrt.pop %v2091
    %v2093 = vlaneseq
    %v2094 = vshrl.u32 %v2093, 7
    %v2095 = vsub.s32 4, %v2094
    %v2096 = vrot.slane %v2092, %v2095
    %v2097 = vmul.f32 %v2089, %v2096
    %v2098 = vmul.f32 %v2090, %v2096
    %v2099 = vsel %vm794, %v2097, 0.0
    %v2100 = vsel %vm795, %v2098, 0.0
    %v2101 = vmul.f32 %v2099, %v1920
    %v2102 = vmul.f32 %v2100, %v1920
    %2105 = vrot.lane.b32.xlu0 %v2101, 124
    %v2106 = vpop.permute.xlu0 %2105
    %2107 = vrot.lane.b32.xlu0 %v2102, 124
    %v2108 = vpop.permute.xlu0 %2107
    %v2111 = vadd.f32 %v2064, %v2106
    %v2112 = vadd.f32 %v2065, %v2108
    %2114 = vset.pattern.permute.xlu0 4
    %2115 = vperm.xlu0 %2114, %v2092
    %v2116 = vpop.permute.xlu0 %2115
    %v2118 = vmul.f32 %v2089, %v2116
    %v2119 = vsel %vm816, %v2118, 0.0
    %2121 = vset.pattern.permute.xlu0 4
    %2122 = vperm.xlu0 %2121, %v2099
    %v2123 = vpop.permute.xlu0 %2122
    %2126 = vset.pattern.permute.xlu0 4
    %2127 = vperm.xlu0 %2126, %v2100
    %v2128 = vpop.permute.xlu0 %2127
    %v2130 = vlaneseq
    %v2131 = vshrl.u32 %v2130, 7
    %v2132 = vsub.s32 4, %v2131
    %v2133 = vrot.slane %v2119, %v2132
    %v2134 = vmul.f32 %v2123, %v2133
    %v2135 = vmul.f32 %v2128, %v2133
    %v2136 = vsub.f32 %v2089, %v2134
    %v2137 = vsub.f32 %v2090, %v2135
    %v2138 = vmax.f32 %v2136, 1e-12
    %v2139 = vrsqrt.pop %v2138
    %v2140 = vlaneseq
    %v2141 = vshrl.u32 %v2140, 7
    %v2142 = vsub.s32 5, %v2141
    %v2143 = vrot.slane %v2139, %v2142
    %v2144 = vmul.f32 %v2136, %v2143
    %v2145 = vmul.f32 %v2137, %v2143
    %v2146 = vsel %vm844, %v2144, 0.0
    %v2147 = vsel %vm845, %v2145, 0.0
    %v2148 = vmul.f32 %v2146, %v1920
    %v2149 = vmul.f32 %v2147, %v1920
    %2152 = vrot.lane.b32.xlu0 %v2148, 123
    %v2153 = vpop.permute.xlu0 %2152
    %2154 = vrot.lane.b32.xlu0 %v2149, 123
    %v2155 = vpop.permute.xlu0 %2154
    %v2158 = vadd.f32 %v2111, %v2153
    %v2159 = vadd.f32 %v2112, %v2155
    %2161 = vset.pattern.permute.xlu0 5
    %2162 = vperm.xlu0 %2161, %v2139
    %v2163 = vpop.permute.xlu0 %2162
    %v2165 = vmul.f32 %v2136, %v2163
    %v2166 = vsel %vm866, %v2165, 0.0
    %2168 = vset.pattern.permute.xlu0 5
    %2169 = vperm.xlu0 %2168, %v2146
    %v2170 = vpop.permute.xlu0 %2169
    %2173 = vset.pattern.permute.xlu0 5
    %2174 = vperm.xlu0 %2173, %v2147
    %v2175 = vpop.permute.xlu0 %2174
    %v2177 = vlaneseq
    %v2178 = vshrl.u32 %v2177, 7
    %v2179 = vsub.s32 5, %v2178
    %v2180 = vrot.slane %v2166, %v2179
    %v2181 = vmul.f32 %v2170, %v2180
    %v2182 = vmul.f32 %v2175, %v2180
    %v2183 = vsub.f32 %v2136, %v2181
    %v2184 = vsub.f32 %v2137, %v2182
    %v2185 = vmax.f32 %v2183, 1e-12
    %v2186 = vrsqrt.pop %v2185
    %v2187 = vlaneseq
    %v2188 = vshrl.u32 %v2187, 7
    %v2189 = vsub.s32 6, %v2188
    %v2190 = vrot.slane %v2186, %v2189
    %v2191 = vmul.f32 %v2183, %v2190
    %v2192 = vmul.f32 %v2184, %v2190
    %v2193 = vsel %vm894, %v2191, 0.0
    %v2194 = vsel %vm895, %v2192, 0.0
    %v2195 = vmul.f32 %v2193, %v1920
    %v2196 = vmul.f32 %v2194, %v1920
    %2199 = vrot.lane.b32.xlu0 %v2195, 122
    %v2200 = vpop.permute.xlu0 %2199
    %2201 = vrot.lane.b32.xlu0 %v2196, 122
    %v2202 = vpop.permute.xlu0 %2201
    %v2205 = vadd.f32 %v2158, %v2200
    %v2206 = vadd.f32 %v2159, %v2202
    %2208 = vset.pattern.permute.xlu0 6
    %2209 = vperm.xlu0 %2208, %v2186
    %v2210 = vpop.permute.xlu0 %2209
    %v2212 = vmul.f32 %v2183, %v2210
    %v2213 = vsel %vm916, %v2212, 0.0
    %2215 = vset.pattern.permute.xlu0 6
    %2216 = vperm.xlu0 %2215, %v2193
    %v2217 = vpop.permute.xlu0 %2216
    %2220 = vset.pattern.permute.xlu0 6
    %2221 = vperm.xlu0 %2220, %v2194
    %v2222 = vpop.permute.xlu0 %2221
    %v2224 = vlaneseq
    %v2225 = vshrl.u32 %v2224, 7
    %v2226 = vsub.s32 6, %v2225
    %v2227 = vrot.slane %v2213, %v2226
    %v2228 = vmul.f32 %v2217, %v2227
    %v2229 = vmul.f32 %v2222, %v2227
    %v2230 = vsub.f32 %v2183, %v2228
    %v2231 = vsub.f32 %v2184, %v2229
    %v2232 = vmax.f32 %v2230, 1e-12
    %v2233 = vrsqrt.pop %v2232
    %v2234 = vlaneseq
    %v2235 = vshrl.u32 %v2234, 7
    %v2236 = vsub.s32 7, %v2235
    %v2237 = vrot.slane %v2233, %v2236
    %v2238 = vmul.f32 %v2230, %v2237
    %v2239 = vmul.f32 %v2231, %v2237
    %v2240 = vsel %vm944, %v2238, 0.0
    %v2241 = vsel %vm945, %v2239, 0.0
    %v2242 = vmul.f32 %v2240, %v1920
    %v2243 = vmul.f32 %v2241, %v1920
    %2246 = vrot.lane.b32.xlu0 %v2242, 121
    %v2247 = vpop.permute.xlu0 %2246
    %2248 = vrot.lane.b32.xlu0 %v2243, 121
    %v2249 = vpop.permute.xlu0 %2248
    %v2252 = vadd.f32 %v2205, %v2247
    %v2253 = vadd.f32 %v2206, %v2249
    %2255 = vset.pattern.permute.xlu0 7
    %2256 = vperm.xlu0 %2255, %v2233
    %v2257 = vpop.permute.xlu0 %2256
    %v2259 = vmul.f32 %v2230, %v2257
    %v2260 = vsel %vm966, %v2259, 0.0
    %2262 = vset.pattern.permute.xlu0 7
    %2263 = vperm.xlu0 %2262, %v2240
    %v2264 = vpop.permute.xlu0 %2263
    %2267 = vset.pattern.permute.xlu0 7
    %2268 = vperm.xlu0 %2267, %v2241
    %v2269 = vpop.permute.xlu0 %2268
    %v2271 = vlaneseq
    %v2272 = vshrl.u32 %v2271, 7
    %v2273 = vsub.s32 7, %v2272
    %v2274 = vrot.slane %v2260, %v2273
    %v2275 = vmul.f32 %v2264, %v2274
    %v2276 = vmul.f32 %v2269, %v2274
    %v2277 = vsub.f32 %v2230, %v2275
    %v2278 = vsub.f32 %v2231, %v2276
    %v2279 = vmax.f32 %v2278, 1e-12
    %v2280 = vrsqrt.pop %v2279
    %v2281 = vlaneseq
    %v2282 = vshrl.u32 %v2281, 7
    %v2283 = vsub.s32 0, %v2282
    %v2284 = vrot.slane %v2280, %v2283
    %v2285 = vmul.f32 %v2277, %v2284
    %v2286 = vmul.f32 %v2278, %v2284
    %v2287 = vsel %vm994, %v2285, 0.0
    %v2288 = vsel %vm995, %v2286, 0.0
    %v2289 = vmul.f32 %v2287, %v1920
    %v2290 = vmul.f32 %v2288, %v1920
    %2293 = vrot.lane.b32.xlu0 %v2289, 120
    %v2294 = vpop.permute.xlu0 %2293
    %2295 = vrot.lane.b32.xlu0 %v2290, 120
    %v2296 = vpop.permute.xlu0 %2295
    %v2299 = vadd.f32 %v2252, %v2294
    %v2300 = vadd.f32 %v2253, %v2296
    %2302 = vset.pattern.permute.xlu0 8
    %2303 = vperm.xlu0 %2302, %v2280
    %v2304 = vpop.permute.xlu0 %2303
    %v2306 = vmul.f32 %v2278, %v2304
    %v2307 = vsel %vm1016, %v2306, 0.0
    %2309 = vset.pattern.permute.xlu0 8
    %2310 = vperm.xlu0 %2309, %v2287
    %v2311 = vpop.permute.xlu0 %2310
    %2314 = vset.pattern.permute.xlu0 8
    %2315 = vperm.xlu0 %2314, %v2288
    %v2316 = vpop.permute.xlu0 %2315
    %v2318 = vlaneseq
    %v2319 = vshrl.u32 %v2318, 7
    %v2320 = vsub.s32 0, %v2319
    %v2321 = vrot.slane %v2307, %v2320
    %v2322 = vmul.f32 %v2311, %v2321
    %v2323 = vmul.f32 %v2316, %v2321
    %v2324 = vsub.f32 %v2277, %v2322
    %v2325 = vsub.f32 %v2278, %v2323
    %v2326 = vmax.f32 %v2325, 1e-12
    %v2327 = vrsqrt.pop %v2326
    %v2328 = vlaneseq
    %v2329 = vshrl.u32 %v2328, 7
    %v2330 = vsub.s32 1, %v2329
    %v2331 = vrot.slane %v2327, %v2330
    %v2332 = vmul.f32 %v2324, %v2331
    %v2333 = vmul.f32 %v2325, %v2331
    %v2334 = vsel %vm1044, %v2332, 0.0
    %v2335 = vsel %vm1045, %v2333, 0.0
    %v2336 = vmul.f32 %v2334, %v1920
    %v2337 = vmul.f32 %v2335, %v1920
    %2340 = vrot.lane.b32.xlu0 %v2336, 119
    %v2341 = vpop.permute.xlu0 %2340
    %2342 = vrot.lane.b32.xlu0 %v2337, 119
    %v2343 = vpop.permute.xlu0 %2342
    %v2346 = vadd.f32 %v2299, %v2341
    %v2347 = vadd.f32 %v2300, %v2343
    %2349 = vset.pattern.permute.xlu0 9
    %2350 = vperm.xlu0 %2349, %v2327
    %v2351 = vpop.permute.xlu0 %2350
    %v2353 = vmul.f32 %v2325, %v2351
    %v2354 = vsel %vm1066, %v2353, 0.0
    %2356 = vset.pattern.permute.xlu0 9
    %2357 = vperm.xlu0 %2356, %v2334
    %v2358 = vpop.permute.xlu0 %2357
    %2361 = vset.pattern.permute.xlu0 9
    %2362 = vperm.xlu0 %2361, %v2335
    %v2363 = vpop.permute.xlu0 %2362
    %v2365 = vlaneseq
    %v2366 = vshrl.u32 %v2365, 7
    %v2367 = vsub.s32 1, %v2366
    %v2368 = vrot.slane %v2354, %v2367
    %v2369 = vmul.f32 %v2358, %v2368
    %v2370 = vmul.f32 %v2363, %v2368
    %v2371 = vsub.f32 %v2324, %v2369
    %v2372 = vsub.f32 %v2325, %v2370
    %v2373 = vmax.f32 %v2372, 1e-12
    %v2374 = vrsqrt.pop %v2373
    %v2375 = vlaneseq
    %v2376 = vshrl.u32 %v2375, 7
    %v2377 = vsub.s32 2, %v2376
    %v2378 = vrot.slane %v2374, %v2377
    %v2379 = vmul.f32 %v2371, %v2378
    %v2380 = vmul.f32 %v2372, %v2378
    %v2381 = vsel %vm1094, %v2379, 0.0
    %v2382 = vsel %vm1095, %v2380, 0.0
    %v2383 = vmul.f32 %v2381, %v1920
    %v2384 = vmul.f32 %v2382, %v1920
    %2387 = vrot.lane.b32.xlu0 %v2383, 118
    %v2388 = vpop.permute.xlu0 %2387
    %2389 = vrot.lane.b32.xlu0 %v2384, 118
    %v2390 = vpop.permute.xlu0 %2389
    %v2393 = vadd.f32 %v2346, %v2388
    %v2394 = vadd.f32 %v2347, %v2390
    %2396 = vset.pattern.permute.xlu0 10
    %2397 = vperm.xlu0 %2396, %v2374
    %v2398 = vpop.permute.xlu0 %2397
    %v2400 = vmul.f32 %v2372, %v2398
    %v2401 = vsel %vm1116, %v2400, 0.0
    %2403 = vset.pattern.permute.xlu0 10
    %2404 = vperm.xlu0 %2403, %v2381
    %v2405 = vpop.permute.xlu0 %2404
    %2408 = vset.pattern.permute.xlu0 10
    %2409 = vperm.xlu0 %2408, %v2382
    %v2410 = vpop.permute.xlu0 %2409
    %v2412 = vlaneseq
    %v2413 = vshrl.u32 %v2412, 7
    %v2414 = vsub.s32 2, %v2413
    %v2415 = vrot.slane %v2401, %v2414
    %v2416 = vmul.f32 %v2405, %v2415
    %v2417 = vmul.f32 %v2410, %v2415
    %v2418 = vsub.f32 %v2371, %v2416
    %v2419 = vsub.f32 %v2372, %v2417
    %v2420 = vmax.f32 %v2419, 1e-12
    %v2421 = vrsqrt.pop %v2420
    %v2422 = vlaneseq
    %v2423 = vshrl.u32 %v2422, 7
    %v2424 = vsub.s32 3, %v2423
    %v2425 = vrot.slane %v2421, %v2424
    %v2426 = vmul.f32 %v2418, %v2425
    %v2427 = vmul.f32 %v2419, %v2425
    %v2428 = vsel %vm1144, %v2426, 0.0
    %v2429 = vsel %vm1145, %v2427, 0.0
    %v2430 = vmul.f32 %v2428, %v1920
    %v2431 = vmul.f32 %v2429, %v1920
    %2434 = vrot.lane.b32.xlu0 %v2430, 117
    %v2435 = vpop.permute.xlu0 %2434
    %2436 = vrot.lane.b32.xlu0 %v2431, 117
    %v2437 = vpop.permute.xlu0 %2436
    %v2440 = vadd.f32 %v2393, %v2435
    %v2441 = vadd.f32 %v2394, %v2437
    %2443 = vset.pattern.permute.xlu0 11
    %2444 = vperm.xlu0 %2443, %v2421
    %v2445 = vpop.permute.xlu0 %2444
    %v2447 = vmul.f32 %v2419, %v2445
    %v2448 = vsel %vm1166, %v2447, 0.0
    %2450 = vset.pattern.permute.xlu0 11
    %2451 = vperm.xlu0 %2450, %v2428
    %v2452 = vpop.permute.xlu0 %2451
    %2455 = vset.pattern.permute.xlu0 11
    %2456 = vperm.xlu0 %2455, %v2429
    %v2457 = vpop.permute.xlu0 %2456
    %v2459 = vlaneseq
    %v2460 = vshrl.u32 %v2459, 7
    %v2461 = vsub.s32 3, %v2460
    %v2462 = vrot.slane %v2448, %v2461
    %v2463 = vmul.f32 %v2452, %v2462
    %v2464 = vmul.f32 %v2457, %v2462
    %v2465 = vsub.f32 %v2418, %v2463
    %v2466 = vsub.f32 %v2419, %v2464
    %v2467 = vmax.f32 %v2466, 1e-12
    %v2468 = vrsqrt.pop %v2467
    %v2469 = vlaneseq
    %v2470 = vshrl.u32 %v2469, 7
    %v2471 = vsub.s32 4, %v2470
    %v2472 = vrot.slane %v2468, %v2471
    %v2473 = vmul.f32 %v2465, %v2472
    %v2474 = vmul.f32 %v2466, %v2472
    %v2475 = vsel %vm1194, %v2473, 0.0
    %v2476 = vsel %vm1195, %v2474, 0.0
    %v2477 = vmul.f32 %v2475, %v1920
    %v2478 = vmul.f32 %v2476, %v1920
    %2481 = vrot.lane.b32.xlu0 %v2477, 116
    %v2482 = vpop.permute.xlu0 %2481
    %2483 = vrot.lane.b32.xlu0 %v2478, 116
    %v2484 = vpop.permute.xlu0 %2483
    %v2487 = vadd.f32 %v2440, %v2482
    %v2488 = vadd.f32 %v2441, %v2484
    %2490 = vset.pattern.permute.xlu0 12
    %2491 = vperm.xlu0 %2490, %v2468
    %v2492 = vpop.permute.xlu0 %2491
    %v2494 = vmul.f32 %v2466, %v2492
    %v2495 = vsel %vm1216, %v2494, 0.0
    %2497 = vset.pattern.permute.xlu0 12
    %2498 = vperm.xlu0 %2497, %v2475
    %v2499 = vpop.permute.xlu0 %2498
    %2502 = vset.pattern.permute.xlu0 12
    %2503 = vperm.xlu0 %2502, %v2476
    %v2504 = vpop.permute.xlu0 %2503
    %v2506 = vlaneseq
    %v2507 = vshrl.u32 %v2506, 7
    %v2508 = vsub.s32 4, %v2507
    %v2509 = vrot.slane %v2495, %v2508
    %v2510 = vmul.f32 %v2499, %v2509
    %v2511 = vmul.f32 %v2504, %v2509
    %v2512 = vsub.f32 %v2465, %v2510
    %v2513 = vsub.f32 %v2466, %v2511
    %v2514 = vmax.f32 %v2513, 1e-12
    %v2515 = vrsqrt.pop %v2514
    %v2516 = vlaneseq
    %v2517 = vshrl.u32 %v2516, 7
    %v2518 = vsub.s32 5, %v2517
    %v2519 = vrot.slane %v2515, %v2518
    %v2520 = vmul.f32 %v2512, %v2519
    %v2521 = vmul.f32 %v2513, %v2519
    %v2522 = vsel %vm1244, %v2520, 0.0
    %v2523 = vsel %vm1245, %v2521, 0.0
    %v2524 = vmul.f32 %v2522, %v1920
    %v2525 = vmul.f32 %v2523, %v1920
    %2528 = vrot.lane.b32.xlu0 %v2524, 115
    %v2529 = vpop.permute.xlu0 %2528
    %2530 = vrot.lane.b32.xlu0 %v2525, 115
    %v2531 = vpop.permute.xlu0 %2530
    %v2534 = vadd.f32 %v2487, %v2529
    %v2535 = vadd.f32 %v2488, %v2531
    %2537 = vset.pattern.permute.xlu0 13
    %2538 = vperm.xlu0 %2537, %v2515
    %v2539 = vpop.permute.xlu0 %2538
    %v2541 = vmul.f32 %v2513, %v2539
    %v2542 = vsel %vm1266, %v2541, 0.0
    %2544 = vset.pattern.permute.xlu0 13
    %2545 = vperm.xlu0 %2544, %v2522
    %v2546 = vpop.permute.xlu0 %2545
    %2549 = vset.pattern.permute.xlu0 13
    %2550 = vperm.xlu0 %2549, %v2523
    %v2551 = vpop.permute.xlu0 %2550
    %v2553 = vlaneseq
    %v2554 = vshrl.u32 %v2553, 7
    %v2555 = vsub.s32 5, %v2554
    %v2556 = vrot.slane %v2542, %v2555
    %v2557 = vmul.f32 %v2546, %v2556
    %v2558 = vmul.f32 %v2551, %v2556
    %v2559 = vsub.f32 %v2512, %v2557
    %v2560 = vsub.f32 %v2513, %v2558
    %v2561 = vmax.f32 %v2560, 1e-12
    %v2562 = vrsqrt.pop %v2561
    %v2563 = vlaneseq
    %v2564 = vshrl.u32 %v2563, 7
    %v2565 = vsub.s32 6, %v2564
    %v2566 = vrot.slane %v2562, %v2565
    %v2567 = vmul.f32 %v2559, %v2566
    %v2568 = vmul.f32 %v2560, %v2566
    %v2569 = vsel %vm1294, %v2567, 0.0
    %v2570 = vsel %vm1295, %v2568, 0.0
    %v2571 = vmul.f32 %v2569, %v1920
    %v2572 = vmul.f32 %v2570, %v1920
    %2575 = vrot.lane.b32.xlu0 %v2571, 114
    %v2576 = vpop.permute.xlu0 %2575
    %2577 = vrot.lane.b32.xlu0 %v2572, 114
    %v2578 = vpop.permute.xlu0 %2577
    %v2581 = vadd.f32 %v2534, %v2576
    %v2582 = vadd.f32 %v2535, %v2578
    %2584 = vset.pattern.permute.xlu0 14
    %2585 = vperm.xlu0 %2584, %v2562
    %v2586 = vpop.permute.xlu0 %2585
    %v2588 = vmul.f32 %v2560, %v2586
    %v2589 = vsel %vm1316, %v2588, 0.0
    %2591 = vset.pattern.permute.xlu0 14
    %2592 = vperm.xlu0 %2591, %v2569
    %v2593 = vpop.permute.xlu0 %2592
    %2596 = vset.pattern.permute.xlu0 14
    %2597 = vperm.xlu0 %2596, %v2570
    %v2598 = vpop.permute.xlu0 %2597
    %v2600 = vlaneseq
    %v2601 = vshrl.u32 %v2600, 7
    %v2602 = vsub.s32 6, %v2601
    %v2603 = vrot.slane %v2589, %v2602
    %v2604 = vmul.f32 %v2593, %v2603
    %v2605 = vmul.f32 %v2598, %v2603
    %v2606 = vsub.f32 %v2559, %v2604
    %v2607 = vsub.f32 %v2560, %v2605
    %v2608 = vmax.f32 %v2607, 1e-12
    %v2609 = vrsqrt.pop %v2608
    %v2610 = vlaneseq
    %v2611 = vshrl.u32 %v2610, 7
    %v2612 = vsub.s32 7, %v2611
    %v2613 = vrot.slane %v2609, %v2612
    %v2614 = vmul.f32 %v2606, %v2613
    %v2615 = vmul.f32 %v2607, %v2613
    %v2616 = vsel %vm1344, %v2614, 0.0
    %v2617 = vsel %vm1345, %v2615, 0.0
    %v2618 = vmul.f32 %v2616, %v1920
    %v2619 = vmul.f32 %v2617, %v1920
    %2622 = vrot.lane.b32.xlu0 %v2618, 113
    %v2623 = vpop.permute.xlu0 %2622
    %2624 = vrot.lane.b32.xlu0 %v2619, 113
    %v2625 = vpop.permute.xlu0 %2624
    %v2628 = vadd.f32 %v2581, %v2623
    %v2629 = vadd.f32 %v2582, %v2625
    %v2630 = vlaneseq
    %v2631 = vshrl.u32 %v2630, 7
    %v2632 = vsub.s32 0, %v2631
    %v2633 = vrot.slane %v1784, %v2632
    %v2634 = vsel %vm83, %v2633, 0.0
    %v2635 = vsel %vm84, %v2633, 0.0
    %v2636 = vsel %vm295, %v2634, 0.0
    %2637 = vadd.xlane.f32.xlu0 %v2636
    %v2638 = vpop.xlane.xlu0 %2637
    %v2639 = vsel %vm295, %v2635, 0.0
    %2640 = vadd.xlane.f32.xlu0 %v2639
    %v2641 = vpop.xlane.xlu0 %2640
    %v2642 = vadd.f32 %v2638, %v2628
    %v2643 = vadd.f32 %v2641, %v2629
    %2645 = vset.pattern.permute.xlu0 0
    %2646 = vperm.xlu0 %2645, %v2642
    %v2647 = vpop.permute.xlu0 %2646
    %2650 = vset.pattern.permute.xlu0 0
    %2651 = vperm.xlu0 %2650, %v2643
    %v2652 = vpop.permute.xlu0 %2651
    %v2654 = vlaneseq
    %v2655 = vshrl.u32 %v2654, 7
    %v2656 = vsub.s32 0, %v2655
    %v2657 = vrot.slane %v1905, %v2656
    %v2658 = vmul.f32 %v2647, %v2657
    %v2659 = vmul.f32 %v2652, %v2657
    %v2660 = vlaneseq
    %v2661 = vshrl.u32 %v2660, 7
    %v2662 = vsub.s32 0, %v2661
    %v2663 = vrot.slane %v1906, %v2662
    %v2664 = vadd.f32 %v2658, %v2663
    %v2665 = vadd.f32 %v2659, %v2663
    %s2666 = sld [smem:[#allocation9 + $0x2]]
    %v2667 = vld [vmem:[#allocation8] sm:$0xff]
    %v2668 = vld [vmem:[#allocation8 + $0x8] sm:$0xff]
    %v2669 = vld [vmem:[#allocation8 + $0x10] sm:$0xff]
    %v2670 = vld [vmem:[#allocation8 + $0x18] sm:$0xff]
    %v2671 = vld [vmem:[#allocation8 + $0x20] sm:$0xff]
    %v2672 = vld [vmem:[#allocation8 + $0x28] sm:$0xff]
    %v2673 = vld [vmem:[#allocation8 + $0x30] sm:$0xff]
    %v2674 = vld [vmem:[#allocation8 + $0x38] sm:$0xff]
    %v2675 = vld [vmem:[#allocation8 + $0x40] sm:$0x1]
    %v2676 = vld [vmem:[#allocation8 + $0x41] sm:$0x1]
    %v2677 = vlaneseq
    %v2678 = vshrl.u32 %v2677, 7
    %v2679 = vsub.s32 0, %v2678
    %v2680 = vrot.slane %v2676, %v2679
    %v2681 = vmul.f32 %v2664, %v2680
    %v2682 = vmul.f32 %v2665, %v2680
    %v2683 = vmul.f32 %v2681, %v2681
    %v2684 = vmul.f32 %v2682, %v2682
    %v2685 = vsel %vm1421, %v2683, 0.0
    %2686 = vadd.xlane.f32.xlu0 %v2685
    %v2687 = vpop.xlane.xlu0 %2686
    %v2688 = vsel %vm1421, %v2684, 0.0
    %2689 = vadd.xlane.f32.xlu0 %v2688
    %v2690 = vpop.xlane.xlu0 %2689
    %v2692 = vsel %vm1421, %v2667, 0
    %v2695 = vsel %vm1421, %v2668, 0
    %v2698 = vsel %vm1421, %v2669, 0
    %v2701 = vsel %vm1421, %v2670, 0
    %v2704 = vsel %vm1421, %v2681, 0
    %v2707 = vsel %vm1421, %v2682, 0
    %2709 = vmatprep.subr.mxu0 0.0
    %2710 = vmatpush1.xpose.msra.mxu0 %v2704
    %2711 = vmatprep.subr.mxu0 0.0
    %2712 = vmatpush1.xpose.msra.mxu0 %v2707
    %2713 = vmatprep.subr.mxu0 0.0
    %2714 = vmatpush1.xpose.msra.mxu0 0.0
    %2715 = vmatprep.subr.mxu0 0.0
    %2716 = vmatpush1.xpose.msra.mxu0 0.0
    %2717 = vmatprep.subr.mxu0 0.0
    %2718 = vmatpush1.xpose.msra.mxu0 0.0
    %2719 = vmatprep.subr.mxu0 0.0
    %2720 = vmatpush1.xpose.msra.mxu0 0.0
    %2721 = vmatprep.subr.mxu0 0.0
    %2722 = vmatpush1.xpose.msra.mxu0 0.0
    %2723 = vmatprep.subr.mxu0 0.0
    %2724 = vmatpush1.xpose.msra.mxu0 0.0
    %2725 = vmatprep.subr.mxu0 0.0
    %2726 = vmatpush1.xpose.msra.mxu0 0.0
    %2727 = vmatprep.subr.mxu0 0.0
    %2728 = vmatpush1.xpose.msra.mxu0 0.0
    %2729 = vmatprep.subr.mxu0 0.0
    %2730 = vmatpush1.xpose.msra.mxu0 0.0
    %2731 = vmatprep.subr.mxu0 0.0
    %2732 = vmatpush1.xpose.msra.mxu0 0.0
    %2733 = vmatprep.subr.mxu0 0.0
    %2734 = vmatpush1.xpose.msra.mxu0 0.0
    %2735 = vmatprep.subr.mxu0 0.0
    %2736 = vmatpush1.xpose.msra.mxu0 0.0
    %2737 = vmatprep.subr.mxu0 0.0
    %2738 = vmatpush1.xpose.msra.mxu0 0.0
    %2739 = vmatprep.subr.mxu0 0.0
    %2740 = vmatpush1.xpose.msra.mxu0 0.0
    %2741 = vmatprep.subr.mxu0 0.0
    %2742 = vmatpush1.xpose.msra.mxu0 0.0
    %2743 = vmatprep.subr.mxu0 0.0
    %2744 = vmatpush1.xpose.msra.mxu0 0.0
    %2745 = vmatprep.subr.mxu0 0.0
    %2746 = vmatpush1.xpose.msra.mxu0 0.0
    %2747 = vmatprep.subr.mxu0 0.0
    %2748 = vmatpush1.xpose.msra.mxu0 0.0
    %2749 = vmatprep.subr.mxu0 0.0
    %2750 = vmatpush1.xpose.msra.mxu0 0.0
    %2751 = vmatprep.subr.mxu0 0.0
    %2752 = vmatpush1.xpose.msra.mxu0 0.0
    %2753 = vmatprep.subr.mxu0 0.0
    %2754 = vmatpush1.xpose.msra.mxu0 0.0
    %2755 = vmatprep.subr.mxu0 0.0
    %2756 = vmatpush1.xpose.msra.mxu0 0.0
    %2757 = vmatprep.subr.mxu0 0.0
    %2758 = vmatpush1.xpose.msra.mxu0 0.0
    %2759 = vmatprep.subr.mxu0 0.0
    %2760 = vmatpush1.xpose.msra.mxu0 0.0
    %2761 = vmatprep.subr.mxu0 0.0
    %2762 = vmatpush1.xpose.msra.mxu0 0.0
    %2763 = vmatprep.subr.mxu0 0.0
    %2764 = vmatpush1.xpose.msra.mxu0 0.0
    %2765 = vmatprep.subr.mxu0 0.0
    %2766 = vmatpush1.xpose.msra.mxu0 0.0
    %2767 = vmatprep.subr.mxu0 0.0
    %2768 = vmatpush1.xpose.msra.mxu0 0.0
    %2769 = vmatprep.subr.mxu0 0.0
    %2770 = vmatpush1.xpose.msra.mxu0 0.0
    %2771 = vmatprep.subr.mxu0 0.0
    %2772 = vmatpush1.xpose.msra.mxu0 0.0
    %2773 = vmatprep.mubr.f32.mxu0 0.0
    %2774 = vmatmul.mubr.f32.gmra.mrb[0].mxu0 %v2692
    %v2775 = vpop.f32.mrb[0].mxu0
    %v2776 = vadd.f32 0.0, %v2775
    %v2777 = vpop.f32.mrb[0].mxu0
    %2778 = vmatprep.mubr.f32.mxu0 0.0
    %2779 = vmatmul.mubr.f32.gmra.mrb[0].mxu0 %v2695
    %v2780 = vpop.f32.mrb[0].mxu0
    %v2781 = vadd.f32 0.0, %v2780
    %v2782 = vpop.f32.mrb[0].mxu0
    %2783 = vmatprep.mubr.f32.mxu0 0.0
    %2784 = vmatmul.mubr.f32.gmra.mrb[0].mxu0 %v2698
    %v2785 = vpop.f32.mrb[0].mxu0
    %v2786 = vadd.f32 0.0, %v2785
    %v2787 = vpop.f32.mrb[0].mxu0
    %2788 = vmatprep.mubr.f32.mxu0 0.0
    %2789 = vmatmul.mubr.f32.gmra.mrb[0].mxu0 %v2701
    %v2790 = vpop.f32.mrb[0].mxu0
    %v2791 = vadd.f32 0.0, %v2790
    %v2792 = vpop.f32.mrb[0].mxu0
    %2793 = vdwg.mxu0
    %2794 = vmatprep.subr.mxu0 0.0
    %2795 = vmatpush1.xpose.msra.mxu0 %v2704
    %2796 = vmatprep.subr.mxu0 0.0
    %2797 = vmatpush1.xpose.msra.mxu0 %v2707
    %2798 = vmatprep.subr.mxu0 0.0
    %2799 = vmatpush1.xpose.msra.mxu0 0.0
    %2800 = vmatprep.subr.mxu0 0.0
    %2801 = vmatpush1.xpose.msra.mxu0 0.0
    %2802 = vmatprep.subr.mxu0 0.0
    %2803 = vmatpush1.xpose.msra.mxu0 0.0
    %2804 = vmatprep.subr.mxu0 0.0
    %2805 = vmatpush1.xpose.msra.mxu0 0.0
    %2806 = vmatprep.subr.mxu0 0.0
    %2807 = vmatpush1.xpose.msra.mxu0 0.0
    %2808 = vmatprep.subr.mxu0 0.0
    %2809 = vmatpush1.xpose.msra.mxu0 0.0
    %2810 = vmatprep.subr.mxu0 0.0
    %2811 = vmatpush1.xpose.msra.mxu0 0.0
    %2812 = vmatprep.subr.mxu0 0.0
    %2813 = vmatpush1.xpose.msra.mxu0 0.0
    %2814 = vmatprep.subr.mxu0 0.0
    %2815 = vmatpush1.xpose.msra.mxu0 0.0
    %2816 = vmatprep.subr.mxu0 0.0
    %2817 = vmatpush1.xpose.msra.mxu0 0.0
    %2818 = vmatprep.subr.mxu0 0.0
    %2819 = vmatpush1.xpose.msra.mxu0 0.0
    %2820 = vmatprep.subr.mxu0 0.0
    %2821 = vmatpush1.xpose.msra.mxu0 0.0
    %2822 = vmatprep.subr.mxu0 0.0
    %2823 = vmatpush1.xpose.msra.mxu0 0.0
    %2824 = vmatprep.subr.mxu0 0.0
    %2825 = vmatpush1.xpose.msra.mxu0 0.0
    %2826 = vmatprep.subr.mxu0 0.0
    %2827 = vmatpush1.xpose.msra.mxu0 0.0
    %2828 = vmatprep.subr.mxu0 0.0
    %2829 = vmatpush1.xpose.msra.mxu0 0.0
    %2830 = vmatprep.subr.mxu0 0.0
    %2831 = vmatpush1.xpose.msra.mxu0 0.0
    %2832 = vmatprep.subr.mxu0 0.0
    %2833 = vmatpush1.xpose.msra.mxu0 0.0
    %2834 = vmatprep.subr.mxu0 0.0
    %2835 = vmatpush1.xpose.msra.mxu0 0.0
    %2836 = vmatprep.subr.mxu0 0.0
    %2837 = vmatpush1.xpose.msra.mxu0 0.0
    %2838 = vmatprep.subr.mxu0 0.0
    %2839 = vmatpush1.xpose.msra.mxu0 0.0
    %2840 = vmatprep.subr.mxu0 0.0
    %2841 = vmatpush1.xpose.msra.mxu0 0.0
    %2842 = vmatprep.subr.mxu0 0.0
    %2843 = vmatpush1.xpose.msra.mxu0 0.0
    %2844 = vmatprep.subr.mxu0 0.0
    %2845 = vmatpush1.xpose.msra.mxu0 0.0
    %2846 = vmatprep.subr.mxu0 0.0
    %2847 = vmatpush1.xpose.msra.mxu0 0.0
    %2848 = vmatprep.subr.mxu0 0.0
    %2849 = vmatpush1.xpose.msra.mxu0 0.0
    %2850 = vmatprep.subr.mxu0 0.0
    %2851 = vmatpush1.xpose.msra.mxu0 0.0
    %2852 = vmatprep.subr.mxu0 0.0
    %2853 = vmatpush1.xpose.msra.mxu0 0.0
    %2854 = vmatprep.subr.mxu0 0.0
    %2855 = vmatpush1.xpose.msra.mxu0 0.0
    %2856 = vmatprep.subr.mxu0 0.0
    %2857 = vmatpush1.xpose.msra.mxu0 0.0
    %2858 = vmatprep.mubr.f32.mxu0 0.0
    %2859 = vmatmul.mubr.f32.gmra.mrb[0].mxu0 %v2704
    %v2860 = vpop.f32.mrb[0].mxu0
    %v2861 = vadd.f32 0.0, %v2860
    %v2862 = vpop.f32.mrb[0].mxu0
    %2863 = vmatprep.mubr.f32.mxu0 0.0
    %2864 = vmatmul.mubr.f32.gmra.mrb[0].mxu0 %v2707
    %v2865 = vpop.f32.mrb[0].mxu0
    %v2866 = vadd.f32 0.0, %v2865
    %v2867 = vpop.f32.mrb[0].mxu0
    %2868 = vdwg.mxu0
    %v2869 = vsel %vm83, %v2861, 0.0
    %v2870 = vsel %vm84, %v2866, 0.0
    %v2871 = vsel %vm295, %v2869, 0.0
    %v2872 = vsel %vm295, %v2870, 0.0
    %v2873 = vadd.f32 %v2871, %v2872
    %v2874 = vrot.slane %v2873, 4
    %v2875 = vadd.f32 %v2873, %v2874
    %v2876 = vrot.slane %v2875, 2
    %v2877 = vadd.f32 %v2875, %v2876
    %v2878 = vrot.slane %v2877, 1
    %v2879 = vadd.f32 %v2877, %v2878
    %2880 = vset.pattern.permute.xlu0 4
    %2881 = vperm.xlu0 %2880, %v2667
    %v2882 = vpop.permute.xlu0 %2881
    %2884 = vset.pattern.permute.xlu0 4
    %2885 = vperm.xlu0 %2884, %v2668
    %v2886 = vpop.permute.xlu0 %2885
    %2888 = vset.pattern.permute.xlu0 4
    %2889 = vperm.xlu0 %2888, %v2669
    %v2890 = vpop.permute.xlu0 %2889
    %2892 = vset.pattern.permute.xlu0 4
    %2893 = vperm.xlu0 %2892, %v2670
    %v2894 = vpop.permute.xlu0 %2893
    %v2896 = vadd.f32 %v2882, %v2879
    %v2897 = vadd.f32 %v2886, %v2879
    %v2898 = vadd.f32 %v2890, %v2879
    %v2899 = vadd.f32 %v2894, %v2879
    %v2900 = vmul.f32 %v2776, 2.0
    %v2901 = vmul.f32 %v2781, 2.0
    %v2902 = vmul.f32 %v2786, 2.0
    %v2903 = vmul.f32 %v2791, 2.0
    %v2904 = vsub.f32 %v2896, %v2900
    %v2905 = vsub.f32 %v2897, %v2901
    %v2906 = vsub.f32 %v2898, %v2902
    %v2907 = vsub.f32 %v2899, %v2903
    %v2908 = vmax.f32 %v2904, 0.0
    %v2909 = vmax.f32 %v2905, 0.0
    %v2910 = vmax.f32 %v2906, 0.0
    %v2911 = vmax.f32 %v2907, 0.0
    %v2912 = vmul.f32 %v2908, -0.5
    %v2913 = vmul.f32 %v2909, -0.5
    %v2914 = vmul.f32 %v2910, -0.5
    %v2915 = vmul.f32 %v2911, -0.5
    %v2916 = vmul.f32 %v2912, 1.442695
    %v2917 = vpow.pop %v2916
    %v2918 = vmul.f32 %v2913, 1.442695
    %v2919 = vpow.pop %v2918
    %v2920 = vmul.f32 %v2914, 1.442695
    %v2921 = vpow.pop %v2920
    %v2922 = vmul.f32 %v2915, 1.442695
    %v2923 = vpow.pop %v2922
    %v2924 = vstv %s2666
    %v2925 = vmul.f32 %v2924, %v2917
    %v2926 = vmul.f32 %v2924, %v2919
    %v2927 = vmul.f32 %v2924, %v2921
    %v2928 = vmul.f32 %v2924, %v2923
    %v2929 = vadd.f32 %v2687, %v2879
    %v2930 = vadd.f32 %v2690, %v2879
    %v2931 = vmul.f32 %v2861, 2.0
    %v2932 = vmul.f32 %v2866, 2.0
    %v2933 = vsub.f32 %v2929, %v2931
    %v2934 = vsub.f32 %v2930, %v2932
    %v2935 = vmax.f32 %v2933, 0.0
    %v2936 = vmax.f32 %v2934, 0.0
    %v2937 = vmul.f32 %v2935, -0.5
    %v2938 = vmul.f32 %v2936, -0.5
    %v2939 = vmul.f32 %v2937, 1.442695
    %v2940 = vpow.pop %v2939
    %v2941 = vmul.f32 %v2938, 1.442695
    %v2942 = vpow.pop %v2941
    %v2943 = vmul.f32 %v2924, %v2940
    %v2944 = vmul.f32 %v2924, %v2942
    %v2946 = vsel %vm370, %v2671, 0
    %v2949 = vsel %vm370, %v2672, 0
    %v2952 = vsel %vm370, %v2673, 0
    %v2955 = vsel %vm370, %v2674, 0
    %v2958 = vsel %vm370, %v2675, 0
    %2960 = vmatprep.subr.mxu0 0.0
    %2961 = vmatpush1.msra.mxu0 %v2925
    %2962 = vmatprep.subr.mxu0 0.0
    %2963 = vmatpush1.msra.mxu0 %v2926
    %2964 = vmatprep.subr.mxu0 0.0
    %2965 = vmatpush1.msra.mxu0 %v2927
    %2966 = vmatprep.subr.mxu0 0.0
    %2967 = vmatpush1.msra.mxu0 %v2928
    %2968 = vmatprep.subr.mxu0 0.0
    %2969 = vmatpush1.msra.mxu0 0.0
    %2970 = vmatprep.subr.mxu0 0.0
    %2971 = vmatpush1.msra.mxu0 0.0
    %2972 = vmatprep.subr.mxu0 0.0
    %2973 = vmatpush1.msra.mxu0 0.0
    %2974 = vmatprep.subr.mxu0 0.0
    %2975 = vmatpush1.msra.mxu0 0.0
    %2976 = vmatprep.subr.mxu0 0.0
    %2977 = vmatpush1.msra.mxu0 0.0
    %2978 = vmatprep.subr.mxu0 0.0
    %2979 = vmatpush1.msra.mxu0 0.0
    %2980 = vmatprep.subr.mxu0 0.0
    %2981 = vmatpush1.msra.mxu0 0.0
    %2982 = vmatprep.subr.mxu0 0.0
    %2983 = vmatpush1.msra.mxu0 0.0
    %2984 = vmatprep.subr.mxu0 0.0
    %2985 = vmatpush1.msra.mxu0 0.0
    %2986 = vmatprep.subr.mxu0 0.0
    %2987 = vmatpush1.msra.mxu0 0.0
    %2988 = vmatprep.subr.mxu0 0.0
    %2989 = vmatpush1.msra.mxu0 0.0
    %2990 = vmatprep.subr.mxu0 0.0
    %2991 = vmatpush1.msra.mxu0 0.0
    %2992 = vmatprep.subr.mxu0 0.0
    %2993 = vmatpush1.msra.mxu0 0.0
    %2994 = vmatprep.subr.mxu0 0.0
    %2995 = vmatpush1.msra.mxu0 0.0
    %2996 = vmatprep.subr.mxu0 0.0
    %2997 = vmatpush1.msra.mxu0 0.0
    %2998 = vmatprep.subr.mxu0 0.0
    %2999 = vmatpush1.msra.mxu0 0.0
    %3000 = vmatprep.subr.mxu0 0.0
    %3001 = vmatpush1.msra.mxu0 0.0
    %3002 = vmatprep.subr.mxu0 0.0
    %3003 = vmatpush1.msra.mxu0 0.0
    %3004 = vmatprep.subr.mxu0 0.0
    %3005 = vmatpush1.msra.mxu0 0.0
    %3006 = vmatprep.subr.mxu0 0.0
    %3007 = vmatpush1.msra.mxu0 0.0
    %3008 = vmatprep.subr.mxu0 0.0
    %3009 = vmatpush1.msra.mxu0 0.0
    %3010 = vmatprep.subr.mxu0 0.0
    %3011 = vmatpush1.msra.mxu0 0.0
    %3012 = vmatprep.subr.mxu0 0.0
    %3013 = vmatpush1.msra.mxu0 0.0
    %3014 = vmatprep.subr.mxu0 0.0
    %3015 = vmatpush1.msra.mxu0 0.0
    %3016 = vmatprep.subr.mxu0 0.0
    %3017 = vmatpush1.msra.mxu0 0.0
    %3018 = vmatprep.subr.mxu0 0.0
    %3019 = vmatpush1.msra.mxu0 0.0
    %3020 = vmatprep.subr.mxu0 0.0
    %3021 = vmatpush1.msra.mxu0 0.0
    %3022 = vmatprep.subr.mxu0 0.0
    %3023 = vmatpush1.msra.mxu0 0.0
    %3024 = vmatprep.mubr.f32.mxu0 0.0
    %3025 = vmatmul.mubr.f32.gmra.mrb[0].mxu0 %v2946
    %v3026 = vpop.f32.mrb[0].mxu0
    %v3027 = vadd.f32 0.0, %v3026
    %v3028 = vpop.f32.mrb[0].mxu0
    %3029 = vmatprep.mubr.f32.mxu0 0.0
    %3030 = vmatmul.mubr.f32.gmra.mrb[0].mxu0 %v2949
    %v3031 = vpop.f32.mrb[0].mxu0
    %v3032 = vadd.f32 0.0, %v3031
    %v3033 = vpop.f32.mrb[0].mxu0
    %3034 = vmatprep.mubr.f32.mxu0 0.0
    %3035 = vmatmul.mubr.f32.gmra.mrb[0].mxu0 %v2952
    %v3036 = vpop.f32.mrb[0].mxu0
    %v3037 = vadd.f32 0.0, %v3036
    %v3038 = vpop.f32.mrb[0].mxu0
    %3039 = vmatprep.mubr.f32.mxu0 0.0
    %3040 = vmatmul.mubr.f32.gmra.mrb[0].mxu0 %v2955
    %v3041 = vpop.f32.mrb[0].mxu0
    %v3042 = vadd.f32 0.0, %v3041
    %v3043 = vpop.f32.mrb[0].mxu0
    %3044 = vmatprep.mubr.f32.mxu0 0.0
    %3045 = vmatmul.mubr.f32.gmra.mrb[0].mxu0 %v2958
    %v3046 = vpop.f32.mrb[0].mxu0
    %v3047 = vadd.f32 0.0, %v3046
    %v3048 = vpop.f32.mrb[0].mxu0
    %3049 = vdwg.mxu0
    %3050 = vxpose.xlu0.b32.start [1/16] %v2925, 128
    %3051 = vxpose.xlu0.b32.cont [2/16] %v2926, 128
    %3052 = vxpose.xlu0.b32.cont [3/16] %v2927, 128
    %3053 = vxpose.xlu0.b32.cont [4/16] %v2928, 128
    %3054 = vxpose.xlu0.b32.cont [5/16] 0.0, 128
    %3055 = vxpose.xlu0.b32.cont [6/16] 0.0, 128
    %3056 = vxpose.xlu0.b32.cont [7/16] 0.0, 128
    %3057 = vxpose.xlu0.b32.cont [8/16] 0.0, 128
    %3058 = vxpose.xlu0.b32.cont [9/16] 0.0, 128
    %3059 = vxpose.xlu0.b32.cont [10/16] 0.0, 128
    %3060 = vxpose.xlu0.b32.cont [11/16] 0.0, 128
    %3061 = vxpose.xlu0.b32.cont [12/16] 0.0, 128
    %3062 = vxpose.xlu0.b32.cont [13/16] 0.0, 128
    %3063 = vxpose.xlu0.b32.cont [14/16] 0.0, 128
    %3064 = vxpose.xlu0.b32.cont [15/16] 0.0, 128
    %3065 = vxpose.xlu0.b32.end [16/16] 0.0, 128
    %v3066 = vpop.trf.xlu0
    %v3067 = vpop.trf.xlu0
    %v3068 = vpop.trf.xlu0
    %v3069 = vpop.trf.xlu0
    %v3070 = vpop.trf.xlu0
    %v3071 = vpop.trf.xlu0
    %v3072 = vpop.trf.xlu0
    %v3073 = vpop.trf.xlu0
    %v3074 = vpop.trf.xlu0
    %v3075 = vpop.trf.xlu0
    %v3076 = vpop.trf.xlu0
    %v3077 = vpop.trf.xlu0
    %v3078 = vpop.trf.xlu0
    %v3079 = vpop.trf.xlu0
    %v3080 = vpop.trf.xlu0
    %v3081 = vpop.trf.xlu0
    %v3083 = vsel %vm370, %v3066, 0
    %v3086 = vsel %vm370, %v3067, 0
    %3088 = vmatprep.subr.mxu0 0.0
    %3089 = vmatpush1.msra.mxu0 %v3027
    %3090 = vmatprep.subr.mxu0 0.0
    %3091 = vmatpush1.msra.mxu0 %v3032
    %3092 = vmatprep.subr.mxu0 0.0
    %3093 = vmatpush1.msra.mxu0 %v3037
    %3094 = vmatprep.subr.mxu0 0.0
    %3095 = vmatpush1.msra.mxu0 %v3042
    %3096 = vmatprep.subr.mxu0 0.0
    %3097 = vmatpush1.msra.mxu0 0.0
    %3098 = vmatprep.subr.mxu0 0.0
    %3099 = vmatpush1.msra.mxu0 0.0
    %3100 = vmatprep.subr.mxu0 0.0
    %3101 = vmatpush1.msra.mxu0 0.0
    %3102 = vmatprep.subr.mxu0 0.0
    %3103 = vmatpush1.msra.mxu0 0.0
    %3104 = vmatprep.subr.mxu0 0.0
    %3105 = vmatpush1.msra.mxu0 0.0
    %3106 = vmatprep.subr.mxu0 0.0
    %3107 = vmatpush1.msra.mxu0 0.0
    %3108 = vmatprep.subr.mxu0 0.0
    %3109 = vmatpush1.msra.mxu0 0.0
    %3110 = vmatprep.subr.mxu0 0.0
    %3111 = vmatpush1.msra.mxu0 0.0
    %3112 = vmatprep.subr.mxu0 0.0
    %3113 = vmatpush1.msra.mxu0 0.0
    %3114 = vmatprep.subr.mxu0 0.0
    %3115 = vmatpush1.msra.mxu0 0.0
    %3116 = vmatprep.subr.mxu0 0.0
    %3117 = vmatpush1.msra.mxu0 0.0
    %3118 = vmatprep.subr.mxu0 0.0
    %3119 = vmatpush1.msra.mxu0 0.0
    %3120 = vmatprep.subr.mxu0 0.0
    %3121 = vmatpush1.msra.mxu0 0.0
    %3122 = vmatprep.subr.mxu0 0.0
    %3123 = vmatpush1.msra.mxu0 0.0
    %3124 = vmatprep.subr.mxu0 0.0
    %3125 = vmatpush1.msra.mxu0 0.0
    %3126 = vmatprep.subr.mxu0 0.0
    %3127 = vmatpush1.msra.mxu0 0.0
    %3128 = vmatprep.subr.mxu0 0.0
    %3129 = vmatpush1.msra.mxu0 0.0
    %3130 = vmatprep.subr.mxu0 0.0
    %3131 = vmatpush1.msra.mxu0 0.0
    %3132 = vmatprep.subr.mxu0 0.0
    %3133 = vmatpush1.msra.mxu0 0.0
    %3134 = vmatprep.subr.mxu0 0.0
    %3135 = vmatpush1.msra.mxu0 0.0
    %3136 = vmatprep.subr.mxu0 0.0
    %3137 = vmatpush1.msra.mxu0 0.0
    %3138 = vmatprep.subr.mxu0 0.0
    %3139 = vmatpush1.msra.mxu0 0.0
    %3140 = vmatprep.subr.mxu0 0.0
    %3141 = vmatpush1.msra.mxu0 0.0
    %3142 = vmatprep.subr.mxu0 0.0
    %3143 = vmatpush1.msra.mxu0 0.0
    %3144 = vmatprep.subr.mxu0 0.0
    %3145 = vmatpush1.msra.mxu0 0.0
    %3146 = vmatprep.subr.mxu0 0.0
    %3147 = vmatpush1.msra.mxu0 0.0
    %3148 = vmatprep.subr.mxu0 0.0
    %3149 = vmatpush1.msra.mxu0 0.0
    %3150 = vmatprep.subr.mxu0 0.0
    %3151 = vmatpush1.msra.mxu0 0.0
    %3152 = vmatprep.mubr.f32.mxu0 0.0
    %3153 = vmatmul.mubr.f32.gmra.mrb[0].mxu0 %v3083
    %v3154 = vpop.f32.mrb[0].mxu0
    %v3155 = vadd.f32 0.0, %v3154
    %v3156 = vpop.f32.mrb[0].mxu0
    %3157 = vmatprep.mubr.f32.mxu0 0.0
    %3158 = vmatmul.mubr.f32.gmra.mrb[0].mxu0 %v3086
    %v3159 = vpop.f32.mrb[0].mxu0
    %v3160 = vadd.f32 0.0, %v3159
    %v3161 = vpop.f32.mrb[0].mxu0
    %3162 = vdwg.mxu0
    %v3163 = vadd.f32 %v2943, %v3155
    %v3164 = vadd.f32 %v2944, %v3160
    %v3165 = vadd.f32 %v3163, %v85
    %v3166 = vadd.f32 %v3164, %v86
    %vm3167 = vcmask 122880
    %3168 = vst.msk [vmem:[#allocation10] sm:$0x1] %vm3167, %v3047
    %3169 = vst.msk [vmem:[#allocation11] sm:$0xff] %vm295, %v3165
    %3170 = vst.msk [vmem:[#allocation11 + $0x8] sm:$0xff] %vm295, %v3166
    // Predicated region
    $region38: #{forward.1} parent=1 // pred_check
      _
    $region39: #{forward.1} parent=1 // pred_check_branch
      %3172 = sbr.rel (0) target = $region41
    $region40: #{forward.1} parent=1 // pred_region
      %s3174 = ssub.s32 16, 16
      %3175 = vsyncadd [#allocation4], %s3174
      %s3177 = sshll.u32 [#allocation10], 4
      %s3178 = int_to_ptr.vmem [resolvable:$true] %s3177
      %3180 = dma.vmem_to_hbm [thread:$0]  %s3178, 16, %s5, [#allocation4]
    $region41: #{forward.1} parent=1 // pred_fallthru
      _
    // Predicated region
    $region42: #{forward.1} parent=1 // pred_check
      _
    $region43: #{forward.1} parent=1 // pred_check_branch
      %3182 = sbr.rel (0) target = $region45
    $region44: #{forward.1} parent=1 // pred_region
      %s3184 = ssub.s32 256, 256
      %3185 = vsyncadd [#allocation12], %s3184
      %s3186 = sshll.u32 [#allocation11], 4
      %s3187 = int_to_ptr.vmem [resolvable:$true] %s3186
      %3192 = dma.vmem_to_hbm [thread:$0]  %s3187, 256, %s6, [#allocation12], 128, 128, 8
    $region45: #{forward.1} parent=1 // pred_fallthru
      _
    // Predicated region
    $region46: #{forward.1} parent=1 // pred_check
      _
    $region47: #{forward.1} parent=1 // pred_check_branch
      %3194 = sbr.rel (0) target = $region49
    $region48: #{forward.1} parent=1 // pred_region
      %3195 = dma.done [#allocation4], 16
    $region49: #{forward.1} parent=1 // pred_fallthru
      _
    // Predicated region
    $region50: #{forward.1} parent=1 // pred_check
      _
    $region51: #{forward.1} parent=1 // pred_check_branch
      %3197 = sbr.rel (0) target = $region53
    $region52: #{forward.1} parent=1 // pred_region
      %3198 = dma.done [#allocation12], 256
    $region53: #{forward.1} parent=1 // pred_fallthru
      _
    %3199 = vsyncpa [#allocation3], 1
    %3200 = vsyncpa [#allocation7], 1
    %3201 = vsyncpa [#allocation4], 1
    %3202 = vsyncpa [#allocation12], 1
    %3203 = vsyncpa [#allocation5], 1

</llo_original>
